<compile_context>
chip_gen: v7x
topology: tpu7x:2x2x1
jax: 0.10.0
libtpu: 0.0.40
codegen_flags: <defaults>
</compile_context>

<pallas_src>
import numpy as np

import jax
import jax.numpy as jnp
from jax.experimental import pallas as pl
from jax.experimental.pallas import tpu as pltpu


def make_gru_kernel(T, Tp, Bp, Hp, L, O, C, compute_dtype, scratch_dtype):
    """Kernel ref order:
      x (Tp*Bp, D) [compute_dtype],
      per layer l: wih_cat (D_l, 3Hp), whh_cat (Hp, 3Hp) [compute_dtype],
                   bcat (1, 3Hp) = [b_ir+b_hr | b_iz+b_hz | b_in],
                   bhn  (1, Hp)                            [f32],
      w_fc (Hp, O), b_fc (1, O),
      out (Bp, O) [f32],
      scratch: gi (2*C, Bp, 3Hp) [scratch_dtype],
               hseq (Tp, Bp, Hp) [scratch_dtype]  (inter-layer hidden sequence),
               hlast (Bp, Hp) [f32].
    Gate ordering follows PyTorch: (r, z, n).
    """
    n_chunks = Tp // C
    H3 = 3 * Hp

    def kernel(*refs):
        x_ref = refs[0]
        layer_refs = [refs[1 + 4 * l: 1 + 4 * (l + 1)] for l in range(L)]
        wfc_ref = refs[1 + 4 * L]
        bfc_ref = refs[2 + 4 * L]
        out_ref = refs[3 + 4 * L]
        gi_ref = refs[4 + 4 * L]     # (2*C, Bp, 3Hp)
        hseq_ref = refs[5 + 4 * L]   # (Tp, Bp, Hp) (dummy-sized when L == 1)
        hlast_ref = refs[6 + 4 * L]  # (Bp, Hp) f32

        for l in range(L):
            wih_ref, whh_ref, bcat_ref, bhn_ref = layer_refs[l]
            is_first = (l == 0)
            is_last = (l == L - 1)

            def project_chunk(c_idx, slot0, *, wih_ref=wih_ref,
                              bcat_ref=bcat_ref, is_first=is_first):
                # gi for timesteps [c_idx*C, c_idx*C + C) -> gi rows [slot0, slot0+C)
                if not isinstance(c_idx, int):
                    c_idx = jnp.minimum(c_idx, n_chunks - 1)  # guard speculation
                if is_first:
                    r0 = c_idx * (C * Bp)
                    if not isinstance(r0, int):
                        r0 = pl.multiple_of(r0, C * Bp)
                    xf = x_ref[pl.ds(r0, C * Bp), :]
                else:
                    r0 = c_idx * C
                    if not isinstance(r0, int):
                        r0 = pl.multiple_of(r0, C)
                    # Previous layer already produced this chunk; tile-exact reshape.
                    xf = hseq_ref[pl.ds(r0, C), :, :].reshape(C * Bp, Hp)
                    xf = xf.astype(compute_dtype)
                gi = jnp.dot(xf, wih_ref[...], preferred_element_type=jnp.float32)
                gi = gi + bcat_ref[...]
                gi_ref[pl.ds(slot0, C), :, :] = (
                    gi.reshape(C, Bp, H3).astype(scratch_dtype))

            # Prologue: chunk 0 into gi slot 0.
            project_chunk(0, 0)
            b_hn = bhn_ref[...]   # (1, Hp) f32, hoisted load

            def chunk_body(c, h, *, whh_ref=whh_ref, b_hn=b_hn,
                           project_chunk=project_chunk, is_last=is_last):
                slot = (c % 2) * C

                if n_chunks > 1:
                    # Prefetch the NEXT chunk's fused input projection while the
                    # serial recurrence below consumes the current chunk.
                    @pl.when(c + 1 < n_chunks)
                    def _():
                        project_chunk(c + 1, ((c + 1) % 2) * C)

                # Recurrence over C timesteps (unroll capped at C=8).
                for tl in range(C):
                    gi_t = gi_ref[slot + tl].astype(jnp.float32)      # (Bp, 3Hp)
                    gh = jnp.dot(h.astype(compute_dtype), whh_ref[...],
                                 preferred_element_type=jnp.float32)  # (Bp, 3Hp)
                    r = jax.nn.sigmoid(gi_t[:, :Hp] + gh[:, :Hp])
                    z = jax.nn.sigmoid(gi_t[:, Hp:2 * Hp] + gh[:, Hp:2 * Hp])
                    n = jnp.tanh(gi_t[:, 2 * Hp:] + r * (gh[:, 2 * Hp:] + b_hn))
                    h = n + z * (h - n)
                    t_glob = c * C + tl
                    if not is_last:
                        hseq_ref[t_glob] = h.astype(scratch_dtype)
                    else:
                        # T may be padded to a chunk multiple: capture h at the
                        # real last timestep only.
                        @pl.when(t_glob == T - 1)
                        def _(h=h):
                            hlast_ref[...] = h
                return h

            jax.lax.fori_loop(0, n_chunks, chunk_body,
                              jnp.zeros((Bp, Hp), jnp.float32))

        # Final Linear on the last real timestep of the last layer.
        out_ref[...] = (
            jnp.dot(hlast_ref[...].astype(compute_dtype), wfc_ref[...],
                    preferred_element_type=jnp.float32)
            + bfc_ref[...])

    return kernel


def gru_model_forward(x, params, *, hidden_dim, num_layers, output_dim,
                      compute_dtype=jnp.float32):
    """x: (B, T, D) float32, batch_first — same as the PyTorch module."""
    B, T, D = x.shape
    H, L, O = hidden_dim, num_layers, output_dim
    is_bf16 = jnp.dtype(compute_dtype) == jnp.dtype(jnp.bfloat16)

    Hp = -(-H // 128) * 128                    # lane-dense hidden width
    sub = 16 if is_bf16 else 8                 # full packed vregs for bf16
    Bp = max(sub, -(-B // sub) * sub)
    C = 8                                      # timestep chunk (pipeline unit)
    Tp = -(-T // C) * C
    scratch_dtype = compute_dtype

    # Glue: time-major, pad time & batch, flatten (Tp, Bp) for the projections.
    x_tm = jnp.transpose(x, (1, 0, 2)).astype(jnp.float32)          # (T, B, D)
    x_tm = jnp.pad(x_tm, ((0, Tp - T), (0, Bp - B), (0, 0)))
    x_flat = x_tm.reshape(Tp * Bp, D).astype(compute_dtype)

    def pad2(w, rows, cols):
        return jnp.pad(w, ((0, rows - w.shape[0]), (0, cols - w.shape[1])))

    def padb(b):
        return jnp.pad(b, (0, Hp - H))

    kernel_args = [x_flat]
    for l in range(L):
        wih, whh, bih, bhh = params["gru"][l]   # (3H, D_l), (3H, H), (3H,), (3H,)
        d_in = D if l == 0 else Hp
        wih_cat = jnp.concatenate(
            [pad2(wih[g * H:(g + 1) * H].T, d_in, Hp) for g in range(3)],
            axis=1).astype(compute_dtype)                         # (d_in, 3Hp)
        whh_cat = jnp.concatenate(
            [pad2(whh[g * H:(g + 1) * H].T, Hp, Hp) for g in range(3)],
            axis=1).astype(compute_dtype)                         # (Hp, 3Hp)
        b_ir, b_iz, b_in_ = bih[0:H], bih[H:2 * H], bih[2 * H:3 * H]
        b_hr, b_hz, b_hn = bhh[0:H], bhh[H:2 * H], bhh[2 * H:3 * H]
        bcat = jnp.concatenate(
            [padb(b_ir + b_hr), padb(b_iz + b_hz), padb(b_in_)]
        ).reshape(1, 3 * Hp).astype(jnp.float32)
        bhn_p = padb(b_hn).reshape(1, Hp).astype(jnp.float32)
        kernel_args += [wih_cat, whh_cat, bcat, bhn_p]

    wfc = jnp.pad(params["fc_w"].T, ((0, Hp - H), (0, 0))).astype(compute_dtype)
    kernel_args += [wfc, params["fc_b"].reshape(1, O).astype(jnp.float32)]

    # Scratch: double-buffered gi, inter-layer hidden sequence, last-step h.
    hseq_rows = Tp if L > 1 else C
    scratch_shapes = [
        pltpu.VMEM((2 * C, Bp, 3 * Hp), scratch_dtype),
        pltpu.VMEM((hseq_rows, Bp, Hp), scratch_dtype),
        pltpu.VMEM((Bp, Hp), jnp.float32),
    ]

    # VMEM budget / cost estimate from actual resident buffers.
    cbytes = jnp.dtype(compute_dtype).itemsize
    sbytes = jnp.dtype(scratch_dtype).itemsize
    resident = (Tp * Bp * D * cbytes + Bp * O * 4
                + 2 * C * Bp * 3 * Hp * sbytes
                + hseq_rows * Bp * Hp * sbytes + Bp * Hp * 4)
    flops, trans = 0, 0
    for l in range(L):
        d_in = D if l == 0 else Hp
        resident += d_in * 3 * Hp * cbytes + Hp * 3 * Hp * cbytes + 4 * Hp * 4
        flops += 2 * Tp * Bp * d_in * 3 * Hp      # fused input projections
        flops += 2 * Tp * Bp * Hp * 3 * Hp        # fused recurrent matmuls
        trans += 3 * Tp * Bp * Hp                 # 2 sigmoids + 1 tanh per step
    resident += Hp * O * cbytes + O * 4
    flops += 2 * Bp * Hp * O
    hbm_bytes = sum(int(np.prod(a.shape)) * a.dtype.itemsize
                    for a in kernel_args) + Bp * O * 4

    try:
        cap = int(pltpu.get_tpu_info().vmem_capacity_bytes)
    except Exception:
        cap = 64 << 20                             # safe fallback for any chip
    vmem_limit = int(min(max(2 * resident + (8 << 20), 32 << 20),
                         cap - (8 << 20)))

    kernel = make_gru_kernel(T, Tp, Bp, Hp, L, O, C, compute_dtype,
                             scratch_dtype)
    out = pl.pallas_call(
        kernel,
        out_shape=jax.ShapeDtypeStruct((Bp, O), jnp.float32),
        in_specs=[pl.BlockSpec(memory_space=pltpu.MemorySpace.VMEM)]
        * len(kernel_args),
        out_specs=pl.BlockSpec(memory_space=pltpu.MemorySpace.VMEM),
        scratch_shapes=scratch_shapes,
        compiler_params=pltpu.CompilerParams(vmem_limit_bytes=vmem_limit),
        cost_estimate=pl.CostEstimate(flops=int(flops),
                                      transcendentals=int(trans),
                                      bytes_accessed=int(hbm_bytes)),
    )(*kernel_args)
    return out[:B]


def init_params(key, input_dim, hidden_dim, num_layers, output_dim):
    """Deterministic init mimicking PyTorch's U(-1/sqrt(H), 1/sqrt(H))."""
    H = hidden_dim
    k = 1.0 / np.sqrt(H)
    params = {"gru": []}
    for l in range(num_layers):
        d_in = input_dim if l == 0 else H
        key, k1, k2, k3, k4 = jax.random.split(key, 5)
        wih = jax.random.uniform(k1, (3 * H, d_in), jnp.float32, -k, k)
        whh = jax.random.uniform(k2, (3 * H, H), jnp.float32, -k, k)
        bih = jax.random.uniform(k3, (3 * H,), jnp.float32, -k, k)
        bhh = jax.random.uniform(k4, (3 * H,), jnp.float32, -k, k)
        params["gru"].append((wih, whh, bih, bhh))
    key, k1, k2 = jax.random.split(key, 3)
    params["fc_w"] = jax.random.uniform(k1, (output_dim, H), jnp.float32, -k, k)
    params["fc_b"] = jax.random.uniform(k2, (output_dim,), jnp.float32, -k, k)
    return params


def gru_model_reference(x, params, *, hidden_dim, num_layers, output_dim):
    """Pure-JAX reference (matches PyTorch nn.GRU eval-mode forward)."""
    B, T, D = x.shape
    H = hidden_dim
    seq = x.astype(jnp.float32)
    for l in range(num_layers):
        wih, whh, bih, bhh = params["gru"][l]

        def cell(h, x_t, wih=wih, whh=whh, bih=bih, bhh=bhh):
            gi = x_t @ wih.T + bih
            gh = h @ whh.T + bhh
            r = jax.nn.sigmoid(gi[:, :H] + gh[:, :H])
            z = jax.nn.sigmoid(gi[:, H:2 * H] + gh[:, H:2 * H])
            n = jnp.tanh(gi[:, 2 * H:] + r * gh[:, 2 * H:])
            h_new = (1.0 - z) * n + z * h
            return h_new, h_new

        h0 = jnp.zeros((B, H), jnp.float32)
        _, ys = jax.lax.scan(cell, h0, jnp.transpose(seq, (1, 0, 2)))
        seq = jnp.transpose(ys, (1, 0, 2))
    last = seq[:, -1, :]
    return last @ params["fc_w"].T + params["fc_b"]


if __name__ == "__main__":
    batch, seq_len, input_dim = 2, 8, 4
    hidden_dim, num_layers, output_dim = 32, 2, 1

    key = jax.random.PRNGKey(0)
    key, kx, kp = jax.random.split(key, 3)
    x = jax.random.normal(kx, (batch, seq_len, input_dim), jnp.float32)
    params = init_params(kp, input_dim, hidden_dim, num_layers, output_dim)

    ref = gru_model_reference(
        x, params, hidden_dim=hidden_dim, num_layers=num_layers,
        output_dim=output_dim)
    ref = jax.block_until_ready(ref)

    # f32 path (matches the PyTorch-style reference).
    out = gru_model_forward(
        x, params, hidden_dim=hidden_dim, num_layers=num_layers,
        output_dim=output_dim, compute_dtype=jnp.float32)
    out = jax.block_until_ready(out)
    assert out.shape == (batch, output_dim)
    np.testing.assert_allclose(np.asarray(out), np.asarray(ref),
                               rtol=1e-4, atol=1e-5)

    # bf16 weights/activations/scratch (v6e/v7x MXU path), f32 accumulation.
    out_bf16 = gru_model_forward(
        x, params, hidden_dim=hidden_dim, num_layers=num_layers,
        output_dim=output_dim, compute_dtype=jnp.bfloat16)
    out_bf16 = jax.block_until_ready(out_bf16)
    np.testing.assert_allclose(np.asarray(out_bf16), np.asarray(ref),
                               rtol=1e-1, atol=1e-1)

    print("KERNEL_OK")
</pallas_src>

<mosaic_0001>
module attributes {stable_mosaic.version = 11 : i64} {
  func.func @kernel(%arg0: memref<64x4xf32, #tpu.memory_space<vmem>>, %arg1: memref<4x384xf32, #tpu.memory_space<vmem>>, %arg2: memref<128x384xf32, #tpu.memory_space<vmem>>, %arg3: memref<1x384xf32, #tpu.memory_space<vmem>>, %arg4: memref<1x128xf32, #tpu.memory_space<vmem>>, %arg5: memref<128x384xf32, #tpu.memory_space<vmem>>, %arg6: memref<128x384xf32, #tpu.memory_space<vmem>>, %arg7: memref<1x384xf32, #tpu.memory_space<vmem>>, %arg8: memref<1x128xf32, #tpu.memory_space<vmem>>, %arg9: memref<128x1xf32, #tpu.memory_space<vmem>>, %arg10: memref<1x1xf32, #tpu.memory_space<vmem>>, %arg11: memref<8x1xf32, #tpu.memory_space<vmem>>, %arg12: memref<16x8x384xf32, #tpu.memory_space<vmem>>, %arg13: memref<8x8x128xf32, #tpu.memory_space<vmem>>, %arg14: memref<8x128xf32, #tpu.memory_space<vmem>>) attributes {dimension_semantics = [], scalar_prefetch = 0 : i64, scratch_operands = 3 : i64, tpu.core_type = #tpu.core_type<tc>} {
    %c0 = arith.constant 0 : index
    %c0_0 = arith.constant 0 : index
    %0 = vector.load %arg0[%c0, %c0_0] : memref<64x4xf32, #tpu.memory_space<vmem>>, vector<64x4xf32>
    %c0_1 = arith.constant 0 : index
    %c0_2 = arith.constant 0 : index
    %1 = vector.load %arg1[%c0_1, %c0_2] : memref<4x384xf32, #tpu.memory_space<vmem>>, vector<4x384xf32>
    %cst = arith.constant dense<0.000000e+00> : vector<64x384xf32>
    %2 = tpu.matmul %0, %1, %cst {dimension_numbers = #tpu.dot_dimension_numbers<[1], [0], [0], [1], [0, 0, 1, 1], [], []>} : vector<64x4xf32>, vector<4x384xf32>, vector<64x384xf32> -> vector<64x384xf32>
    %c0_3 = arith.constant 0 : index
    %c0_4 = arith.constant 0 : index
    %3 = vector.load %arg3[%c0_3, %c0_4] : memref<1x384xf32, #tpu.memory_space<vmem>>, vector<1x384xf32>
    %4 = vector.broadcast %3 : vector<1x384xf32> to vector<64x384xf32>
    %5 = arith.addf %2, %4 : vector<64x384xf32>
    %6 = vector.shape_cast %5 : vector<64x384xf32> to vector<8x8x384xf32>
    %c0_5 = arith.constant 0 : index
    %c0_6 = arith.constant 0 : index
    %c0_7 = arith.constant 0 : index
    %7 = vector.load %arg12[%c0_5, %c0_6, %c0_7] : memref<16x8x384xf32, #tpu.memory_space<vmem>>, vector<8x8x384xf32>
    tpu.vector_store %arg12[%c0_5, %c0_6, %c0_7], %6 {strides = array<i32>} : memref<16x8x384xf32, #tpu.memory_space<vmem>>, vector<8x8x384xf32>,
    %c0_8 = arith.constant 0 : index
    %c0_9 = arith.constant 0 : index
    %8 = vector.load %arg4[%c0_8, %c0_9] : memref<1x128xf32, #tpu.memory_space<vmem>>, vector<1x128xf32>
    %cst_10 = arith.constant 0.000000e+00 : f32
    %9 = vector.broadcast %cst_10 : f32 to vector<8x128xf32>
    %c0_i32 = arith.constant 0 : i32
    %c2_i32 = arith.constant 2 : i32
    %c0_i32_11 = arith.constant 0 : i32
    %10 = arith.cmpi eq, %c2_i32, %c0_i32_11 : i32
    %c1_i32 = arith.constant 1 : i32
    %11 = arith.select %10, %c1_i32, %c2_i32 : i32
    %12 = arith.remsi %c0_i32, %11 : i32
    %c0_i32_12 = arith.constant 0 : i32
    %13 = arith.cmpi ne, %12, %c0_i32_12 : i32
    %c0_i32_13 = arith.constant 0 : i32
    %14 = arith.cmpi slt, %12, %c0_i32_13 : i32
    %c0_i32_14 = arith.constant 0 : i32
    %15 = arith.cmpi slt, %11, %c0_i32_14 : i32
    %16 = arith.xori %14, %15 : i1
    %17 = arith.andi %16, %13 : i1
    %18 = arith.addi %12, %11 : i32
    %19 = arith.select %17, %18, %12 : i32
    %c8_i32 = arith.constant 8 : i32
    %20 = arith.muli %19, %c8_i32 : i32
    %c0_i32_15 = arith.constant 0 : i32
    %21 = arith.addi %20, %c0_i32_15 : i32
    %22 = arith.index_cast %21 : i32 to index
    %c0_16 = arith.constant 0 : index
    %c0_17 = arith.constant 0 : index
    %23 = vector.load %arg12[%22, %c0_16, %c0_17] : memref<16x8x384xf32, #tpu.memory_space<vmem>>, vector<1x8x384xf32>
    %24 = vector.shape_cast %23 : vector<1x8x384xf32> to vector<8x384xf32>
    %c0_18 = arith.constant 0 : index
    %c0_19 = arith.constant 0 : index
    %25 = vector.load %arg2[%c0_18, %c0_19] : memref<128x384xf32, #tpu.memory_space<vmem>>, vector<128x384xf32>
    %cst_20 = arith.constant dense<0.000000e+00> : vector<8x384xf32>
    %26 = tpu.matmul %9, %25, %cst_20 {dimension_numbers = #tpu.dot_dimension_numbers<[1], [0], [0], [1], [0, 0, 1, 1], [], []>} : vector<8x128xf32>, vector<128x384xf32>, vector<8x384xf32> -> vector<8x384xf32>
    %27 = vector.extract_strided_slice %24 {offsets = [0, 0], sizes = [8, 128], strides = [1, 1]} : vector<8x384xf32> to vector<8x128xf32>
    %28 = vector.extract_strided_slice %26 {offsets = [0, 0], sizes = [8, 128], strides = [1, 1]} : vector<8x384xf32> to vector<8x128xf32>
    %29 = arith.addf %27, %28 : vector<8x128xf32>
    %30 = arith.negf %29 : vector<8x128xf32>
    %31 = math.exp %30 : vector<8x128xf32>
    %cst_21 = arith.constant 1.000000e+00 : f32
    %32 = vector.broadcast %cst_21 : f32 to vector<8x128xf32>
    %33 = arith.addf %32, %31 : vector<8x128xf32>
    %34 = arith.divf %32, %33 : vector<8x128xf32>
    %35 = vector.extract_strided_slice %24 {offsets = [0, 128], sizes = [8, 128], strides = [1, 1]} : vector<8x384xf32> to vector<8x128xf32>
    %36 = vector.extract_strided_slice %26 {offsets = [0, 128], sizes = [8, 128], strides = [1, 1]} : vector<8x384xf32> to vector<8x128xf32>
    %37 = arith.addf %35, %36 : vector<8x128xf32>
    %38 = arith.negf %37 : vector<8x128xf32>
    %39 = math.exp %38 : vector<8x128xf32>
    %cst_22 = arith.constant 1.000000e+00 : f32
    %40 = vector.broadcast %cst_22 : f32 to vector<8x128xf32>
    %41 = arith.addf %40, %39 : vector<8x128xf32>
    %42 = arith.divf %40, %41 : vector<8x128xf32>
    %43 = vector.extract_strided_slice %24 {offsets = [0, 256], sizes = [8, 128], strides = [1, 1]} : vector<8x384xf32> to vector<8x128xf32>
    %44 = vector.extract_strided_slice %26 {offsets = [0, 256], sizes = [8, 128], strides = [1, 1]} : vector<8x384xf32> to vector<8x128xf32>
    %45 = vector.broadcast %8 : vector<1x128xf32> to vector<8x128xf32>
    %46 = arith.addf %44, %45 : vector<8x128xf32>
    %47 = arith.mulf %34, %46 : vector<8x128xf32>
    %48 = arith.addf %43, %47 : vector<8x128xf32>
    %49 = math.tanh %48 : vector<8x128xf32>
    %50 = arith.subf %9, %49 : vector<8x128xf32>
    %51 = arith.mulf %42, %50 : vector<8x128xf32>
    %52 = arith.addf %49, %51 : vector<8x128xf32>
    %c8_i32_23 = arith.constant 8 : i32
    %53 = arith.muli %c0_i32, %c8_i32_23 : i32
    %c0_i32_24 = arith.constant 0 : i32
    %54 = arith.addi %53, %c0_i32_24 : i32
    %55 = arith.index_cast %54 : i32 to index
    %c0_25 = arith.constant 0 : index
    %c0_26 = arith.constant 0 : index
    %56 = vector.load %arg13[%55, %c0_25, %c0_26] : memref<8x8x128xf32, #tpu.memory_space<vmem>>, vector<1x8x128xf32>
    %57 = vector.shape_cast %56 : vector<1x8x128xf32> to vector<8x128xf32>
    %58 = vector.shape_cast %52 : vector<8x128xf32> to vector<1x8x128xf32>
    tpu.vector_store %arg13[%55, %c0_25, %c0_26], %58 {strides = array<i32>} : memref<8x8x128xf32, #tpu.memory_space<vmem>>, vector<1x8x128xf32>,
    %c1_i32_27 = arith.constant 1 : i32
    %59 = arith.addi %20, %c1_i32_27 : i32
    %60 = arith.index_cast %59 : i32 to index
    %c0_28 = arith.constant 0 : index
    %c0_29 = arith.constant 0 : index
    %61 = vector.load %arg12[%60, %c0_28, %c0_29] : memref<16x8x384xf32, #tpu.memory_space<vmem>>, vector<1x8x384xf32>
    %62 = vector.shape_cast %61 : vector<1x8x384xf32> to vector<8x384xf32>
    %c0_30 = arith.constant 0 : index
    %c0_31 = arith.constant 0 : index
    %63 = vector.load %arg2[%c0_30, %c0_31] : memref<128x384xf32, #tpu.memory_space<vmem>>, vector<128x384xf32>
    %cst_32 = arith.constant dense<0.000000e+00> : vector<8x384xf32>
    %64 = tpu.matmul %52, %63, %cst_32 {dimension_numbers = #tpu.dot_dimension_numbers<[1], [0], [0], [1], [0, 0, 1, 1], [], []>} : vector<8x128xf32>, vector<128x384xf32>, vector<8x384xf32> -> vector<8x384xf32>
    %65 = vector.extract_strided_slice %62 {offsets = [0, 0], sizes = [8, 128], strides = [1, 1]} : vector<8x384xf32> to vector<8x128xf32>
    %66 = vector.extract_strided_slice %64 {offsets = [0, 0], sizes = [8, 128], strides = [1, 1]} : vector<8x384xf32> to vector<8x128xf32>
    %67 = arith.addf %65, %66 : vector<8x128xf32>
    %68 = arith.negf %67 : vector<8x128xf32>
    %69 = math.exp %68 : vector<8x128xf32>
    %cst_33 = arith.constant 1.000000e+00 : f32
    %70 = vector.broadcast %cst_33 : f32 to vector<8x128xf32>
    %71 = arith.addf %70, %69 : vector<8x128xf32>
    %72 = arith.divf %70, %71 : vector<8x128xf32>
    %73 = vector.extract_strided_slice %62 {offsets = [0, 128], sizes = [8, 128], strides = [1, 1]} : vector<8x384xf32> to vector<8x128xf32>
    %74 = vector.extract_strided_slice %64 {offsets = [0, 128], sizes = [8, 128], strides = [1, 1]} : vector<8x384xf32> to vector<8x128xf32>
    %75 = arith.addf %73, %74 : vector<8x128xf32>
    %76 = arith.negf %75 : vector<8x128xf32>
    %77 = math.exp %76 : vector<8x128xf32>
    %cst_34 = arith.constant 1.000000e+00 : f32
    %78 = vector.broadcast %cst_34 : f32 to vector<8x128xf32>
    %79 = arith.addf %78, %77 : vector<8x128xf32>
    %80 = arith.divf %78, %79 : vector<8x128xf32>
    %81 = vector.extract_strided_slice %62 {offsets = [0, 256], sizes = [8, 128], strides = [1, 1]} : vector<8x384xf32> to vector<8x128xf32>
    %82 = vector.extract_strided_slice %64 {offsets = [0, 256], sizes = [8, 128], strides = [1, 1]} : vector<8x384xf32> to vector<8x128xf32>
    %83 = vector.broadcast %8 : vector<1x128xf32> to vector<8x128xf32>
    %84 = arith.addf %82, %83 : vector<8x128xf32>
    %85 = arith.mulf %72, %84 : vector<8x128xf32>
    %86 = arith.addf %81, %85 : vector<8x128xf32>
    %87 = math.tanh %86 : vector<8x128xf32>
    %88 = arith.subf %52, %87 : vector<8x128xf32>
    %89 = arith.mulf %80, %88 : vector<8x128xf32>
    %90 = arith.addf %87, %89 : vector<8x128xf32>
    %c8_i32_35 = arith.constant 8 : i32
    %91 = arith.muli %c0_i32, %c8_i32_35 : i32
    %c1_i32_36 = arith.constant 1 : i32
    %92 = arith.addi %91, %c1_i32_36 : i32
    %93 = arith.index_cast %92 : i32 to index
    %c0_37 = arith.constant 0 : index
    %c0_38 = arith.constant 0 : index
    %94 = vector.load %arg13[%93, %c0_37, %c0_38] : memref<8x8x128xf32, #tpu.memory_space<vmem>>, vector<1x8x128xf32>
    %95 = vector.shape_cast %94 : vector<1x8x128xf32> to vector<8x128xf32>
    %96 = vector.shape_cast %90 : vector<8x128xf32> to vector<1x8x128xf32>
    tpu.vector_store %arg13[%93, %c0_37, %c0_38], %96 {strides = array<i32>} : memref<8x8x128xf32, #tpu.memory_space<vmem>>, vector<1x8x128xf32>,
    %c2_i32_39 = arith.constant 2 : i32
    %97 = arith.addi %20, %c2_i32_39 : i32
    %98 = arith.index_cast %97 : i32 to index
    %c0_40 = arith.constant 0 : index
    %c0_41 = arith.constant 0 : index
    %99 = vector.load %arg12[%98, %c0_40, %c0_41] : memref<16x8x384xf32, #tpu.memory_space<vmem>>, vector<1x8x384xf32>
    %100 = vector.shape_cast %99 : vector<1x8x384xf32> to vector<8x384xf32>
    %c0_42 = arith.constant 0 : index
    %c0_43 = arith.constant 0 : index
    %101 = vector.load %arg2[%c0_42, %c0_43] : memref<128x384xf32, #tpu.memory_space<vmem>>, vector<128x384xf32>
    %cst_44 = arith.constant dense<0.000000e+00> : vector<8x384xf32>
    %102 = tpu.matmul %90, %101, %cst_44 {dimension_numbers = #tpu.dot_dimension_numbers<[1], [0], [0], [1], [0, 0, 1, 1], [], []>} : vector<8x128xf32>, vector<128x384xf32>, vector<8x384xf32> -> vector<8x384xf32>
    %103 = vector.extract_strided_slice %100 {offsets = [0, 0], sizes = [8, 128], strides = [1, 1]} : vector<8x384xf32> to vector<8x128xf32>
    %104 = vector.extract_strided_slice %102 {offsets = [0, 0], sizes = [8, 128], strides = [1, 1]} : vector<8x384xf32> to vector<8x128xf32>
    %105 = arith.addf %103, %104 : vector<8x128xf32>
    %106 = arith.negf %105 : vector<8x128xf32>
    %107 = math.exp %106 : vector<8x128xf32>
    %cst_45 = arith.constant 1.000000e+00 : f32
    %108 = vector.broadcast %cst_45 : f32 to vector<8x128xf32>
    %109 = arith.addf %108, %107 : vector<8x128xf32>
    %110 = arith.divf %108, %109 : vector<8x128xf32>
    %111 = vector.extract_strided_slice %100 {offsets = [0, 128], sizes = [8, 128], strides = [1, 1]} : vector<8x384xf32> to vector<8x128xf32>
    %112 = vector.extract_strided_slice %102 {offsets = [0, 128], sizes = [8, 128], strides = [1, 1]} : vector<8x384xf32> to vector<8x128xf32>
    %113 = arith.addf %111, %112 : vector<8x128xf32>
    %114 = arith.negf %113 : vector<8x128xf32>
    %115 = math.exp %114 : vector<8x128xf32>
    %cst_46 = arith.constant 1.000000e+00 : f32
    %116 = vector.broadcast %cst_46 : f32 to vector<8x128xf32>
    %117 = arith.addf %116, %115 : vector<8x128xf32>
    %118 = arith.divf %116, %117 : vector<8x128xf32>
    %119 = vector.extract_strided_slice %100 {offsets = [0, 256], sizes = [8, 128], strides = [1, 1]} : vector<8x384xf32> to vector<8x128xf32>
    %120 = vector.extract_strided_slice %102 {offsets = [0, 256], sizes = [8, 128], strides = [1, 1]} : vector<8x384xf32> to vector<8x128xf32>
    %121 = vector.broadcast %8 : vector<1x128xf32> to vector<8x128xf32>
    %122 = arith.addf %120, %121 : vector<8x128xf32>
    %123 = arith.mulf %110, %122 : vector<8x128xf32>
    %124 = arith.addf %119, %123 : vector<8x128xf32>
    %125 = math.tanh %124 : vector<8x128xf32>
    %126 = arith.subf %90, %125 : vector<8x128xf32>
    %127 = arith.mulf %118, %126 : vector<8x128xf32>
    %128 = arith.addf %125, %127 : vector<8x128xf32>
    %c8_i32_47 = arith.constant 8 : i32
    %129 = arith.muli %c0_i32, %c8_i32_47 : i32
    %c2_i32_48 = arith.constant 2 : i32
    %130 = arith.addi %129, %c2_i32_48 : i32
    %131 = arith.index_cast %130 : i32 to index
    %c0_49 = arith.constant 0 : index
    %c0_50 = arith.constant 0 : index
    %132 = vector.load %arg13[%131, %c0_49, %c0_50] : memref<8x8x128xf32, #tpu.memory_space<vmem>>, vector<1x8x128xf32>
    %133 = vector.shape_cast %132 : vector<1x8x128xf32> to vector<8x128xf32>
    %134 = vector.shape_cast %128 : vector<8x128xf32> to vector<1x8x128xf32>
    tpu.vector_store %arg13[%131, %c0_49, %c0_50], %134 {strides = array<i32>} : memref<8x8x128xf32, #tpu.memory_space<vmem>>, vector<1x8x128xf32>,
    %c3_i32 = arith.constant 3 : i32
    %135 = arith.addi %20, %c3_i32 : i32
    %136 = arith.index_cast %135 : i32 to index
    %c0_51 = arith.constant 0 : index
    %c0_52 = arith.constant 0 : index
    %137 = vector.load %arg12[%136, %c0_51, %c0_52] : memref<16x8x384xf32, #tpu.memory_space<vmem>>, vector<1x8x384xf32>
    %138 = vector.shape_cast %137 : vector<1x8x384xf32> to vector<8x384xf32>
    %c0_53 = arith.constant 0 : index
    %c0_54 = arith.constant 0 : index
    %139 = vector.load %arg2[%c0_53, %c0_54] : memref<128x384xf32, #tpu.memory_space<vmem>>, vector<128x384xf32>
    %cst_55 = arith.constant dense<0.000000e+00> : vector<8x384xf32>
    %140 = tpu.matmul %128, %139, %cst_55 {dimension_numbers = #tpu.dot_dimension_numbers<[1], [0], [0], [1], [0, 0, 1, 1], [], []>} : vector<8x128xf32>, vector<128x384xf32>, vector<8x384xf32> -> vector<8x384xf32>
    %141 = vector.extract_strided_slice %138 {offsets = [0, 0], sizes = [8, 128], strides = [1, 1]} : vector<8x384xf32> to vector<8x128xf32>
    %142 = vector.extract_strided_slice %140 {offsets = [0, 0], sizes = [8, 128], strides = [1, 1]} : vector<8x384xf32> to vector<8x128xf32>
    %143 = arith.addf %141, %142 : vector<8x128xf32>
    %144 = arith.negf %143 : vector<8x128xf32>
    %145 = math.exp %144 : vector<8x128xf32>
    %cst_56 = arith.constant 1.000000e+00 : f32
    %146 = vector.broadcast %cst_56 : f32 to vector<8x128xf32>
    %147 = arith.addf %146, %145 : vector<8x128xf32>
    %148 = arith.divf %146, %147 : vector<8x128xf32>
    %149 = vector.extract_strided_slice %138 {offsets = [0, 128], sizes = [8, 128], strides = [1, 1]} : vector<8x384xf32> to vector<8x128xf32>
    %150 = vector.extract_strided_slice %140 {offsets = [0, 128], sizes = [8, 128], strides = [1, 1]} : vector<8x384xf32> to vector<8x128xf32>
    %151 = arith.addf %149, %150 : vector<8x128xf32>
    %152 = arith.negf %151 : vector<8x128xf32>
    %153 = math.exp %152 : vector<8x128xf32>
    %cst_57 = arith.constant 1.000000e+00 : f32
    %154 = vector.broadcast %cst_57 : f32 to vector<8x128xf32>
    %155 = arith.addf %154, %153 : vector<8x128xf32>
    %156 = arith.divf %154, %155 : vector<8x128xf32>
    %157 = vector.extract_strided_slice %138 {offsets = [0, 256], sizes = [8, 128], strides = [1, 1]} : vector<8x384xf32> to vector<8x128xf32>
    %158 = vector.extract_strided_slice %140 {offsets = [0, 256], sizes = [8, 128], strides = [1, 1]} : vector<8x384xf32> to vector<8x128xf32>
    %159 = vector.broadcast %8 : vector<1x128xf32> to vector<8x128xf32>
    %160 = arith.addf %158, %159 : vector<8x128xf32>
    %161 = arith.mulf %148, %160 : vector<8x128xf32>
    %162 = arith.addf %157, %161 : vector<8x128xf32>
    %163 = math.tanh %162 : vector<8x128xf32>
    %164 = arith.subf %128, %163 : vector<8x128xf32>
    %165 = arith.mulf %156, %164 : vector<8x128xf32>
    %166 = arith.addf %163, %165 : vector<8x128xf32>
    %c8_i32_58 = arith.constant 8 : i32
    %167 = arith.muli %c0_i32, %c8_i32_58 : i32
    %c3_i32_59 = arith.constant 3 : i32
    %168 = arith.addi %167, %c3_i32_59 : i32
    %169 = arith.index_cast %168 : i32 to index
    %c0_60 = arith.constant 0 : index
    %c0_61 = arith.constant 0 : index
    %170 = vector.load %arg13[%169, %c0_60, %c0_61] : memref<8x8x128xf32, #tpu.memory_space<vmem>>, vector<1x8x128xf32>
    %171 = vector.shape_cast %170 : vector<1x8x128xf32> to vector<8x128xf32>
    %172 = vector.shape_cast %166 : vector<8x128xf32> to vector<1x8x128xf32>
    tpu.vector_store %arg13[%169, %c0_60, %c0_61], %172 {strides = array<i32>} : memref<8x8x128xf32, #tpu.memory_space<vmem>>, vector<1x8x128xf32>,
    %c4_i32 = arith.constant 4 : i32
    %173 = arith.addi %20, %c4_i32 : i32
    %174 = arith.index_cast %173 : i32 to index
    %c0_62 = arith.constant 0 : index
    %c0_63 = arith.constant 0 : index
    %175 = vector.load %arg12[%174, %c0_62, %c0_63] : memref<16x8x384xf32, #tpu.memory_space<vmem>>, vector<1x8x384xf32>
    %176 = vector.shape_cast %175 : vector<1x8x384xf32> to vector<8x384xf32>
    %c0_64 = arith.constant 0 : index
    %c0_65 = arith.constant 0 : index
    %177 = vector.load %arg2[%c0_64, %c0_65] : memref<128x384xf32, #tpu.memory_space<vmem>>, vector<128x384xf32>
    %cst_66 = arith.constant dense<0.000000e+00> : vector<8x384xf32>
    %178 = tpu.matmul %166, %177, %cst_66 {dimension_numbers = #tpu.dot_dimension_numbers<[1], [0], [0], [1], [0, 0, 1, 1], [], []>} : vector<8x128xf32>, vector<128x384xf32>, vector<8x384xf32> -> vector<8x384xf32>
    %179 = vector.extract_strided_slice %176 {offsets = [0, 0], sizes = [8, 128], strides = [1, 1]} : vector<8x384xf32> to vector<8x128xf32>
    %180 = vector.extract_strided_slice %178 {offsets = [0, 0], sizes = [8, 128], strides = [1, 1]} : vector<8x384xf32> to vector<8x128xf32>
    %181 = arith.addf %179, %180 : vector<8x128xf32>
    %182 = arith.negf %181 : vector<8x128xf32>
    %183 = math.exp %182 : vector<8x128xf32>
    %cst_67 = arith.constant 1.000000e+00 : f32
    %184 = vector.broadcast %cst_67 : f32 to vector<8x128xf32>
    %185 = arith.addf %184, %183 : vector<8x128xf32>
    %186 = arith.divf %184, %185 : vector<8x128xf32>
    %187 = vector.extract_strided_slice %176 {offsets = [0, 128], sizes = [8, 128], strides = [1, 1]} : vector<8x384xf32> to vector<8x128xf32>
    %188 = vector.extract_strided_slice %178 {offsets = [0, 128], sizes = [8, 128], strides = [1, 1]} : vector<8x384xf32> to vector<8x128xf32>
    %189 = arith.addf %187, %188 : vector<8x128xf32>
    %190 = arith.negf %189 : vector<8x128xf32>
    %191 = math.exp %190 : vector<8x128xf32>
    %cst_68 = arith.constant 1.000000e+00 : f32
    %192 = vector.broadcast %cst_68 : f32 to vector<8x128xf32>
    %193 = arith.addf %192, %191 : vector<8x128xf32>
    %194 = arith.divf %192, %193 : vector<8x128xf32>
    %195 = vector.extract_strided_slice %176 {offsets = [0, 256], sizes = [8, 128], strides = [1, 1]} : vector<8x384xf32> to vector<8x128xf32>
    %196 = vector.extract_strided_slice %178 {offsets = [0, 256], sizes = [8, 128], strides = [1, 1]} : vector<8x384xf32> to vector<8x128xf32>
    %197 = vector.broadcast %8 : vector<1x128xf32> to vector<8x128xf32>
    %198 = arith.addf %196, %197 : vector<8x128xf32>
    %199 = arith.mulf %186, %198 : vector<8x128xf32>
    %200 = arith.addf %195, %199 : vector<8x128xf32>
    %201 = math.tanh %200 : vector<8x128xf32>
    %202 = arith.subf %166, %201 : vector<8x128xf32>
    %203 = arith.mulf %194, %202 : vector<8x128xf32>
    %204 = arith.addf %201, %203 : vector<8x128xf32>
    %c8_i32_69 = arith.constant 8 : i32
    %205 = arith.muli %c0_i32, %c8_i32_69 : i32
    %c4_i32_70 = arith.constant 4 : i32
    %206 = arith.addi %205, %c4_i32_70 : i32
    %207 = arith.index_cast %206 : i32 to index
    %c0_71 = arith.constant 0 : index
    %c0_72 = arith.constant 0 : index
    %208 = vector.load %arg13[%207, %c0_71, %c0_72] : memref<8x8x128xf32, #tpu.memory_space<vmem>>, vector<1x8x128xf32>
    %209 = vector.shape_cast %208 : vector<1x8x128xf32> to vector<8x128xf32>
    %210 = vector.shape_cast %204 : vector<8x128xf32> to vector<1x8x128xf32>
    tpu.vector_store %arg13[%207, %c0_71, %c0_72], %210 {strides = array<i32>} : memref<8x8x128xf32, #tpu.memory_space<vmem>>, vector<1x8x128xf32>,
    %c5_i32 = arith.constant 5 : i32
    %211 = arith.addi %20, %c5_i32 : i32
    %212 = arith.index_cast %211 : i32 to index
    %c0_73 = arith.constant 0 : index
    %c0_74 = arith.constant 0 : index
    %213 = vector.load %arg12[%212, %c0_73, %c0_74] : memref<16x8x384xf32, #tpu.memory_space<vmem>>, vector<1x8x384xf32>
    %214 = vector.shape_cast %213 : vector<1x8x384xf32> to vector<8x384xf32>
    %c0_75 = arith.constant 0 : index
    %c0_76 = arith.constant 0 : index
    %215 = vector.load %arg2[%c0_75, %c0_76] : memref<128x384xf32, #tpu.memory_space<vmem>>, vector<128x384xf32>
    %cst_77 = arith.constant dense<0.000000e+00> : vector<8x384xf32>
    %216 = tpu.matmul %204, %215, %cst_77 {dimension_numbers = #tpu.dot_dimension_numbers<[1], [0], [0], [1], [0, 0, 1, 1], [], []>} : vector<8x128xf32>, vector<128x384xf32>, vector<8x384xf32> -> vector<8x384xf32>
    %217 = vector.extract_strided_slice %214 {offsets = [0, 0], sizes = [8, 128], strides = [1, 1]} : vector<8x384xf32> to vector<8x128xf32>
    %218 = vector.extract_strided_slice %216 {offsets = [0, 0], sizes = [8, 128], strides = [1, 1]} : vector<8x384xf32> to vector<8x128xf32>
    %219 = arith.addf %217, %218 : vector<8x128xf32>
    %220 = arith.negf %219 : vector<8x128xf32>
    %221 = math.exp %220 : vector<8x128xf32>
    %cst_78 = arith.constant 1.000000e+00 : f32
    %222 = vector.broadcast %cst_78 : f32 to vector<8x128xf32>
    %223 = arith.addf %222, %221 : vector<8x128xf32>
    %224 = arith.divf %222, %223 : vector<8x128xf32>
    %225 = vector.extract_strided_slice %214 {offsets = [0, 128], sizes = [8, 128], strides = [1, 1]} : vector<8x384xf32> to vector<8x128xf32>
    %226 = vector.extract_strided_slice %216 {offsets = [0, 128], sizes = [8, 128], strides = [1, 1]} : vector<8x384xf32> to vector<8x128xf32>
    %227 = arith.addf %225, %226 : vector<8x128xf32>
    %228 = arith.negf %227 : vector<8x128xf32>
    %229 = math.exp %228 : vector<8x128xf32>
    %cst_79 = arith.constant 1.000000e+00 : f32
    %230 = vector.broadcast %cst_79 : f32 to vector<8x128xf32>
    %231 = arith.addf %230, %229 : vector<8x128xf32>
    %232 = arith.divf %230, %231 : vector<8x128xf32>
    %233 = vector.extract_strided_slice %214 {offsets = [0, 256], sizes = [8, 128], strides = [1, 1]} : vector<8x384xf32> to vector<8x128xf32>
    %234 = vector.extract_strided_slice %216 {offsets = [0, 256], sizes = [8, 128], strides = [1, 1]} : vector<8x384xf32> to vector<8x128xf32>
    %235 = vector.broadcast %8 : vector<1x128xf32> to vector<8x128xf32>
    %236 = arith.addf %234, %235 : vector<8x128xf32>
    %237 = arith.mulf %224, %236 : vector<8x128xf32>
    %238 = arith.addf %233, %237 : vector<8x128xf32>
    %239 = math.tanh %238 : vector<8x128xf32>
    %240 = arith.subf %204, %239 : vector<8x128xf32>
    %241 = arith.mulf %232, %240 : vector<8x128xf32>
    %242 = arith.addf %239, %241 : vector<8x128xf32>
    %c8_i32_80 = arith.constant 8 : i32
    %243 = arith.muli %c0_i32, %c8_i32_80 : i32
    %c5_i32_81 = arith.constant 5 : i32
    %244 = arith.addi %243, %c5_i32_81 : i32
    %245 = arith.index_cast %244 : i32 to index
    %c0_82 = arith.constant 0 : index
    %c0_83 = arith.constant 0 : index
    %246 = vector.load %arg13[%245, %c0_82, %c0_83] : memref<8x8x128xf32, #tpu.memory_space<vmem>>, vector<1x8x128xf32>
    %247 = vector.shape_cast %246 : vector<1x8x128xf32> to vector<8x128xf32>
    %248 = vector.shape_cast %242 : vector<8x128xf32> to vector<1x8x128xf32>
    tpu.vector_store %arg13[%245, %c0_82, %c0_83], %248 {strides = array<i32>} : memref<8x8x128xf32, #tpu.memory_space<vmem>>, vector<1x8x128xf32>,
    %c6_i32 = arith.constant 6 : i32
    %249 = arith.addi %20, %c6_i32 : i32
    %250 = arith.index_cast %249 : i32 to index
    %c0_84 = arith.constant 0 : index
    %c0_85 = arith.constant 0 : index
    %251 = vector.load %arg12[%250, %c0_84, %c0_85] : memref<16x8x384xf32, #tpu.memory_space<vmem>>, vector<1x8x384xf32>
    %252 = vector.shape_cast %251 : vector<1x8x384xf32> to vector<8x384xf32>
    %c0_86 = arith.constant 0 : index
    %c0_87 = arith.constant 0 : index
    %253 = vector.load %arg2[%c0_86, %c0_87] : memref<128x384xf32, #tpu.memory_space<vmem>>, vector<128x384xf32>
    %cst_88 = arith.constant dense<0.000000e+00> : vector<8x384xf32>
    %254 = tpu.matmul %242, %253, %cst_88 {dimension_numbers = #tpu.dot_dimension_numbers<[1], [0], [0], [1], [0, 0, 1, 1], [], []>} : vector<8x128xf32>, vector<128x384xf32>, vector<8x384xf32> -> vector<8x384xf32>
    %255 = vector.extract_strided_slice %252 {offsets = [0, 0], sizes = [8, 128], strides = [1, 1]} : vector<8x384xf32> to vector<8x128xf32>
    %256 = vector.extract_strided_slice %254 {offsets = [0, 0], sizes = [8, 128], strides = [1, 1]} : vector<8x384xf32> to vector<8x128xf32>
    %257 = arith.addf %255, %256 : vector<8x128xf32>
    %258 = arith.negf %257 : vector<8x128xf32>
    %259 = math.exp %258 : vector<8x128xf32>
    %cst_89 = arith.constant 1.000000e+00 : f32
    %260 = vector.broadcast %cst_89 : f32 to vector<8x128xf32>
    %261 = arith.addf %260, %259 : vector<8x128xf32>
    %262 = arith.divf %260, %261 : vector<8x128xf32>
    %263 = vector.extract_strided_slice %252 {offsets = [0, 128], sizes = [8, 128], strides = [1, 1]} : vector<8x384xf32> to vector<8x128xf32>
    %264 = vector.extract_strided_slice %254 {offsets = [0, 128], sizes = [8, 128], strides = [1, 1]} : vector<8x384xf32> to vector<8x128xf32>
    %265 = arith.addf %263, %264 : vector<8x128xf32>
    %266 = arith.negf %265 : vector<8x128xf32>
    %267 = math.exp %266 : vector<8x128xf32>
    %cst_90 = arith.constant 1.000000e+00 : f32
    %268 = vector.broadcast %cst_90 : f32 to vector<8x128xf32>
    %269 = arith.addf %268, %267 : vector<8x128xf32>
    %270 = arith.divf %268, %269 : vector<8x128xf32>
    %271 = vector.extract_strided_slice %252 {offsets = [0, 256], sizes = [8, 128], strides = [1, 1]} : vector<8x384xf32> to vector<8x128xf32>
    %272 = vector.extract_strided_slice %254 {offsets = [0, 256], sizes = [8, 128], strides = [1, 1]} : vector<8x384xf32> to vector<8x128xf32>
    %273 = vector.broadcast %8 : vector<1x128xf32> to vector<8x128xf32>
    %274 = arith.addf %272, %273 : vector<8x128xf32>
    %275 = arith.mulf %262, %274 : vector<8x128xf32>
    %276 = arith.addf %271, %275 : vector<8x128xf32>
    %277 = math.tanh %276 : vector<8x128xf32>
    %278 = arith.subf %242, %277 : vector<8x128xf32>
    %279 = arith.mulf %270, %278 : vector<8x128xf32>
    %280 = arith.addf %277, %279 : vector<8x128xf32>
    %c8_i32_91 = arith.constant 8 : i32
    %281 = arith.muli %c0_i32, %c8_i32_91 : i32
    %c6_i32_92 = arith.constant 6 : i32
    %282 = arith.addi %281, %c6_i32_92 : i32
    %283 = arith.index_cast %282 : i32 to index
    %c0_93 = arith.constant 0 : index
    %c0_94 = arith.constant 0 : index
    %284 = vector.load %arg13[%283, %c0_93, %c0_94] : memref<8x8x128xf32, #tpu.memory_space<vmem>>, vector<1x8x128xf32>
    %285 = vector.shape_cast %284 : vector<1x8x128xf32> to vector<8x128xf32>
    %286 = vector.shape_cast %280 : vector<8x128xf32> to vector<1x8x128xf32>
    tpu.vector_store %arg13[%283, %c0_93, %c0_94], %286 {strides = array<i32>} : memref<8x8x128xf32, #tpu.memory_space<vmem>>, vector<1x8x128xf32>,
    %c7_i32 = arith.constant 7 : i32
    %287 = arith.addi %20, %c7_i32 : i32
    %288 = arith.index_cast %287 : i32 to index
    %c0_95 = arith.constant 0 : index
    %c0_96 = arith.constant 0 : index
    %289 = vector.load %arg12[%288, %c0_95, %c0_96] : memref<16x8x384xf32, #tpu.memory_space<vmem>>, vector<1x8x384xf32>
    %290 = vector.shape_cast %289 : vector<1x8x384xf32> to vector<8x384xf32>
    %c0_97 = arith.constant 0 : index
    %c0_98 = arith.constant 0 : index
    %291 = vector.load %arg2[%c0_97, %c0_98] : memref<128x384xf32, #tpu.memory_space<vmem>>, vector<128x384xf32>
    %cst_99 = arith.constant dense<0.000000e+00> : vector<8x384xf32>
    %292 = tpu.matmul %280, %291, %cst_99 {dimension_numbers = #tpu.dot_dimension_numbers<[1], [0], [0], [1], [0, 0, 1, 1], [], []>} : vector<8x128xf32>, vector<128x384xf32>, vector<8x384xf32> -> vector<8x384xf32>
    %293 = vector.extract_strided_slice %290 {offsets = [0, 0], sizes = [8, 128], strides = [1, 1]} : vector<8x384xf32> to vector<8x128xf32>
    %294 = vector.extract_strided_slice %292 {offsets = [0, 0], sizes = [8, 128], strides = [1, 1]} : vector<8x384xf32> to vector<8x128xf32>
    %295 = arith.addf %293, %294 : vector<8x128xf32>
    %296 = arith.negf %295 : vector<8x128xf32>
    %297 = math.exp %296 : vector<8x128xf32>
    %cst_100 = arith.constant 1.000000e+00 : f32
    %298 = vector.broadcast %cst_100 : f32 to vector<8x128xf32>
    %299 = arith.addf %298, %297 : vector<8x128xf32>
    %300 = arith.divf %298, %299 : vector<8x128xf32>
    %301 = vector.extract_strided_slice %290 {offsets = [0, 128], sizes = [8, 128], strides = [1, 1]} : vector<8x384xf32> to vector<8x128xf32>
    %302 = vector.extract_strided_slice %292 {offsets = [0, 128], sizes = [8, 128], strides = [1, 1]} : vector<8x384xf32> to vector<8x128xf32>
    %303 = arith.addf %301, %302 : vector<8x128xf32>
    %304 = arith.negf %303 : vector<8x128xf32>
    %305 = math.exp %304 : vector<8x128xf32>
    %cst_101 = arith.constant 1.000000e+00 : f32
    %306 = vector.broadcast %cst_101 : f32 to vector<8x128xf32>
    %307 = arith.addf %306, %305 : vector<8x128xf32>
    %308 = arith.divf %306, %307 : vector<8x128xf32>
    %309 = vector.extract_strided_slice %290 {offsets = [0, 256], sizes = [8, 128], strides = [1, 1]} : vector<8x384xf32> to vector<8x128xf32>
    %310 = vector.extract_strided_slice %292 {offsets = [0, 256], sizes = [8, 128], strides = [1, 1]} : vector<8x384xf32> to vector<8x128xf32>
    %311 = vector.broadcast %8 : vector<1x128xf32> to vector<8x128xf32>
    %312 = arith.addf %310, %311 : vector<8x128xf32>
    %313 = arith.mulf %300, %312 : vector<8x128xf32>
    %314 = arith.addf %309, %313 : vector<8x128xf32>
    %315 = math.tanh %314 : vector<8x128xf32>
    %316 = arith.subf %280, %315 : vector<8x128xf32>
    %317 = arith.mulf %308, %316 : vector<8x128xf32>
    %318 = arith.addf %315, %317 : vector<8x128xf32>
    %c8_i32_102 = arith.constant 8 : i32
    %319 = arith.muli %c0_i32, %c8_i32_102 : i32
    %c7_i32_103 = arith.constant 7 : i32
    %320 = arith.addi %319, %c7_i32_103 : i32
    %321 = arith.index_cast %320 : i32 to index
    %c0_104 = arith.constant 0 : index
    %c0_105 = arith.constant 0 : index
    %322 = vector.load %arg13[%321, %c0_104, %c0_105] : memref<8x8x128xf32, #tpu.memory_space<vmem>>, vector<1x8x128xf32>
    %323 = vector.shape_cast %322 : vector<1x8x128xf32> to vector<8x128xf32>
    %324 = vector.shape_cast %318 : vector<8x128xf32> to vector<1x8x128xf32>
    tpu.vector_store %arg13[%321, %c0_104, %c0_105], %324 {strides = array<i32>} : memref<8x8x128xf32, #tpu.memory_space<vmem>>, vector<1x8x128xf32>,
    %c1_i32_106 = arith.constant 1 : i32
    %c0_107 = arith.constant 0 : index
    %c0_108 = arith.constant 0 : index
    %c0_109 = arith.constant 0 : index
    %325 = vector.load %arg13[%c0_107, %c0_108, %c0_109] : memref<8x8x128xf32, #tpu.memory_space<vmem>>, vector<8x8x128xf32>
    %326 = vector.shape_cast %325 : vector<8x8x128xf32> to vector<64x128xf32>
    %c0_110 = arith.constant 0 : index
    %c0_111 = arith.constant 0 : index
    %327 = vector.load %arg5[%c0_110, %c0_111] : memref<128x384xf32, #tpu.memory_space<vmem>>, vector<128x384xf32>
    %cst_112 = arith.constant dense<0.000000e+00> : vector<64x384xf32>
    %328 = tpu.matmul %326, %327, %cst_112 {dimension_numbers = #tpu.dot_dimension_numbers<[1], [0], [0], [1], [0, 0, 1, 1], [], []>} : vector<64x128xf32>, vector<128x384xf32>, vector<64x384xf32> -> vector<64x384xf32>
    %c0_113 = arith.constant 0 : index
    %c0_114 = arith.constant 0 : index
    %329 = vector.load %arg7[%c0_113, %c0_114] : memref<1x384xf32, #tpu.memory_space<vmem>>, vector<1x384xf32>
    %330 = vector.broadcast %329 : vector<1x384xf32> to vector<64x384xf32>
    %331 = arith.addf %328, %330 : vector<64x384xf32>
    %332 = vector.shape_cast %331 : vector<64x384xf32> to vector<8x8x384xf32>
    %c0_115 = arith.constant 0 : index
    %c0_116 = arith.constant 0 : index
    %c0_117 = arith.constant 0 : index
    %333 = vector.load %arg12[%c0_115, %c0_116, %c0_117] : memref<16x8x384xf32, #tpu.memory_space<vmem>>, vector<8x8x384xf32>
    tpu.vector_store %arg12[%c0_115, %c0_116, %c0_117], %332 {strides = array<i32>} : memref<16x8x384xf32, #tpu.memory_space<vmem>>, vector<8x8x384xf32>,
    %c0_118 = arith.constant 0 : index
    %c0_119 = arith.constant 0 : index
    %334 = vector.load %arg8[%c0_118, %c0_119] : memref<1x128xf32, #tpu.memory_space<vmem>>, vector<1x128xf32>
    %cst_120 = arith.constant 0.000000e+00 : f32
    %335 = vector.broadcast %cst_120 : f32 to vector<8x128xf32>
    %c0_i32_121 = arith.constant 0 : i32
    %c2_i32_122 = arith.constant 2 : i32
    %c0_i32_123 = arith.constant 0 : i32
    %336 = arith.cmpi eq, %c2_i32_122, %c0_i32_123 : i32
    %c1_i32_124 = arith.constant 1 : i32
    %337 = arith.select %336, %c1_i32_124, %c2_i32_122 : i32
    %338 = arith.remsi %c0_i32_121, %337 : i32
    %c0_i32_125 = arith.constant 0 : i32
    %339 = arith.cmpi ne, %338, %c0_i32_125 : i32
    %c0_i32_126 = arith.constant 0 : i32
    %340 = arith.cmpi slt, %338, %c0_i32_126 : i32
    %c0_i32_127 = arith.constant 0 : i32
    %341 = arith.cmpi slt, %337, %c0_i32_127 : i32
    %342 = arith.xori %340, %341 : i1
    %343 = arith.andi %342, %339 : i1
    %344 = arith.addi %338, %337 : i32
    %345 = arith.select %343, %344, %338 : i32
    %c8_i32_128 = arith.constant 8 : i32
    %346 = arith.muli %345, %c8_i32_128 : i32
    %c0_i32_129 = arith.constant 0 : i32
    %347 = arith.addi %346, %c0_i32_129 : i32
    %348 = arith.index_cast %347 : i32 to index
    %c0_130 = arith.constant 0 : index
    %c0_131 = arith.constant 0 : index
    %349 = vector.load %arg12[%348, %c0_130, %c0_131] : memref<16x8x384xf32, #tpu.memory_space<vmem>>, vector<1x8x384xf32>
    %350 = vector.shape_cast %349 : vector<1x8x384xf32> to vector<8x384xf32>
    %c0_132 = arith.constant 0 : index
    %c0_133 = arith.constant 0 : index
    %351 = vector.load %arg6[%c0_132, %c0_133] : memref<128x384xf32, #tpu.memory_space<vmem>>, vector<128x384xf32>
    %cst_134 = arith.constant dense<0.000000e+00> : vector<8x384xf32>
    %352 = tpu.matmul %335, %351, %cst_134 {dimension_numbers = #tpu.dot_dimension_numbers<[1], [0], [0], [1], [0, 0, 1, 1], [], []>} : vector<8x128xf32>, vector<128x384xf32>, vector<8x384xf32> -> vector<8x384xf32>
    %353 = vector.extract_strided_slice %350 {offsets = [0, 0], sizes = [8, 128], strides = [1, 1]} : vector<8x384xf32> to vector<8x128xf32>
    %354 = vector.extract_strided_slice %352 {offsets = [0, 0], sizes = [8, 128], strides = [1, 1]} : vector<8x384xf32> to vector<8x128xf32>
    %355 = arith.addf %353, %354 : vector<8x128xf32>
    %356 = arith.negf %355 : vector<8x128xf32>
    %357 = math.exp %356 : vector<8x128xf32>
    %cst_135 = arith.constant 1.000000e+00 : f32
    %358 = vector.broadcast %cst_135 : f32 to vector<8x128xf32>
    %359 = arith.addf %358, %357 : vector<8x128xf32>
    %360 = arith.divf %358, %359 : vector<8x128xf32>
    %361 = vector.extract_strided_slice %350 {offsets = [0, 128], sizes = [8, 128], strides = [1, 1]} : vector<8x384xf32> to vector<8x128xf32>
    %362 = vector.extract_strided_slice %352 {offsets = [0, 128], sizes = [8, 128], strides = [1, 1]} : vector<8x384xf32> to vector<8x128xf32>
    %363 = arith.addf %361, %362 : vector<8x128xf32>
    %364 = arith.negf %363 : vector<8x128xf32>
    %365 = math.exp %364 : vector<8x128xf32>
    %cst_136 = arith.constant 1.000000e+00 : f32
    %366 = vector.broadcast %cst_136 : f32 to vector<8x128xf32>
    %367 = arith.addf %366, %365 : vector<8x128xf32>
    %368 = arith.divf %366, %367 : vector<8x128xf32>
    %369 = vector.extract_strided_slice %350 {offsets = [0, 256], sizes = [8, 128], strides = [1, 1]} : vector<8x384xf32> to vector<8x128xf32>
    %370 = vector.extract_strided_slice %352 {offsets = [0, 256], sizes = [8, 128], strides = [1, 1]} : vector<8x384xf32> to vector<8x128xf32>
    %371 = vector.broadcast %334 : vector<1x128xf32> to vector<8x128xf32>
    %372 = arith.addf %370, %371 : vector<8x128xf32>
    %373 = arith.mulf %360, %372 : vector<8x128xf32>
    %374 = arith.addf %369, %373 : vector<8x128xf32>
    %375 = math.tanh %374 : vector<8x128xf32>
    %376 = arith.subf %335, %375 : vector<8x128xf32>
    %377 = arith.mulf %368, %376 : vector<8x128xf32>
    %378 = arith.addf %375, %377 : vector<8x128xf32>
    %c8_i32_137 = arith.constant 8 : i32
    %379 = arith.muli %c0_i32_121, %c8_i32_137 : i32
    %c0_i32_138 = arith.constant 0 : i32
    %380 = arith.addi %379, %c0_i32_138 : i32
    %c7_i32_139 = arith.constant 7 : i32
    %381 = arith.cmpi eq, %380, %c7_i32_139 : i32
    %382 = arith.extui %381 : i1 to i32
    %c0_i32_140 = arith.constant 0 : i32
    %383 = arith.cmpi ne, %382, %c0_i32_140 : i32
    scf.if %383 {
      %c0_235 = arith.constant 0 : index
      %c0_236 = arith.constant 0 : index
      %650 = vector.load %arg14[%c0_235, %c0_236] : memref<8x128xf32, #tpu.memory_space<vmem>>, vector<8x128xf32>
      tpu.vector_store %arg14[%c0_235, %c0_236], %378 {strides = array<i32>} : memref<8x128xf32, #tpu.memory_space<vmem>>, vector<8x128xf32>,
    } else {
    }
    %c1_i32_141 = arith.constant 1 : i32
    %384 = arith.addi %346, %c1_i32_141 : i32
    %385 = arith.index_cast %384 : i32 to index
    %c0_142 = arith.constant 0 : index
    %c0_143 = arith.constant 0 : index
    %386 = vector.load %arg12[%385, %c0_142, %c0_143] : memref<16x8x384xf32, #tpu.memory_space<vmem>>, vector<1x8x384xf32>
    %387 = vector.shape_cast %386 : vector<1x8x384xf32> to vector<8x384xf32>
    %c0_144 = arith.constant 0 : index
    %c0_145 = arith.constant 0 : index
    %388 = vector.load %arg6[%c0_144, %c0_145] : memref<128x384xf32, #tpu.memory_space<vmem>>, vector<128x384xf32>
    %cst_146 = arith.constant dense<0.000000e+00> : vector<8x384xf32>
    %389 = tpu.matmul %378, %388, %cst_146 {dimension_numbers = #tpu.dot_dimension_numbers<[1], [0], [0], [1], [0, 0, 1, 1], [], []>} : vector<8x128xf32>, vector<128x384xf32>, vector<8x384xf32> -> vector<8x384xf32>
    %390 = vector.extract_strided_slice %387 {offsets = [0, 0], sizes = [8, 128], strides = [1, 1]} : vector<8x384xf32> to vector<8x128xf32>
    %391 = vector.extract_strided_slice %389 {offsets = [0, 0], sizes = [8, 128], strides = [1, 1]} : vector<8x384xf32> to vector<8x128xf32>
    %392 = arith.addf %390, %391 : vector<8x128xf32>
    %393 = arith.negf %392 : vector<8x128xf32>
    %394 = math.exp %393 : vector<8x128xf32>
    %cst_147 = arith.constant 1.000000e+00 : f32
    %395 = vector.broadcast %cst_147 : f32 to vector<8x128xf32>
    %396 = arith.addf %395, %394 : vector<8x128xf32>
    %397 = arith.divf %395, %396 : vector<8x128xf32>
    %398 = vector.extract_strided_slice %387 {offsets = [0, 128], sizes = [8, 128], strides = [1, 1]} : vector<8x384xf32> to vector<8x128xf32>
    %399 = vector.extract_strided_slice %389 {offsets = [0, 128], sizes = [8, 128], strides = [1, 1]} : vector<8x384xf32> to vector<8x128xf32>
    %400 = arith.addf %398, %399 : vector<8x128xf32>
    %401 = arith.negf %400 : vector<8x128xf32>
    %402 = math.exp %401 : vector<8x128xf32>
    %cst_148 = arith.constant 1.000000e+00 : f32
    %403 = vector.broadcast %cst_148 : f32 to vector<8x128xf32>
    %404 = arith.addf %403, %402 : vector<8x128xf32>
    %405 = arith.divf %403, %404 : vector<8x128xf32>
    %406 = vector.extract_strided_slice %387 {offsets = [0, 256], sizes = [8, 128], strides = [1, 1]} : vector<8x384xf32> to vector<8x128xf32>
    %407 = vector.extract_strided_slice %389 {offsets = [0, 256], sizes = [8, 128], strides = [1, 1]} : vector<8x384xf32> to vector<8x128xf32>
    %408 = vector.broadcast %334 : vector<1x128xf32> to vector<8x128xf32>
    %409 = arith.addf %407, %408 : vector<8x128xf32>
    %410 = arith.mulf %397, %409 : vector<8x128xf32>
    %411 = arith.addf %406, %410 : vector<8x128xf32>
    %412 = math.tanh %411 : vector<8x128xf32>
    %413 = arith.subf %378, %412 : vector<8x128xf32>
    %414 = arith.mulf %405, %413 : vector<8x128xf32>
    %415 = arith.addf %412, %414 : vector<8x128xf32>
    %c8_i32_149 = arith.constant 8 : i32
    %416 = arith.muli %c0_i32_121, %c8_i32_149 : i32
    %c1_i32_150 = arith.constant 1 : i32
    %417 = arith.addi %416, %c1_i32_150 : i32
    %c7_i32_151 = arith.constant 7 : i32
    %418 = arith.cmpi eq, %417, %c7_i32_151 : i32
    %419 = arith.extui %418 : i1 to i32
    %c0_i32_152 = arith.constant 0 : i32
    %420 = arith.cmpi ne, %419, %c0_i32_152 : i32
    scf.if %420 {
      %c0_235 = arith.constant 0 : index
      %c0_236 = arith.constant 0 : index
      %650 = vector.load %arg14[%c0_235, %c0_236] : memref<8x128xf32, #tpu.memory_space<vmem>>, vector<8x128xf32>
      tpu.vector_store %arg14[%c0_235, %c0_236], %415 {strides = array<i32>} : memref<8x128xf32, #tpu.memory_space<vmem>>, vector<8x128xf32>,
    } else {
    }
    %c2_i32_153 = arith.constant 2 : i32
    %421 = arith.addi %346, %c2_i32_153 : i32
    %422 = arith.index_cast %421 : i32 to index
    %c0_154 = arith.constant 0 : index
    %c0_155 = arith.constant 0 : index
    %423 = vector.load %arg12[%422, %c0_154, %c0_155] : memref<16x8x384xf32, #tpu.memory_space<vmem>>, vector<1x8x384xf32>
    %424 = vector.shape_cast %423 : vector<1x8x384xf32> to vector<8x384xf32>
    %c0_156 = arith.constant 0 : index
    %c0_157 = arith.constant 0 : index
    %425 = vector.load %arg6[%c0_156, %c0_157] : memref<128x384xf32, #tpu.memory_space<vmem>>, vector<128x384xf32>
    %cst_158 = arith.constant dense<0.000000e+00> : vector<8x384xf32>
    %426 = tpu.matmul %415, %425, %cst_158 {dimension_numbers = #tpu.dot_dimension_numbers<[1], [0], [0], [1], [0, 0, 1, 1], [], []>} : vector<8x128xf32>, vector<128x384xf32>, vector<8x384xf32> -> vector<8x384xf32>
    %427 = vector.extract_strided_slice %424 {offsets = [0, 0], sizes = [8, 128], strides = [1, 1]} : vector<8x384xf32> to vector<8x128xf32>
    %428 = vector.extract_strided_slice %426 {offsets = [0, 0], sizes = [8, 128], strides = [1, 1]} : vector<8x384xf32> to vector<8x128xf32>
    %429 = arith.addf %427, %428 : vector<8x128xf32>
    %430 = arith.negf %429 : vector<8x128xf32>
    %431 = math.exp %430 : vector<8x128xf32>
    %cst_159 = arith.constant 1.000000e+00 : f32
    %432 = vector.broadcast %cst_159 : f32 to vector<8x128xf32>
    %433 = arith.addf %432, %431 : vector<8x128xf32>
    %434 = arith.divf %432, %433 : vector<8x128xf32>
    %435 = vector.extract_strided_slice %424 {offsets = [0, 128], sizes = [8, 128], strides = [1, 1]} : vector<8x384xf32> to vector<8x128xf32>
    %436 = vector.extract_strided_slice %426 {offsets = [0, 128], sizes = [8, 128], strides = [1, 1]} : vector<8x384xf32> to vector<8x128xf32>
    %437 = arith.addf %435, %436 : vector<8x128xf32>
    %438 = arith.negf %437 : vector<8x128xf32>
    %439 = math.exp %438 : vector<8x128xf32>
    %cst_160 = arith.constant 1.000000e+00 : f32
    %440 = vector.broadcast %cst_160 : f32 to vector<8x128xf32>
    %441 = arith.addf %440, %439 : vector<8x128xf32>
    %442 = arith.divf %440, %441 : vector<8x128xf32>
    %443 = vector.extract_strided_slice %424 {offsets = [0, 256], sizes = [8, 128], strides = [1, 1]} : vector<8x384xf32> to vector<8x128xf32>
    %444 = vector.extract_strided_slice %426 {offsets = [0, 256], sizes = [8, 128], strides = [1, 1]} : vector<8x384xf32> to vector<8x128xf32>
    %445 = vector.broadcast %334 : vector<1x128xf32> to vector<8x128xf32>
    %446 = arith.addf %444, %445 : vector<8x128xf32>
    %447 = arith.mulf %434, %446 : vector<8x128xf32>
    %448 = arith.addf %443, %447 : vector<8x128xf32>
    %449 = math.tanh %448 : vector<8x128xf32>
    %450 = arith.subf %415, %449 : vector<8x128xf32>
    %451 = arith.mulf %442, %450 : vector<8x128xf32>
    %452 = arith.addf %449, %451 : vector<8x128xf32>
    %c8_i32_161 = arith.constant 8 : i32
    %453 = arith.muli %c0_i32_121, %c8_i32_161 : i32
    %c2_i32_162 = arith.constant 2 : i32
    %454 = arith.addi %453, %c2_i32_162 : i32
    %c7_i32_163 = arith.constant 7 : i32
    %455 = arith.cmpi eq, %454, %c7_i32_163 : i32
    %456 = arith.extui %455 : i1 to i32
    %c0_i32_164 = arith.constant 0 : i32
    %457 = arith.cmpi ne, %456, %c0_i32_164 : i32
    scf.if %457 {
      %c0_235 = arith.constant 0 : index
      %c0_236 = arith.constant 0 : index
      %650 = vector.load %arg14[%c0_235, %c0_236] : memref<8x128xf32, #tpu.memory_space<vmem>>, vector<8x128xf32>
      tpu.vector_store %arg14[%c0_235, %c0_236], %452 {strides = array<i32>} : memref<8x128xf32, #tpu.memory_space<vmem>>, vector<8x128xf32>,
    } else {
    }
    %c3_i32_165 = arith.constant 3 : i32
    %458 = arith.addi %346, %c3_i32_165 : i32
    %459 = arith.index_cast %458 : i32 to index
    %c0_166 = arith.constant 0 : index
    %c0_167 = arith.constant 0 : index
    %460 = vector.load %arg12[%459, %c0_166, %c0_167] : memref<16x8x384xf32, #tpu.memory_space<vmem>>, vector<1x8x384xf32>
    %461 = vector.shape_cast %460 : vector<1x8x384xf32> to vector<8x384xf32>
    %c0_168 = arith.constant 0 : index
    %c0_169 = arith.constant 0 : index
    %462 = vector.load %arg6[%c0_168, %c0_169] : memref<128x384xf32, #tpu.memory_space<vmem>>, vector<128x384xf32>
    %cst_170 = arith.constant dense<0.000000e+00> : vector<8x384xf32>
    %463 = tpu.matmul %452, %462, %cst_170 {dimension_numbers = #tpu.dot_dimension_numbers<[1], [0], [0], [1], [0, 0, 1, 1], [], []>} : vector<8x128xf32>, vector<128x384xf32>, vector<8x384xf32> -> vector<8x384xf32>
    %464 = vector.extract_strided_slice %461 {offsets = [0, 0], sizes = [8, 128], strides = [1, 1]} : vector<8x384xf32> to vector<8x128xf32>
    %465 = vector.extract_strided_slice %463 {offsets = [0, 0], sizes = [8, 128], strides = [1, 1]} : vector<8x384xf32> to vector<8x128xf32>
    %466 = arith.addf %464, %465 : vector<8x128xf32>
    %467 = arith.negf %466 : vector<8x128xf32>
    %468 = math.exp %467 : vector<8x128xf32>
    %cst_171 = arith.constant 1.000000e+00 : f32
    %469 = vector.broadcast %cst_171 : f32 to vector<8x128xf32>
    %470 = arith.addf %469, %468 : vector<8x128xf32>
    %471 = arith.divf %469, %470 : vector<8x128xf32>
    %472 = vector.extract_strided_slice %461 {offsets = [0, 128], sizes = [8, 128], strides = [1, 1]} : vector<8x384xf32> to vector<8x128xf32>
    %473 = vector.extract_strided_slice %463 {offsets = [0, 128], sizes = [8, 128], strides = [1, 1]} : vector<8x384xf32> to vector<8x128xf32>
    %474 = arith.addf %472, %473 : vector<8x128xf32>
    %475 = arith.negf %474 : vector<8x128xf32>
    %476 = math.exp %475 : vector<8x128xf32>
    %cst_172 = arith.constant 1.000000e+00 : f32
    %477 = vector.broadcast %cst_172 : f32 to vector<8x128xf32>
    %478 = arith.addf %477, %476 : vector<8x128xf32>
    %479 = arith.divf %477, %478 : vector<8x128xf32>
    %480 = vector.extract_strided_slice %461 {offsets = [0, 256], sizes = [8, 128], strides = [1, 1]} : vector<8x384xf32> to vector<8x128xf32>
    %481 = vector.extract_strided_slice %463 {offsets = [0, 256], sizes = [8, 128], strides = [1, 1]} : vector<8x384xf32> to vector<8x128xf32>
    %482 = vector.broadcast %334 : vector<1x128xf32> to vector<8x128xf32>
    %483 = arith.addf %481, %482 : vector<8x128xf32>
    %484 = arith.mulf %471, %483 : vector<8x128xf32>
    %485 = arith.addf %480, %484 : vector<8x128xf32>
    %486 = math.tanh %485 : vector<8x128xf32>
    %487 = arith.subf %452, %486 : vector<8x128xf32>
    %488 = arith.mulf %479, %487 : vector<8x128xf32>
    %489 = arith.addf %486, %488 : vector<8x128xf32>
    %c8_i32_173 = arith.constant 8 : i32
    %490 = arith.muli %c0_i32_121, %c8_i32_173 : i32
    %c3_i32_174 = arith.constant 3 : i32
    %491 = arith.addi %490, %c3_i32_174 : i32
    %c7_i32_175 = arith.constant 7 : i32
    %492 = arith.cmpi eq, %491, %c7_i32_175 : i32
    %493 = arith.extui %492 : i1 to i32
    %c0_i32_176 = arith.constant 0 : i32
    %494 = arith.cmpi ne, %493, %c0_i32_176 : i32
    scf.if %494 {
      %c0_235 = arith.constant 0 : index
      %c0_236 = arith.constant 0 : index
      %650 = vector.load %arg14[%c0_235, %c0_236] : memref<8x128xf32, #tpu.memory_space<vmem>>, vector<8x128xf32>
      tpu.vector_store %arg14[%c0_235, %c0_236], %489 {strides = array<i32>} : memref<8x128xf32, #tpu.memory_space<vmem>>, vector<8x128xf32>,
    } else {
    }
    %c4_i32_177 = arith.constant 4 : i32
    %495 = arith.addi %346, %c4_i32_177 : i32
    %496 = arith.index_cast %495 : i32 to index
    %c0_178 = arith.constant 0 : index
    %c0_179 = arith.constant 0 : index
    %497 = vector.load %arg12[%496, %c0_178, %c0_179] : memref<16x8x384xf32, #tpu.memory_space<vmem>>, vector<1x8x384xf32>
    %498 = vector.shape_cast %497 : vector<1x8x384xf32> to vector<8x384xf32>
    %c0_180 = arith.constant 0 : index
    %c0_181 = arith.constant 0 : index
    %499 = vector.load %arg6[%c0_180, %c0_181] : memref<128x384xf32, #tpu.memory_space<vmem>>, vector<128x384xf32>
    %cst_182 = arith.constant dense<0.000000e+00> : vector<8x384xf32>
    %500 = tpu.matmul %489, %499, %cst_182 {dimension_numbers = #tpu.dot_dimension_numbers<[1], [0], [0], [1], [0, 0, 1, 1], [], []>} : vector<8x128xf32>, vector<128x384xf32>, vector<8x384xf32> -> vector<8x384xf32>
    %501 = vector.extract_strided_slice %498 {offsets = [0, 0], sizes = [8, 128], strides = [1, 1]} : vector<8x384xf32> to vector<8x128xf32>
    %502 = vector.extract_strided_slice %500 {offsets = [0, 0], sizes = [8, 128], strides = [1, 1]} : vector<8x384xf32> to vector<8x128xf32>
    %503 = arith.addf %501, %502 : vector<8x128xf32>
    %504 = arith.negf %503 : vector<8x128xf32>
    %505 = math.exp %504 : vector<8x128xf32>
    %cst_183 = arith.constant 1.000000e+00 : f32
    %506 = vector.broadcast %cst_183 : f32 to vector<8x128xf32>
    %507 = arith.addf %506, %505 : vector<8x128xf32>
    %508 = arith.divf %506, %507 : vector<8x128xf32>
    %509 = vector.extract_strided_slice %498 {offsets = [0, 128], sizes = [8, 128], strides = [1, 1]} : vector<8x384xf32> to vector<8x128xf32>
    %510 = vector.extract_strided_slice %500 {offsets = [0, 128], sizes = [8, 128], strides = [1, 1]} : vector<8x384xf32> to vector<8x128xf32>
    %511 = arith.addf %509, %510 : vector<8x128xf32>
    %512 = arith.negf %511 : vector<8x128xf32>
    %513 = math.exp %512 : vector<8x128xf32>
    %cst_184 = arith.constant 1.000000e+00 : f32
    %514 = vector.broadcast %cst_184 : f32 to vector<8x128xf32>
    %515 = arith.addf %514, %513 : vector<8x128xf32>
    %516 = arith.divf %514, %515 : vector<8x128xf32>
    %517 = vector.extract_strided_slice %498 {offsets = [0, 256], sizes = [8, 128], strides = [1, 1]} : vector<8x384xf32> to vector<8x128xf32>
    %518 = vector.extract_strided_slice %500 {offsets = [0, 256], sizes = [8, 128], strides = [1, 1]} : vector<8x384xf32> to vector<8x128xf32>
    %519 = vector.broadcast %334 : vector<1x128xf32> to vector<8x128xf32>
    %520 = arith.addf %518, %519 : vector<8x128xf32>
    %521 = arith.mulf %508, %520 : vector<8x128xf32>
    %522 = arith.addf %517, %521 : vector<8x128xf32>
    %523 = math.tanh %522 : vector<8x128xf32>
    %524 = arith.subf %489, %523 : vector<8x128xf32>
    %525 = arith.mulf %516, %524 : vector<8x128xf32>
    %526 = arith.addf %523, %525 : vector<8x128xf32>
    %c8_i32_185 = arith.constant 8 : i32
    %527 = arith.muli %c0_i32_121, %c8_i32_185 : i32
    %c4_i32_186 = arith.constant 4 : i32
    %528 = arith.addi %527, %c4_i32_186 : i32
    %c7_i32_187 = arith.constant 7 : i32
    %529 = arith.cmpi eq, %528, %c7_i32_187 : i32
    %530 = arith.extui %529 : i1 to i32
    %c0_i32_188 = arith.constant 0 : i32
    %531 = arith.cmpi ne, %530, %c0_i32_188 : i32
    scf.if %531 {
      %c0_235 = arith.constant 0 : index
      %c0_236 = arith.constant 0 : index
      %650 = vector.load %arg14[%c0_235, %c0_236] : memref<8x128xf32, #tpu.memory_space<vmem>>, vector<8x128xf32>
      tpu.vector_store %arg14[%c0_235, %c0_236], %526 {strides = array<i32>} : memref<8x128xf32, #tpu.memory_space<vmem>>, vector<8x128xf32>,
    } else {
    }
    %c5_i32_189 = arith.constant 5 : i32
    %532 = arith.addi %346, %c5_i32_189 : i32
    %533 = arith.index_cast %532 : i32 to index
    %c0_190 = arith.constant 0 : index
    %c0_191 = arith.constant 0 : index
    %534 = vector.load %arg12[%533, %c0_190, %c0_191] : memref<16x8x384xf32, #tpu.memory_space<vmem>>, vector<1x8x384xf32>
    %535 = vector.shape_cast %534 : vector<1x8x384xf32> to vector<8x384xf32>
    %c0_192 = arith.constant 0 : index
    %c0_193 = arith.constant 0 : index
    %536 = vector.load %arg6[%c0_192, %c0_193] : memref<128x384xf32, #tpu.memory_space<vmem>>, vector<128x384xf32>
    %cst_194 = arith.constant dense<0.000000e+00> : vector<8x384xf32>
    %537 = tpu.matmul %526, %536, %cst_194 {dimension_numbers = #tpu.dot_dimension_numbers<[1], [0], [0], [1], [0, 0, 1, 1], [], []>} : vector<8x128xf32>, vector<128x384xf32>, vector<8x384xf32> -> vector<8x384xf32>
    %538 = vector.extract_strided_slice %535 {offsets = [0, 0], sizes = [8, 128], strides = [1, 1]} : vector<8x384xf32> to vector<8x128xf32>
    %539 = vector.extract_strided_slice %537 {offsets = [0, 0], sizes = [8, 128], strides = [1, 1]} : vector<8x384xf32> to vector<8x128xf32>
    %540 = arith.addf %538, %539 : vector<8x128xf32>
    %541 = arith.negf %540 : vector<8x128xf32>
    %542 = math.exp %541 : vector<8x128xf32>
    %cst_195 = arith.constant 1.000000e+00 : f32
    %543 = vector.broadcast %cst_195 : f32 to vector<8x128xf32>
    %544 = arith.addf %543, %542 : vector<8x128xf32>
    %545 = arith.divf %543, %544 : vector<8x128xf32>
    %546 = vector.extract_strided_slice %535 {offsets = [0, 128], sizes = [8, 128], strides = [1, 1]} : vector<8x384xf32> to vector<8x128xf32>
    %547 = vector.extract_strided_slice %537 {offsets = [0, 128], sizes = [8, 128], strides = [1, 1]} : vector<8x384xf32> to vector<8x128xf32>
    %548 = arith.addf %546, %547 : vector<8x128xf32>
    %549 = arith.negf %548 : vector<8x128xf32>
    %550 = math.exp %549 : vector<8x128xf32>
    %cst_196 = arith.constant 1.000000e+00 : f32
    %551 = vector.broadcast %cst_196 : f32 to vector<8x128xf32>
    %552 = arith.addf %551, %550 : vector<8x128xf32>
    %553 = arith.divf %551, %552 : vector<8x128xf32>
    %554 = vector.extract_strided_slice %535 {offsets = [0, 256], sizes = [8, 128], strides = [1, 1]} : vector<8x384xf32> to vector<8x128xf32>
    %555 = vector.extract_strided_slice %537 {offsets = [0, 256], sizes = [8, 128], strides = [1, 1]} : vector<8x384xf32> to vector<8x128xf32>
    %556 = vector.broadcast %334 : vector<1x128xf32> to vector<8x128xf32>
    %557 = arith.addf %555, %556 : vector<8x128xf32>
    %558 = arith.mulf %545, %557 : vector<8x128xf32>
    %559 = arith.addf %554, %558 : vector<8x128xf32>
    %560 = math.tanh %559 : vector<8x128xf32>
    %561 = arith.subf %526, %560 : vector<8x128xf32>
    %562 = arith.mulf %553, %561 : vector<8x128xf32>
    %563 = arith.addf %560, %562 : vector<8x128xf32>
    %c8_i32_197 = arith.constant 8 : i32
    %564 = arith.muli %c0_i32_121, %c8_i32_197 : i32
    %c5_i32_198 = arith.constant 5 : i32
    %565 = arith.addi %564, %c5_i32_198 : i32
    %c7_i32_199 = arith.constant 7 : i32
    %566 = arith.cmpi eq, %565, %c7_i32_199 : i32
    %567 = arith.extui %566 : i1 to i32
    %c0_i32_200 = arith.constant 0 : i32
    %568 = arith.cmpi ne, %567, %c0_i32_200 : i32
    scf.if %568 {
      %c0_235 = arith.constant 0 : index
      %c0_236 = arith.constant 0 : index
      %650 = vector.load %arg14[%c0_235, %c0_236] : memref<8x128xf32, #tpu.memory_space<vmem>>, vector<8x128xf32>
      tpu.vector_store %arg14[%c0_235, %c0_236], %563 {strides = array<i32>} : memref<8x128xf32, #tpu.memory_space<vmem>>, vector<8x128xf32>,
    } else {
    }
    %c6_i32_201 = arith.constant 6 : i32
    %569 = arith.addi %346, %c6_i32_201 : i32
    %570 = arith.index_cast %569 : i32 to index
    %c0_202 = arith.constant 0 : index
    %c0_203 = arith.constant 0 : index
    %571 = vector.load %arg12[%570, %c0_202, %c0_203] : memref<16x8x384xf32, #tpu.memory_space<vmem>>, vector<1x8x384xf32>
    %572 = vector.shape_cast %571 : vector<1x8x384xf32> to vector<8x384xf32>
    %c0_204 = arith.constant 0 : index
    %c0_205 = arith.constant 0 : index
    %573 = vector.load %arg6[%c0_204, %c0_205] : memref<128x384xf32, #tpu.memory_space<vmem>>, vector<128x384xf32>
    %cst_206 = arith.constant dense<0.000000e+00> : vector<8x384xf32>
    %574 = tpu.matmul %563, %573, %cst_206 {dimension_numbers = #tpu.dot_dimension_numbers<[1], [0], [0], [1], [0, 0, 1, 1], [], []>} : vector<8x128xf32>, vector<128x384xf32>, vector<8x384xf32> -> vector<8x384xf32>
    %575 = vector.extract_strided_slice %572 {offsets = [0, 0], sizes = [8, 128], strides = [1, 1]} : vector<8x384xf32> to vector<8x128xf32>
    %576 = vector.extract_strided_slice %574 {offsets = [0, 0], sizes = [8, 128], strides = [1, 1]} : vector<8x384xf32> to vector<8x128xf32>
    %577 = arith.addf %575, %576 : vector<8x128xf32>
    %578 = arith.negf %577 : vector<8x128xf32>
    %579 = math.exp %578 : vector<8x128xf32>
    %cst_207 = arith.constant 1.000000e+00 : f32
    %580 = vector.broadcast %cst_207 : f32 to vector<8x128xf32>
    %581 = arith.addf %580, %579 : vector<8x128xf32>
    %582 = arith.divf %580, %581 : vector<8x128xf32>
    %583 = vector.extract_strided_slice %572 {offsets = [0, 128], sizes = [8, 128], strides = [1, 1]} : vector<8x384xf32> to vector<8x128xf32>
    %584 = vector.extract_strided_slice %574 {offsets = [0, 128], sizes = [8, 128], strides = [1, 1]} : vector<8x384xf32> to vector<8x128xf32>
    %585 = arith.addf %583, %584 : vector<8x128xf32>
    %586 = arith.negf %585 : vector<8x128xf32>
    %587 = math.exp %586 : vector<8x128xf32>
    %cst_208 = arith.constant 1.000000e+00 : f32
    %588 = vector.broadcast %cst_208 : f32 to vector<8x128xf32>
    %589 = arith.addf %588, %587 : vector<8x128xf32>
    %590 = arith.divf %588, %589 : vector<8x128xf32>
    %591 = vector.extract_strided_slice %572 {offsets = [0, 256], sizes = [8, 128], strides = [1, 1]} : vector<8x384xf32> to vector<8x128xf32>
    %592 = vector.extract_strided_slice %574 {offsets = [0, 256], sizes = [8, 128], strides = [1, 1]} : vector<8x384xf32> to vector<8x128xf32>
    %593 = vector.broadcast %334 : vector<1x128xf32> to vector<8x128xf32>
    %594 = arith.addf %592, %593 : vector<8x128xf32>
    %595 = arith.mulf %582, %594 : vector<8x128xf32>
    %596 = arith.addf %591, %595 : vector<8x128xf32>
    %597 = math.tanh %596 : vector<8x128xf32>
    %598 = arith.subf %563, %597 : vector<8x128xf32>
    %599 = arith.mulf %590, %598 : vector<8x128xf32>
    %600 = arith.addf %597, %599 : vector<8x128xf32>
    %c8_i32_209 = arith.constant 8 : i32
    %601 = arith.muli %c0_i32_121, %c8_i32_209 : i32
    %c6_i32_210 = arith.constant 6 : i32
    %602 = arith.addi %601, %c6_i32_210 : i32
    %c7_i32_211 = arith.constant 7 : i32
    %603 = arith.cmpi eq, %602, %c7_i32_211 : i32
    %604 = arith.extui %603 : i1 to i32
    %c0_i32_212 = arith.constant 0 : i32
    %605 = arith.cmpi ne, %604, %c0_i32_212 : i32
    scf.if %605 {
      %c0_235 = arith.constant 0 : index
      %c0_236 = arith.constant 0 : index
      %650 = vector.load %arg14[%c0_235, %c0_236] : memref<8x128xf32, #tpu.memory_space<vmem>>, vector<8x128xf32>
      tpu.vector_store %arg14[%c0_235, %c0_236], %600 {strides = array<i32>} : memref<8x128xf32, #tpu.memory_space<vmem>>, vector<8x128xf32>,
    } else {
    }
    %c7_i32_213 = arith.constant 7 : i32
    %606 = arith.addi %346, %c7_i32_213 : i32
    %607 = arith.index_cast %606 : i32 to index
    %c0_214 = arith.constant 0 : index
    %c0_215 = arith.constant 0 : index
    %608 = vector.load %arg12[%607, %c0_214, %c0_215] : memref<16x8x384xf32, #tpu.memory_space<vmem>>, vector<1x8x384xf32>
    %609 = vector.shape_cast %608 : vector<1x8x384xf32> to vector<8x384xf32>
    %c0_216 = arith.constant 0 : index
    %c0_217 = arith.constant 0 : index
    %610 = vector.load %arg6[%c0_216, %c0_217] : memref<128x384xf32, #tpu.memory_space<vmem>>, vector<128x384xf32>
    %cst_218 = arith.constant dense<0.000000e+00> : vector<8x384xf32>
    %611 = tpu.matmul %600, %610, %cst_218 {dimension_numbers = #tpu.dot_dimension_numbers<[1], [0], [0], [1], [0, 0, 1, 1], [], []>} : vector<8x128xf32>, vector<128x384xf32>, vector<8x384xf32> -> vector<8x384xf32>
    %612 = vector.extract_strided_slice %609 {offsets = [0, 0], sizes = [8, 128], strides = [1, 1]} : vector<8x384xf32> to vector<8x128xf32>
    %613 = vector.extract_strided_slice %611 {offsets = [0, 0], sizes = [8, 128], strides = [1, 1]} : vector<8x384xf32> to vector<8x128xf32>
    %614 = arith.addf %612, %613 : vector<8x128xf32>
    %615 = arith.negf %614 : vector<8x128xf32>
    %616 = math.exp %615 : vector<8x128xf32>
    %cst_219 = arith.constant 1.000000e+00 : f32
    %617 = vector.broadcast %cst_219 : f32 to vector<8x128xf32>
    %618 = arith.addf %617, %616 : vector<8x128xf32>
    %619 = arith.divf %617, %618 : vector<8x128xf32>
    %620 = vector.extract_strided_slice %609 {offsets = [0, 128], sizes = [8, 128], strides = [1, 1]} : vector<8x384xf32> to vector<8x128xf32>
    %621 = vector.extract_strided_slice %611 {offsets = [0, 128], sizes = [8, 128], strides = [1, 1]} : vector<8x384xf32> to vector<8x128xf32>
    %622 = arith.addf %620, %621 : vector<8x128xf32>
    %623 = arith.negf %622 : vector<8x128xf32>
    %624 = math.exp %623 : vector<8x128xf32>
    %cst_220 = arith.constant 1.000000e+00 : f32
    %625 = vector.broadcast %cst_220 : f32 to vector<8x128xf32>
    %626 = arith.addf %625, %624 : vector<8x128xf32>
    %627 = arith.divf %625, %626 : vector<8x128xf32>
    %628 = vector.extract_strided_slice %609 {offsets = [0, 256], sizes = [8, 128], strides = [1, 1]} : vector<8x384xf32> to vector<8x128xf32>
    %629 = vector.extract_strided_slice %611 {offsets = [0, 256], sizes = [8, 128], strides = [1, 1]} : vector<8x384xf32> to vector<8x128xf32>
    %630 = vector.broadcast %334 : vector<1x128xf32> to vector<8x128xf32>
    %631 = arith.addf %629, %630 : vector<8x128xf32>
    %632 = arith.mulf %619, %631 : vector<8x128xf32>
    %633 = arith.addf %628, %632 : vector<8x128xf32>
    %634 = math.tanh %633 : vector<8x128xf32>
    %635 = arith.subf %600, %634 : vector<8x128xf32>
    %636 = arith.mulf %627, %635 : vector<8x128xf32>
    %637 = arith.addf %634, %636 : vector<8x128xf32>
    %c8_i32_221 = arith.constant 8 : i32
    %638 = arith.muli %c0_i32_121, %c8_i32_221 : i32
    %c7_i32_222 = arith.constant 7 : i32
    %639 = arith.addi %638, %c7_i32_222 : i32
    %c7_i32_223 = arith.constant 7 : i32
    %640 = arith.cmpi eq, %639, %c7_i32_223 : i32
    %641 = arith.extui %640 : i1 to i32
    %c0_i32_224 = arith.constant 0 : i32
    %642 = arith.cmpi ne, %641, %c0_i32_224 : i32
    scf.if %642 {
      %c0_235 = arith.constant 0 : index
      %c0_236 = arith.constant 0 : index
      %650 = vector.load %arg14[%c0_235, %c0_236] : memref<8x128xf32, #tpu.memory_space<vmem>>, vector<8x128xf32>
      tpu.vector_store %arg14[%c0_235, %c0_236], %637 {strides = array<i32>} : memref<8x128xf32, #tpu.memory_space<vmem>>, vector<8x128xf32>,
    } else {
    }
    %c1_i32_225 = arith.constant 1 : i32
    %c0_226 = arith.constant 0 : index
    %c0_227 = arith.constant 0 : index
    %643 = vector.load %arg14[%c0_226, %c0_227] : memref<8x128xf32, #tpu.memory_space<vmem>>, vector<8x128xf32>
    %c0_228 = arith.constant 0 : index
    %c0_229 = arith.constant 0 : index
    %644 = vector.load %arg9[%c0_228, %c0_229] : memref<128x1xf32, #tpu.memory_space<vmem>>, vector<128x1xf32>
    %cst_230 = arith.constant dense<0.000000e+00> : vector<8x1xf32>
    %645 = tpu.matmul %643, %644, %cst_230 {dimension_numbers = #tpu.dot_dimension_numbers<[1], [0], [0], [1], [0, 0, 1, 1], [], []>} : vector<8x128xf32>, vector<128x1xf32>, vector<8x1xf32> -> vector<8x1xf32>
    %c0_231 = arith.constant 0 : index
    %c0_232 = arith.constant 0 : index
    %646 = vector.load %arg10[%c0_231, %c0_232] : memref<1x1xf32, #tpu.memory_space<vmem>>, vector<1x1xf32>
    %647 = vector.broadcast %646 : vector<1x1xf32> to vector<8x1xf32>
    %648 = arith.addf %645, %647 : vector<8x1xf32>
    %c0_233 = arith.constant 0 : index
    %c0_234 = arith.constant 0 : index
    %649 = vector.load %arg11[%c0_233, %c0_234] : memref<8x1xf32, #tpu.memory_space<vmem>>, vector<8x1xf32>
    tpu.vector_store %arg11[%c0_233, %c0_234], %648 {strides = array<i32>} : memref<8x1xf32, #tpu.memory_space<vmem>>, vector<8x1xf32>,
    return
  }
}

</mosaic_0001>

<llo_original>
// kernel: tpu_custom_call.1
$region0: #{tpu_custom_call.1}
  #allocation0 [shape = 'u32[]', space=smem, size = 0x4, offset = 0x4, fixed_abs, tag = 'smem constant byte address 0x4 - core index']
  #allocation1 [shape = 'u32[144,128]{1,0:T(1,128)}', space=vmem, size = 0x12000, scoped, tag = 'internal scratch']
  #allocation2 [shape = 'f32[16,8,384]{2,1,0:T(8,128)}', space=vmem, size = 0x30000, scoped, tag = 'scratch operand']
  #allocation3 [shape = 'f32[8,8,128]{2,1,0:T(8,128)}', space=vmem, size = 0x8000, scoped, tag = 'scratch operand']
  #allocation4 [shape = 'f32[8,128]{1,0:T(8,128)}', space=vmem, size = 0x1000, scoped, tag = 'scratch operand']
  #allocation5 [shape = 'f32[1,1]{1,0:T(1,128)S(1)}', space=vmem, size = 0x200, scoped, tag = 'scoped memory for tpu_custom_call.1']
  %s0 = inlined_call_operand.vmem [shape: f32[64,4], index: 0, kind: input, shape index: {}]
  %s1 = inlined_call_operand.vmem [shape: f32[4,384], index: 1, kind: input, shape index: {}]
  %s2 = inlined_call_operand.hbm [shape: f32[128,384], index: 2, kind: input, shape index: {}]
  %s3 = inlined_call_operand.vmem [shape: f32[1,384], index: 3, kind: input, shape index: {}]
  %s4 = inlined_call_operand.vmem [shape: f32[1,128], index: 4, kind: input, shape index: {}]
  %s5 = inlined_call_operand.hbm [shape: f32[128,384], index: 5, kind: input, shape index: {}]
  %s6 = inlined_call_operand.hbm [shape: f32[128,384], index: 6, kind: input, shape index: {}]
  %s7 = inlined_call_operand.vmem [shape: f32[1,384], index: 7, kind: input, shape index: {}]
  %s8 = inlined_call_operand.vmem [shape: f32[1,128], index: 8, kind: input, shape index: {}]
  %s9 = inlined_call_operand.vmem [shape: f32[128,1], index: 9, kind: input, shape index: {}]
  %s10 = inlined_call_operand.<no memory space> [shape: f32[1,1], index: 10, kind: input, shape index: {}]
  %s11 = inlined_call_operand.vmem [shape: f32[8,1], index: 11, kind: output, shape index: {}]
  %s12 = sld [smem:[#allocation0]]
  $region66: #{tpu_custom_call.1} parent=0
    _
  %s14 = ssub.s32 1, %s12
  %s15 = scalar_select 0, %s14, %s12
  %v16 = vstv %s10
  %17 = vst [vmem:[#allocation5] sm:$0x1] %v16
  $region1: #{tpu_custom_call.1} parent=0
    #allocation6 [shape = 'u8[196608]{0}', space=vmem, size = 0x30000, scoped, tag = 'input window, operand 2, single buffered']
    #allocation7 [shape = 's32[1]{0}', space=sflag, size = 0x4, scoped, tag = 'scoped memory for tpu_custom_call.1']
    #allocation8 [shape = 'u8[196608]{0}', space=vmem, size = 0x30000, scoped, tag = 'input window, operand 5, single buffered']
    #allocation9 [shape = 's32[1]{0}', space=sflag, size = 0x4, scoped, tag = 'scoped memory for tpu_custom_call.1']
    #allocation10 [shape = 'u8[196608]{0}', space=vmem, size = 0x30000, scoped, tag = 'input window, operand 6, single buffered']
    %18 = vsyncpa [#allocation7], 0
    %19 = vsyncpa [#allocation9], 0
    // Predicated region
    $region2: #{tpu_custom_call.1} parent=1 // pred_check
      _
    $region3: #{tpu_custom_call.1} parent=1 // pred_check_branch
      %21 = sbr.rel (0) target = $region5
    $region4: #{tpu_custom_call.1} parent=1 // pred_region
      _
    $region5: #{tpu_custom_call.1} parent=1 // pred_fallthru
      _
    // Predicated region
    $region6: #{tpu_custom_call.1} parent=1 // pred_check
      _
    $region7: #{tpu_custom_call.1} parent=1 // pred_check_branch
      %23 = sbr.rel (0) target = $region9
    $region8: #{tpu_custom_call.1} parent=1 // pred_region
      _
    $region9: #{tpu_custom_call.1} parent=1 // pred_fallthru
      _
    // Predicated region
    $region10: #{tpu_custom_call.1} parent=1 // pred_check
      _
    $region11: #{tpu_custom_call.1} parent=1 // pred_check_branch
      %25 = sbr.rel (0) target = $region13
    $region12: #{tpu_custom_call.1} parent=1 // pred_region
      %s27 = ssub.s32 6144, 6144
      %28 = vsyncadd [#allocation7], %s27
      %s29 = sshll.u32 [#allocation6], 4
      %s30 = int_to_ptr.vmem [resolvable:$true] %s29
      %35 = dma.hbm_to_vmem [thread:$0]  %s2, 6144, %s30, [#allocation7], 384, 384, 24
    $region13: #{tpu_custom_call.1} parent=1 // pred_fallthru
      _
    // Predicated region
    $region14: #{tpu_custom_call.1} parent=1 // pred_check
      _
    $region15: #{tpu_custom_call.1} parent=1 // pred_check_branch
      %37 = sbr.rel (0) target = $region17
    $region16: #{tpu_custom_call.1} parent=1 // pred_region
      _
    $region17: #{tpu_custom_call.1} parent=1 // pred_fallthru
      _
    // Predicated region
    $region18: #{tpu_custom_call.1} parent=1 // pred_check
      _
    $region19: #{tpu_custom_call.1} parent=1 // pred_check_branch
      %39 = sbr.rel (0) target = $region21
    $region20: #{tpu_custom_call.1} parent=1 // pred_region
      _
    $region21: #{tpu_custom_call.1} parent=1 // pred_fallthru
      _
    // Predicated region
    $region22: #{tpu_custom_call.1} parent=1 // pred_check
      _
    $region23: #{tpu_custom_call.1} parent=1 // pred_check_branch
      %41 = sbr.rel (0) target = $region25
    $region24: #{tpu_custom_call.1} parent=1 // pred_region
      %s43 = ssub.s32 6144, 6144
      %44 = vsyncadd [#allocation9], %s43
      %s45 = sshll.u32 [#allocation8], 4
      %s46 = int_to_ptr.vmem [resolvable:$true] %s45
      %51 = dma.hbm_to_vmem [thread:$0]  %s5, 6144, %s46, [#allocation9], 384, 384, 24
    $region25: #{tpu_custom_call.1} parent=1 // pred_fallthru
      _
    // Predicated region
    $region26: #{tpu_custom_call.1} parent=1 // pred_check
      _
    $region27: #{tpu_custom_call.1} parent=1 // pred_check_branch
      %53 = sbr.rel (0) target = $region29
    $region28: #{tpu_custom_call.1} parent=1 // pred_region
      %s55 = ssub.s32 6144, 6144
      %56 = vsyncadd [#allocation9], %s55
      %s57 = sshll.u32 [#allocation10], 4
      %s58 = int_to_ptr.vmem [resolvable:$true] %s57
      %63 = dma.hbm_to_vmem [thread:$0]  %s6, 6144, %s58, [#allocation9], 384, 384, 24
    $region29: #{tpu_custom_call.1} parent=1 // pred_fallthru
      _
    // Predicated region
    $region30: #{tpu_custom_call.1} parent=1 // pred_check
      _
    $region31: #{tpu_custom_call.1} parent=1 // pred_check_branch
      %65 = sbr.rel (0) target = $region33
    $region32: #{tpu_custom_call.1} parent=1 // pred_region
      _
    $region33: #{tpu_custom_call.1} parent=1 // pred_fallthru
      _
    // Predicated region
    $region34: #{tpu_custom_call.1} parent=1 // pred_check
      _
    $region35: #{tpu_custom_call.1} parent=1 // pred_check_branch
      %67 = sbr.rel (0) target = $region37
    $region36: #{tpu_custom_call.1} parent=1 // pred_region
      _
    $region37: #{tpu_custom_call.1} parent=1 // pred_fallthru
      _
    // Predicated region
    $region38: #{tpu_custom_call.1} parent=1 // pred_check
      _
    $region39: #{tpu_custom_call.1} parent=1 // pred_check_branch
      %69 = sbr.rel (0) target = $region41
    $region40: #{tpu_custom_call.1} parent=1 // pred_region
      _
    $region41: #{tpu_custom_call.1} parent=1 // pred_fallthru
      _
    // Predicated region
    $region42: #{tpu_custom_call.1} parent=1 // pred_check
      _
    $region43: #{tpu_custom_call.1} parent=1 // pred_check_branch
      %71 = sbr.rel (0) target = $region45
    $region44: #{tpu_custom_call.1} parent=1 // pred_region
      _
    $region45: #{tpu_custom_call.1} parent=1 // pred_fallthru
      _
    // Predicated region
    $region46: #{tpu_custom_call.1} parent=1 // pred_check
      _
    $region47: #{tpu_custom_call.1} parent=1 // pred_check_branch
      %73 = sbr.rel (0) target = $region49
    $region48: #{tpu_custom_call.1} parent=1 // pred_region
      %74 = dma.done [#allocation7], 6144
    $region49: #{tpu_custom_call.1} parent=1 // pred_fallthru
      _
    // Predicated region
    $region50: #{tpu_custom_call.1} parent=1 // pred_check
      _
    $region51: #{tpu_custom_call.1} parent=1 // pred_check_branch
      %76 = sbr.rel (0) target = $region53
    $region52: #{tpu_custom_call.1} parent=1 // pred_region
      %77 = dma.done [#allocation9], 6144
    $region53: #{tpu_custom_call.1} parent=1 // pred_fallthru
      _
    // Predicated region
    $region54: #{tpu_custom_call.1} parent=1 // pred_check
      _
    $region55: #{tpu_custom_call.1} parent=1 // pred_check_branch
      %79 = sbr.rel (0) target = $region57
    $region56: #{tpu_custom_call.1} parent=1 // pred_region
      %80 = dma.done [#allocation9], 6144
    $region57: #{tpu_custom_call.1} parent=1 // pred_fallthru
      _
    %v81 = vld [vmem:[%s0] sm:$0xff]
    %v82 = vld [vmem:[%s0 + $0x8] sm:$0xff]
    %v83 = vld [vmem:[%s0 + $0x10] sm:$0xff]
    %v84 = vld [vmem:[%s0 + $0x18] sm:$0xff]
    %v85 = vld [vmem:[%s0 + $0x20] sm:$0xff]
    %v86 = vld [vmem:[%s0 + $0x28] sm:$0xff]
    %v87 = vld [vmem:[%s0 + $0x30] sm:$0xff]
    %v88 = vld [vmem:[%s0 + $0x38] sm:$0xff]
    %v89 = vld [vmem:[%s1] sm:$0xff]
    %v90 = vld [vmem:[%s1 + $0x8] sm:$0xf]
    %v91 = vld [vmem:[%s3] sm:$0x7]
    %v93 = vlaneseq
    %v94 = vshrl.u32 %v93, 7
    %v95 = vsub.s32 0, %v94
    %v96 = vrot.slane %v91, %v95
    %v97 = vlaneseq
    %v98 = vshrl.u32 %v97, 7
    %v99 = vsub.s32 1, %v98
    %v100 = vrot.slane %v91, %v99
    %v101 = vlaneseq
    %v102 = vshrl.u32 %v101, 7
    %v103 = vsub.s32 2, %v102
    %v104 = vrot.slane %v91, %v103
    %v110 = vcombine.high %v89, %v89
    %vm111 = vcmask 31744
    %v113 = vsel %vm111, %v81, 0
    %v116 = vsel %vm111, %v82, 0
    %v119 = vsel %vm111, %v83, 0
    %v122 = vsel %vm111, %v84, 0
    %v125 = vsel %vm111, %v85, 0
    %v128 = vsel %vm111, %v86, 0
    %v131 = vsel %vm111, %v87, 0
    %v134 = vsel %vm111, %v88, 0
    %vm136 = vcmask 1043456
    %v137 = vsel %vm136, %v89, 0
    %v139 = vsel %vm136, %v110, 0
    %v141 = vsel %vm136, %v90, 0
    %143 = vmatprep.subr.mxu0 %v139
    %144 = vmatpush1.msra.mxu0 %v137
    %145 = vmatprep.subr.mxu0 0.0
    %146 = vmatpush1.msra.mxu0 0.0
    %147 = vmatprep.subr.mxu0 0.0
    %148 = vmatpush1.msra.mxu0 0.0
    %149 = vmatprep.subr.mxu0 0.0
    %150 = vmatpush1.msra.mxu0 0.0
    %151 = vmatprep.subr.mxu0 0.0
    %152 = vmatpush1.msra.mxu0 0.0
    %153 = vmatprep.subr.mxu0 0.0
    %154 = vmatpush1.msra.mxu0 0.0
    %155 = vmatprep.subr.mxu0 0.0
    %156 = vmatpush1.msra.mxu0 0.0
    %157 = vmatprep.subr.mxu0 0.0
    %158 = vmatpush1.msra.mxu0 0.0
    %159 = vmatprep.subr.mxu0 0.0
    %160 = vmatpush1.msra.mxu0 0.0
    %161 = vmatprep.subr.mxu0 0.0
    %162 = vmatpush1.msra.mxu0 0.0
    %163 = vmatprep.subr.mxu0 0.0
    %164 = vmatpush1.msra.mxu0 0.0
    %165 = vmatprep.subr.mxu0 0.0
    %166 = vmatpush1.msra.mxu0 0.0
    %167 = vmatprep.subr.mxu0 0.0
    %168 = vmatpush1.msra.mxu0 0.0
    %169 = vmatprep.subr.mxu0 0.0
    %170 = vmatpush1.msra.mxu0 0.0
    %171 = vmatprep.subr.mxu0 0.0
    %172 = vmatpush1.msra.mxu0 0.0
    %173 = vmatprep.subr.mxu0 0.0
    %174 = vmatpush1.msra.mxu0 0.0
    %175 = vmatprep.subr.mxu0 0.0
    %176 = vmatpush1.msra.mxu0 0.0
    %177 = vmatprep.subr.mxu0 0.0
    %178 = vmatpush1.msra.mxu0 0.0
    %179 = vmatprep.subr.mxu0 0.0
    %180 = vmatpush1.msra.mxu0 0.0
    %181 = vmatprep.subr.mxu0 0.0
    %182 = vmatpush1.msra.mxu0 0.0
    %183 = vmatprep.subr.mxu0 0.0
    %184 = vmatpush1.msra.mxu0 0.0
    %185 = vmatprep.subr.mxu0 0.0
    %186 = vmatpush1.msra.mxu0 0.0
    %187 = vmatprep.subr.mxu0 0.0
    %188 = vmatpush1.msra.mxu0 0.0
    %189 = vmatprep.subr.mxu0 0.0
    %190 = vmatpush1.msra.mxu0 0.0
    %191 = vmatprep.subr.mxu0 0.0
    %192 = vmatpush1.msra.mxu0 0.0
    %193 = vmatprep.subr.mxu0 0.0
    %194 = vmatpush1.msra.mxu0 0.0
    %195 = vmatprep.subr.mxu0 0.0
    %196 = vmatpush1.msra.mxu0 0.0
    %197 = vmatprep.subr.mxu0 0.0
    %198 = vmatpush1.msra.mxu0 0.0
    %199 = vmatprep.subr.mxu0 0.0
    %200 = vmatpush1.msra.mxu0 0.0
    %201 = vmatprep.subr.mxu0 0.0
    %202 = vmatpush1.msra.mxu0 0.0
    %203 = vmatprep.subr.mxu0 0.0
    %204 = vmatpush1.msra.mxu0 0.0
    %205 = vmatprep.subr.mxu0 0.0
    %206 = vmatpush1.msra.mxu0 0.0
    %207 = vmatprep.mubr.f32.mxu0 0.0
    %208 = vmatmul.mubr.f32.gmra.mrb[0].mxu0 %v113
    %v209 = vpop.f32.mrb[0].mxu0
    %v210 = vadd.f32 %v96, %v209
    %v211 = vpop.f32.mrb[0].mxu0
    %v212 = vadd.f32 %v100, %v211
    %213 = vmatprep.mubr.f32.mxu0 0.0
    %214 = vmatmul.mubr.f32.gmra.mrb[0].mxu0 %v116
    %v215 = vpop.f32.mrb[0].mxu0
    %v216 = vadd.f32 %v96, %v215
    %v217 = vpop.f32.mrb[0].mxu0
    %v218 = vadd.f32 %v100, %v217
    %219 = vmatprep.mubr.f32.mxu0 0.0
    %220 = vmatmul.mubr.f32.gmra.mrb[0].mxu0 %v119
    %v221 = vpop.f32.mrb[0].mxu0
    %v222 = vadd.f32 %v96, %v221
    %v223 = vpop.f32.mrb[0].mxu0
    %v224 = vadd.f32 %v100, %v223
    %225 = vmatprep.mubr.f32.mxu0 0.0
    %226 = vmatmul.mubr.f32.gmra.mrb[0].mxu0 %v122
    %v227 = vpop.f32.mrb[0].mxu0
    %v228 = vadd.f32 %v96, %v227
    %v229 = vpop.f32.mrb[0].mxu0
    %v230 = vadd.f32 %v100, %v229
    %231 = vmatprep.mubr.f32.mxu0 0.0
    %232 = vmatmul.mubr.f32.gmra.mrb[0].mxu0 %v125
    %v233 = vpop.f32.mrb[0].mxu0
    %v234 = vadd.f32 %v96, %v233
    %v235 = vpop.f32.mrb[0].mxu0
    %v236 = vadd.f32 %v100, %v235
    %237 = vmatprep.mubr.f32.mxu0 0.0
    %238 = vmatmul.mubr.f32.gmra.mrb[0].mxu0 %v128
    %v239 = vpop.f32.mrb[0].mxu0
    %v240 = vadd.f32 %v96, %v239
    %v241 = vpop.f32.mrb[0].mxu0
    %v242 = vadd.f32 %v100, %v241
    %243 = vmatprep.mubr.f32.mxu0 0.0
    %244 = vmatmul.mubr.f32.gmra.mrb[0].mxu0 %v131
    %v245 = vpop.f32.mrb[0].mxu0
    %v246 = vadd.f32 %v96, %v245
    %v247 = vpop.f32.mrb[0].mxu0
    %v248 = vadd.f32 %v100, %v247
    %249 = vmatprep.mubr.f32.mxu0 0.0
    %250 = vmatmul.mubr.f32.gmra.mrb[0].mxu0 %v134
    %v251 = vpop.f32.mrb[0].mxu0
    %v252 = vadd.f32 %v96, %v251
    %v253 = vpop.f32.mrb[0].mxu0
    %v254 = vadd.f32 %v100, %v253
    %255 = vdwg.mxu0
    %256 = vmatprep.subr.mxu0 0.0
    %257 = vmatpush1.msra.mxu0 %v141
    %258 = vmatprep.subr.mxu0 0.0
    %259 = vmatpush1.msra.mxu0 0.0
    %260 = vmatprep.subr.mxu0 0.0
    %261 = vmatpush1.msra.mxu0 0.0
    %262 = vmatprep.subr.mxu0 0.0
    %263 = vmatpush1.msra.mxu0 0.0
    %264 = vmatprep.subr.mxu0 0.0
    %265 = vmatpush1.msra.mxu0 0.0
    %266 = vmatprep.subr.mxu0 0.0
    %267 = vmatpush1.msra.mxu0 0.0
    %268 = vmatprep.subr.mxu0 0.0
    %269 = vmatpush1.msra.mxu0 0.0
    %270 = vmatprep.subr.mxu0 0.0
    %271 = vmatpush1.msra.mxu0 0.0
    %272 = vmatprep.subr.mxu0 0.0
    %273 = vmatpush1.msra.mxu0 0.0
    %274 = vmatprep.subr.mxu0 0.0
    %275 = vmatpush1.msra.mxu0 0.0
    %276 = vmatprep.subr.mxu0 0.0
    %277 = vmatpush1.msra.mxu0 0.0
    %278 = vmatprep.subr.mxu0 0.0
    %279 = vmatpush1.msra.mxu0 0.0
    %280 = vmatprep.subr.mxu0 0.0
    %281 = vmatpush1.msra.mxu0 0.0
    %282 = vmatprep.subr.mxu0 0.0
    %283 = vmatpush1.msra.mxu0 0.0
    %284 = vmatprep.subr.mxu0 0.0
    %285 = vmatpush1.msra.mxu0 0.0
    %286 = vmatprep.subr.mxu0 0.0
    %287 = vmatpush1.msra.mxu0 0.0
    %288 = vmatprep.subr.mxu0 0.0
    %289 = vmatpush1.msra.mxu0 0.0
    %290 = vmatprep.subr.mxu0 0.0
    %291 = vmatpush1.msra.mxu0 0.0
    %292 = vmatprep.subr.mxu0 0.0
    %293 = vmatpush1.msra.mxu0 0.0
    %294 = vmatprep.subr.mxu0 0.0
    %295 = vmatpush1.msra.mxu0 0.0
    %296 = vmatprep.subr.mxu0 0.0
    %297 = vmatpush1.msra.mxu0 0.0
    %298 = vmatprep.subr.mxu0 0.0
    %299 = vmatpush1.msra.mxu0 0.0
    %300 = vmatprep.subr.mxu0 0.0
    %301 = vmatpush1.msra.mxu0 0.0
    %302 = vmatprep.subr.mxu0 0.0
    %303 = vmatpush1.msra.mxu0 0.0
    %304 = vmatprep.subr.mxu0 0.0
    %305 = vmatpush1.msra.mxu0 0.0
    %306 = vmatprep.subr.mxu0 0.0
    %307 = vmatpush1.msra.mxu0 0.0
    %308 = vmatprep.subr.mxu0 0.0
    %309 = vmatpush1.msra.mxu0 0.0
    %310 = vmatprep.subr.mxu0 0.0
    %311 = vmatpush1.msra.mxu0 0.0
    %312 = vmatprep.subr.mxu0 0.0
    %313 = vmatpush1.msra.mxu0 0.0
    %314 = vmatprep.subr.mxu0 0.0
    %315 = vmatpush1.msra.mxu0 0.0
    %316 = vmatprep.subr.mxu0 0.0
    %317 = vmatpush1.msra.mxu0 0.0
    %318 = vmatprep.subr.mxu0 0.0
    %319 = vmatpush1.msra.mxu0 0.0
    %320 = vmatprep.mubr.f32.mxu0 0.0
    %321 = vmatmul.mubr.f32.gmra.mrb[0].mxu0 %v113
    %v322 = vpop.f32.mrb[0].mxu0
    %v323 = vadd.f32 %v104, %v322
    %v324 = vpop.f32.mrb[0].mxu0
    %325 = vmatprep.mubr.f32.mxu0 0.0
    %326 = vmatmul.mubr.f32.gmra.mrb[0].mxu0 %v116
    %v327 = vpop.f32.mrb[0].mxu0
    %v328 = vadd.f32 %v104, %v327
    %v329 = vpop.f32.mrb[0].mxu0
    %330 = vmatprep.mubr.f32.mxu0 0.0
    %331 = vmatmul.mubr.f32.gmra.mrb[0].mxu0 %v119
    %v332 = vpop.f32.mrb[0].mxu0
    %v333 = vadd.f32 %v104, %v332
    %v334 = vpop.f32.mrb[0].mxu0
    %335 = vmatprep.mubr.f32.mxu0 0.0
    %336 = vmatmul.mubr.f32.gmra.mrb[0].mxu0 %v122
    %v337 = vpop.f32.mrb[0].mxu0
    %v338 = vadd.f32 %v104, %v337
    %v339 = vpop.f32.mrb[0].mxu0
    %340 = vmatprep.mubr.f32.mxu0 0.0
    %341 = vmatmul.mubr.f32.gmra.mrb[0].mxu0 %v125
    %v342 = vpop.f32.mrb[0].mxu0
    %v343 = vadd.f32 %v104, %v342
    %v344 = vpop.f32.mrb[0].mxu0
    %345 = vmatprep.mubr.f32.mxu0 0.0
    %346 = vmatmul.mubr.f32.gmra.mrb[0].mxu0 %v128
    %v347 = vpop.f32.mrb[0].mxu0
    %v348 = vadd.f32 %v104, %v347
    %v349 = vpop.f32.mrb[0].mxu0
    %350 = vmatprep.mubr.f32.mxu0 0.0
    %351 = vmatmul.mubr.f32.gmra.mrb[0].mxu0 %v131
    %v352 = vpop.f32.mrb[0].mxu0
    %v353 = vadd.f32 %v104, %v352
    %v354 = vpop.f32.mrb[0].mxu0
    %355 = vmatprep.mubr.f32.mxu0 0.0
    %356 = vmatmul.mubr.f32.gmra.mrb[0].mxu0 %v134
    %v357 = vpop.f32.mrb[0].mxu0
    %v358 = vadd.f32 %v104, %v357
    %v359 = vpop.f32.mrb[0].mxu0
    %360 = vdwg.mxu0
    %361 = vst [vmem:[#allocation2] sm:$0xff] %v210
    %362 = vst [vmem:[#allocation2 + $0x8] sm:$0xff] %v212
    %363 = vst [vmem:[#allocation2 + $0x10] sm:$0xff] %v323
    %364 = vst [vmem:[#allocation2 + $0x18] sm:$0xff] %v216
    %365 = vst [vmem:[#allocation2 + $0x20] sm:$0xff] %v218
    %366 = vst [vmem:[#allocation2 + $0x28] sm:$0xff] %v328
    %367 = vst [vmem:[#allocation2 + $0x30] sm:$0xff] %v222
    %368 = vst [vmem:[#allocation2 + $0x38] sm:$0xff] %v224
    %369 = vst [vmem:[#allocation2 + $0x40] sm:$0xff] %v333
    %370 = vst [vmem:[#allocation2 + $0x48] sm:$0xff] %v228
    %371 = vst [vmem:[#allocation2 + $0x50] sm:$0xff] %v230
    %372 = vst [vmem:[#allocation2 + $0x58] sm:$0xff] %v338
    %373 = vst [vmem:[#allocation2 + $0x60] sm:$0xff] %v234
    %374 = vst [vmem:[#allocation2 + $0x68] sm:$0xff] %v236
    %375 = vst [vmem:[#allocation2 + $0x70] sm:$0xff] %v343
    %376 = vst [vmem:[#allocation2 + $0x78] sm:$0xff] %v240
    %377 = vst [vmem:[#allocation2 + $0x80] sm:$0xff] %v242
    %378 = vst [vmem:[#allocation2 + $0x88] sm:$0xff] %v348
    %379 = vst [vmem:[#allocation2 + $0x90] sm:$0xff] %v246
    %380 = vst [vmem:[#allocation2 + $0x98] sm:$0xff] %v248
    %381 = vst [vmem:[#allocation2 + $0xa0] sm:$0xff] %v353
    %382 = vst [vmem:[#allocation2 + $0xa8] sm:$0xff] %v252
    %383 = vst [vmem:[#allocation2 + $0xb0] sm:$0xff] %v254
    %384 = vst [vmem:[#allocation2 + $0xb8] sm:$0xff] %v358
    %v385 = vld [vmem:[%s4] sm:$0x1]
    %v386 = vld [vmem:[#allocation2] sm:$0xff]
    %v387 = vld [vmem:[#allocation2 + $0x8] sm:$0xff]
    %v388 = vld [vmem:[#allocation2 + $0x10] sm:$0xff]
    %v389 = vld [vmem:[#allocation6] sm:$0xff]
    %v390 = vld [vmem:[#allocation6 + $0x8] sm:$0xff]
    %v391 = vld [vmem:[#allocation6 + $0x10] sm:$0xff]
    %v392 = vld [vmem:[#allocation6 + $0x18] sm:$0xff]
    %v393 = vld [vmem:[#allocation6 + $0x20] sm:$0xff]
    %v394 = vld [vmem:[#allocation6 + $0x28] sm:$0xff]
    %v395 = vld [vmem:[#allocation6 + $0x30] sm:$0xff]
    %v396 = vld [vmem:[#allocation6 + $0x38] sm:$0xff]
    %v397 = vld [vmem:[#allocation6 + $0x40] sm:$0xff]
    %v398 = vld [vmem:[#allocation6 + $0x48] sm:$0xff]
    %v399 = vld [vmem:[#allocation6 + $0x50] sm:$0xff]
    %v400 = vld [vmem:[#allocation6 + $0x58] sm:$0xff]
    %v401 = vld [vmem:[#allocation6 + $0x60] sm:$0xff]
    %v402 = vld [vmem:[#allocation6 + $0x68] sm:$0xff]
    %v403 = vld [vmem:[#allocation6 + $0x70] sm:$0xff]
    %v404 = vld [vmem:[#allocation6 + $0x78] sm:$0xff]
    %v405 = vld [vmem:[#allocation6 + $0x80] sm:$0xff]
    %v406 = vld [vmem:[#allocation6 + $0x88] sm:$0xff]
    %v407 = vld [vmem:[#allocation6 + $0x90] sm:$0xff]
    %v408 = vld [vmem:[#allocation6 + $0x98] sm:$0xff]
    %v409 = vld [vmem:[#allocation6 + $0xa0] sm:$0xff]
    %v410 = vld [vmem:[#allocation6 + $0xa8] sm:$0xff]
    %v411 = vld [vmem:[#allocation6 + $0xb0] sm:$0xff]
    %v412 = vld [vmem:[#allocation6 + $0xb8] sm:$0xff]
    %v413 = vld [vmem:[#allocation6 + $0xc0] sm:$0xff]
    %v414 = vld [vmem:[#allocation6 + $0xc8] sm:$0xff]
    %v415 = vld [vmem:[#allocation6 + $0xd0] sm:$0xff]
    %v416 = vld [vmem:[#allocation6 + $0xd8] sm:$0xff]
    %v417 = vld [vmem:[#allocation6 + $0xe0] sm:$0xff]
    %v418 = vld [vmem:[#allocation6 + $0xe8] sm:$0xff]
    %v419 = vld [vmem:[#allocation6 + $0xf0] sm:$0xff]
    %v420 = vld [vmem:[#allocation6 + $0xf8] sm:$0xff]
    %v421 = vld [vmem:[#allocation6 + $0x100] sm:$0xff]
    %v422 = vld [vmem:[#allocation6 + $0x108] sm:$0xff]
    %v423 = vld [vmem:[#allocation6 + $0x110] sm:$0xff]
    %v424 = vld [vmem:[#allocation6 + $0x118] sm:$0xff]
    %v425 = vld [vmem:[#allocation6 + $0x120] sm:$0xff]
    %v426 = vld [vmem:[#allocation6 + $0x128] sm:$0xff]
    %v427 = vld [vmem:[#allocation6 + $0x130] sm:$0xff]
    %v428 = vld [vmem:[#allocation6 + $0x138] sm:$0xff]
    %v429 = vld [vmem:[#allocation6 + $0x140] sm:$0xff]
    %v430 = vld [vmem:[#allocation6 + $0x148] sm:$0xff]
    %v431 = vld [vmem:[#allocation6 + $0x150] sm:$0xff]
    %v432 = vld [vmem:[#allocation6 + $0x158] sm:$0xff]
    %v433 = vld [vmem:[#allocation6 + $0x160] sm:$0xff]
    %v434 = vld [vmem:[#allocation6 + $0x168] sm:$0xff]
    %v435 = vld [vmem:[#allocation6 + $0x170] sm:$0xff]
    %v436 = vld [vmem:[#allocation6 + $0x178] sm:$0xff]
    %437 = vmatprep.subr.mxu0 %v390
    %438 = vmatpush1.msra.mxu0 %v389
    %439 = vmatprep.subr.mxu0 %v393
    %440 = vmatpush1.msra.mxu0 %v392
    %441 = vmatprep.subr.mxu0 %v396
    %442 = vmatpush1.msra.mxu0 %v395
    %443 = vmatprep.subr.mxu0 %v399
    %444 = vmatpush1.msra.mxu0 %v398
    %445 = vmatprep.subr.mxu0 %v402
    %446 = vmatpush1.msra.mxu0 %v401
    %447 = vmatprep.subr.mxu0 %v405
    %448 = vmatpush1.msra.mxu0 %v404
    %449 = vmatprep.subr.mxu0 %v408
    %450 = vmatpush1.msra.mxu0 %v407
    %451 = vmatprep.subr.mxu0 %v411
    %452 = vmatpush1.msra.mxu0 %v410
    %453 = vmatprep.subr.mxu0 %v414
    %454 = vmatpush1.msra.mxu0 %v413
    %455 = vmatprep.subr.mxu0 %v417
    %456 = vmatpush1.msra.mxu0 %v416
    %457 = vmatprep.subr.mxu0 %v420
    %458 = vmatpush1.msra.mxu0 %v419
    %459 = vmatprep.subr.mxu0 %v423
    %460 = vmatpush1.msra.mxu0 %v422
    %461 = vmatprep.subr.mxu0 %v426
    %462 = vmatpush1.msra.mxu0 %v425
    %463 = vmatprep.subr.mxu0 %v429
    %464 = vmatpush1.msra.mxu0 %v428
    %465 = vmatprep.subr.mxu0 %v432
    %466 = vmatpush1.msra.mxu0 %v431
    %467 = vmatprep.subr.mxu0 %v435
    %468 = vmatpush1.msra.mxu0 %v434
    %469 = vmatprep.subr.mxu0 0.0
    %470 = vmatpush1.msra.mxu0 0.0
    %471 = vmatprep.subr.mxu0 0.0
    %472 = vmatpush1.msra.mxu0 0.0
    %473 = vmatprep.subr.mxu0 0.0
    %474 = vmatpush1.msra.mxu0 0.0
    %475 = vmatprep.subr.mxu0 0.0
    %476 = vmatpush1.msra.mxu0 0.0
    %477 = vmatprep.subr.mxu0 0.0
    %478 = vmatpush1.msra.mxu0 0.0
    %479 = vmatprep.subr.mxu0 0.0
    %480 = vmatpush1.msra.mxu0 0.0
    %481 = vmatprep.subr.mxu0 0.0
    %482 = vmatpush1.msra.mxu0 0.0
    %483 = vmatprep.subr.mxu0 0.0
    %484 = vmatpush1.msra.mxu0 0.0
    %485 = vmatprep.subr.mxu0 0.0
    %486 = vmatpush1.msra.mxu0 0.0
    %487 = vmatprep.subr.mxu0 0.0
    %488 = vmatpush1.msra.mxu0 0.0
    %489 = vmatprep.subr.mxu0 0.0
    %490 = vmatpush1.msra.mxu0 0.0
    %491 = vmatprep.subr.mxu0 0.0
    %492 = vmatpush1.msra.mxu0 0.0
    %493 = vmatprep.subr.mxu0 0.0
    %494 = vmatpush1.msra.mxu0 0.0
    %495 = vmatprep.subr.mxu0 0.0
    %496 = vmatpush1.msra.mxu0 0.0
    %497 = vmatprep.subr.mxu0 0.0
    %498 = vmatpush1.msra.mxu0 0.0
    %499 = vmatprep.subr.mxu0 0.0
    %500 = vmatpush1.msra.mxu0 0.0
    %501 = vmatprep.mubr.f32.mxu0 0.0
    %502 = vmatmul.mubr.f32.gmra.mrb[0].mxu0 0.0
    %v503 = vpop.f32.mrb[0].mxu0
    %v504 = vadd.f32 0.0, %v503
    %v505 = vpop.f32.mrb[0].mxu0
    %v506 = vadd.f32 0.0, %v505
    %507 = vdwg.mxu0
    %508 = vmatprep.subr.mxu0 0.0
    %509 = vmatpush1.msra.mxu0 %v391
    %510 = vmatprep.subr.mxu0 0.0
    %511 = vmatpush1.msra.mxu0 %v394
    %512 = vmatprep.subr.mxu0 0.0
    %513 = vmatpush1.msra.mxu0 %v397
    %514 = vmatprep.subr.mxu0 0.0
    %515 = vmatpush1.msra.mxu0 %v400
    %516 = vmatprep.subr.mxu0 0.0
    %517 = vmatpush1.msra.mxu0 %v403
    %518 = vmatprep.subr.mxu0 0.0
    %519 = vmatpush1.msra.mxu0 %v406
    %520 = vmatprep.subr.mxu0 0.0
    %521 = vmatpush1.msra.mxu0 %v409
    %522 = vmatprep.subr.mxu0 0.0
    %523 = vmatpush1.msra.mxu0 %v412
    %524 = vmatprep.subr.mxu0 0.0
    %525 = vmatpush1.msra.mxu0 %v415
    %526 = vmatprep.subr.mxu0 0.0
    %527 = vmatpush1.msra.mxu0 %v418
    %528 = vmatprep.subr.mxu0 0.0
    %529 = vmatpush1.msra.mxu0 %v421
    %530 = vmatprep.subr.mxu0 0.0
    %531 = vmatpush1.msra.mxu0 %v424
    %532 = vmatprep.subr.mxu0 0.0
    %533 = vmatpush1.msra.mxu0 %v427
    %534 = vmatprep.subr.mxu0 0.0
    %535 = vmatpush1.msra.mxu0 %v430
    %536 = vmatprep.subr.mxu0 0.0
    %537 = vmatpush1.msra.mxu0 %v433
    %538 = vmatprep.subr.mxu0 0.0
    %539 = vmatpush1.msra.mxu0 %v436
    %540 = vmatprep.subr.mxu0 0.0
    %541 = vmatpush1.msra.mxu0 0.0
    %542 = vmatprep.subr.mxu0 0.0
    %543 = vmatpush1.msra.mxu0 0.0
    %544 = vmatprep.subr.mxu0 0.0
    %545 = vmatpush1.msra.mxu0 0.0
    %546 = vmatprep.subr.mxu0 0.0
    %547 = vmatpush1.msra.mxu0 0.0
    %548 = vmatprep.subr.mxu0 0.0
    %549 = vmatpush1.msra.mxu0 0.0
    %550 = vmatprep.subr.mxu0 0.0
    %551 = vmatpush1.msra.mxu0 0.0
    %552 = vmatprep.subr.mxu0 0.0
    %553 = vmatpush1.msra.mxu0 0.0
    %554 = vmatprep.subr.mxu0 0.0
    %555 = vmatpush1.msra.mxu0 0.0
    %556 = vmatprep.subr.mxu0 0.0
    %557 = vmatpush1.msra.mxu0 0.0
    %558 = vmatprep.subr.mxu0 0.0
    %559 = vmatpush1.msra.mxu0 0.0
    %560 = vmatprep.subr.mxu0 0.0
    %561 = vmatpush1.msra.mxu0 0.0
    %562 = vmatprep.subr.mxu0 0.0
    %563 = vmatpush1.msra.mxu0 0.0
    %564 = vmatprep.subr.mxu0 0.0
    %565 = vmatpush1.msra.mxu0 0.0
    %566 = vmatprep.subr.mxu0 0.0
    %567 = vmatpush1.msra.mxu0 0.0
    %568 = vmatprep.subr.mxu0 0.0
    %569 = vmatpush1.msra.mxu0 0.0
    %570 = vmatprep.subr.mxu0 0.0
    %571 = vmatpush1.msra.mxu0 0.0
    %572 = vmatprep.mubr.f32.mxu0 0.0
    %573 = vmatmul.mubr.f32.gmra.mrb[0].mxu0 0.0
    %v574 = vpop.f32.mrb[0].mxu0
    %v575 = vadd.f32 0.0, %v574
    %v576 = vpop.f32.mrb[0].mxu0
    %577 = vdwg.mxu0
    %v578 = vadd.f32 %v386, %v504
    %v579 = vxor.u32 %v578, 2147483648
    %v580 = vmul.f32 %v579, 1.442695
    %v581 = vpow.pop %v580
    %v582 = vadd.f32 %v581, 1.0
    %v583 = vrcp.pop %v582
    %v584 = vmul.f32 1.0, %v583
    %v585 = vadd.f32 %v387, %v506
    %v586 = vxor.u32 %v585, 2147483648
    %v587 = vmul.f32 %v586, 1.442695
    %v588 = vpow.pop %v587
    %v589 = vadd.f32 %v588, 1.0
    %v590 = vrcp.pop %v589
    %v591 = vmul.f32 1.0, %v590
    %v593 = vlaneseq
    %v594 = vshrl.u32 %v593, 7
    %v595 = vsub.s32 0, %v594
    %v596 = vrot.slane %v385, %v595
    %v598 = vadd.f32 %v575, %v596
    %v599 = vmul.f32 %v584, %v598
    %v600 = vadd.f32 %v388, %v599
    %v601 = vtanh.pop %v600
    %v602 = vsub.f32 0.0, %v601
    %v603 = vmul.f32 %v591, %v602
    %v604 = vadd.f32 %v601, %v603
    %605 = vst [vmem:[#allocation3] sm:$0xff] %v604
    %s606 = scalar_lea.vmem [#allocation2], 24
    %v607 = vld [vmem:[%s606] sm:$0xff]
    %v608 = vld [vmem:[%s606 + $0x8] sm:$0xff]
    %v609 = vld [vmem:[%s606 + $0x10] sm:$0xff]
    %v610 = vld [vmem:[#allocation6] sm:$0xff]
    %v611 = vld [vmem:[#allocation6 + $0x8] sm:$0xff]
    %v612 = vld [vmem:[#allocation6 + $0x10] sm:$0xff]
    %v613 = vld [vmem:[#allocation6 + $0x18] sm:$0xff]
    %v614 = vld [vmem:[#allocation6 + $0x20] sm:$0xff]
    %v615 = vld [vmem:[#allocation6 + $0x28] sm:$0xff]
    %v616 = vld [vmem:[#allocation6 + $0x30] sm:$0xff]
    %v617 = vld [vmem:[#allocation6 + $0x38] sm:$0xff]
    %v618 = vld [vmem:[#allocation6 + $0x40] sm:$0xff]
    %v619 = vld [vmem:[#allocation6 + $0x48] sm:$0xff]
    %v620 = vld [vmem:[#allocation6 + $0x50] sm:$0xff]
    %v621 = vld [vmem:[#allocation6 + $0x58] sm:$0xff]
    %v622 = vld [vmem:[#allocation6 + $0x60] sm:$0xff]
    %v623 = vld [vmem:[#allocation6 + $0x68] sm:$0xff]
    %v624 = vld [vmem:[#allocation6 + $0x70] sm:$0xff]
    %v625 = vld [vmem:[#allocation6 + $0x78] sm:$0xff]
    %v626 = vld [vmem:[#allocation6 + $0x80] sm:$0xff]
    %v627 = vld [vmem:[#allocation6 + $0x88] sm:$0xff]
    %v628 = vld [vmem:[#allocation6 + $0x90] sm:$0xff]
    %v629 = vld [vmem:[#allocation6 + $0x98] sm:$0xff]
    %v630 = vld [vmem:[#allocation6 + $0xa0] sm:$0xff]
    %v631 = vld [vmem:[#allocation6 + $0xa8] sm:$0xff]
    %v632 = vld [vmem:[#allocation6 + $0xb0] sm:$0xff]
    %v633 = vld [vmem:[#allocation6 + $0xb8] sm:$0xff]
    %v634 = vld [vmem:[#allocation6 + $0xc0] sm:$0xff]
    %v635 = vld [vmem:[#allocation6 + $0xc8] sm:$0xff]
    %v636 = vld [vmem:[#allocation6 + $0xd0] sm:$0xff]
    %v637 = vld [vmem:[#allocation6 + $0xd8] sm:$0xff]
    %v638 = vld [vmem:[#allocation6 + $0xe0] sm:$0xff]
    %v639 = vld [vmem:[#allocation6 + $0xe8] sm:$0xff]
    %v640 = vld [vmem:[#allocation6 + $0xf0] sm:$0xff]
    %v641 = vld [vmem:[#allocation6 + $0xf8] sm:$0xff]
    %v642 = vld [vmem:[#allocation6 + $0x100] sm:$0xff]
    %v643 = vld [vmem:[#allocation6 + $0x108] sm:$0xff]
    %v644 = vld [vmem:[#allocation6 + $0x110] sm:$0xff]
    %v645 = vld [vmem:[#allocation6 + $0x118] sm:$0xff]
    %v646 = vld [vmem:[#allocation6 + $0x120] sm:$0xff]
    %v647 = vld [vmem:[#allocation6 + $0x128] sm:$0xff]
    %v648 = vld [vmem:[#allocation6 + $0x130] sm:$0xff]
    %v649 = vld [vmem:[#allocation6 + $0x138] sm:$0xff]
    %v650 = vld [vmem:[#allocation6 + $0x140] sm:$0xff]
    %v651 = vld [vmem:[#allocation6 + $0x148] sm:$0xff]
    %v652 = vld [vmem:[#allocation6 + $0x150] sm:$0xff]
    %v653 = vld [vmem:[#allocation6 + $0x158] sm:$0xff]
    %v654 = vld [vmem:[#allocation6 + $0x160] sm:$0xff]
    %v655 = vld [vmem:[#allocation6 + $0x168] sm:$0xff]
    %v656 = vld [vmem:[#allocation6 + $0x170] sm:$0xff]
    %v657 = vld [vmem:[#allocation6 + $0x178] sm:$0xff]
    %658 = vmatprep.subr.mxu0 %v611
    %659 = vmatpush1.msra.mxu0 %v610
    %660 = vmatprep.subr.mxu0 %v614
    %661 = vmatpush1.msra.mxu0 %v613
    %662 = vmatprep.subr.mxu0 %v617
    %663 = vmatpush1.msra.mxu0 %v616
    %664 = vmatprep.subr.mxu0 %v620
    %665 = vmatpush1.msra.mxu0 %v619
    %666 = vmatprep.subr.mxu0 %v623
    %667 = vmatpush1.msra.mxu0 %v622
    %668 = vmatprep.subr.mxu0 %v626
    %669 = vmatpush1.msra.mxu0 %v625
    %670 = vmatprep.subr.mxu0 %v629
    %671 = vmatpush1.msra.mxu0 %v628
    %672 = vmatprep.subr.mxu0 %v632
    %673 = vmatpush1.msra.mxu0 %v631
    %674 = vmatprep.subr.mxu0 %v635
    %675 = vmatpush1.msra.mxu0 %v634
    %676 = vmatprep.subr.mxu0 %v638
    %677 = vmatpush1.msra.mxu0 %v637
    %678 = vmatprep.subr.mxu0 %v641
    %679 = vmatpush1.msra.mxu0 %v640
    %680 = vmatprep.subr.mxu0 %v644
    %681 = vmatpush1.msra.mxu0 %v643
    %682 = vmatprep.subr.mxu0 %v647
    %683 = vmatpush1.msra.mxu0 %v646
    %684 = vmatprep.subr.mxu0 %v650
    %685 = vmatpush1.msra.mxu0 %v649
    %686 = vmatprep.subr.mxu0 %v653
    %687 = vmatpush1.msra.mxu0 %v652
    %688 = vmatprep.subr.mxu0 %v656
    %689 = vmatpush1.msra.mxu0 %v655
    %690 = vmatprep.subr.mxu0 0.0
    %691 = vmatpush1.msra.mxu0 0.0
    %692 = vmatprep.subr.mxu0 0.0
    %693 = vmatpush1.msra.mxu0 0.0
    %694 = vmatprep.subr.mxu0 0.0
    %695 = vmatpush1.msra.mxu0 0.0
    %696 = vmatprep.subr.mxu0 0.0
    %697 = vmatpush1.msra.mxu0 0.0
    %698 = vmatprep.subr.mxu0 0.0
    %699 = vmatpush1.msra.mxu0 0.0
    %700 = vmatprep.subr.mxu0 0.0
    %701 = vmatpush1.msra.mxu0 0.0
    %702 = vmatprep.subr.mxu0 0.0
    %703 = vmatpush1.msra.mxu0 0.0
    %704 = vmatprep.subr.mxu0 0.0
    %705 = vmatpush1.msra.mxu0 0.0
    %706 = vmatprep.subr.mxu0 0.0
    %707 = vmatpush1.msra.mxu0 0.0
    %708 = vmatprep.subr.mxu0 0.0
    %709 = vmatpush1.msra.mxu0 0.0
    %710 = vmatprep.subr.mxu0 0.0
    %711 = vmatpush1.msra.mxu0 0.0
    %712 = vmatprep.subr.mxu0 0.0
    %713 = vmatpush1.msra.mxu0 0.0
    %714 = vmatprep.subr.mxu0 0.0
    %715 = vmatpush1.msra.mxu0 0.0
    %716 = vmatprep.subr.mxu0 0.0
    %717 = vmatpush1.msra.mxu0 0.0
    %718 = vmatprep.subr.mxu0 0.0
    %719 = vmatpush1.msra.mxu0 0.0
    %720 = vmatprep.subr.mxu0 0.0
    %721 = vmatpush1.msra.mxu0 0.0
    %722 = vmatprep.mubr.f32.mxu0 0.0
    %723 = vmatmul.mubr.f32.gmra.mrb[0].mxu0 %v604
    %v724 = vpop.f32.mrb[0].mxu0
    %v725 = vadd.f32 0.0, %v724
    %v726 = vpop.f32.mrb[0].mxu0
    %v727 = vadd.f32 0.0, %v726
    %728 = vdwg.mxu0
    %729 = vmatprep.subr.mxu0 0.0
    %730 = vmatpush1.msra.mxu0 %v612
    %731 = vmatprep.subr.mxu0 0.0
    %732 = vmatpush1.msra.mxu0 %v615
    %733 = vmatprep.subr.mxu0 0.0
    %734 = vmatpush1.msra.mxu0 %v618
    %735 = vmatprep.subr.mxu0 0.0
    %736 = vmatpush1.msra.mxu0 %v621
    %737 = vmatprep.subr.mxu0 0.0
    %738 = vmatpush1.msra.mxu0 %v624
    %739 = vmatprep.subr.mxu0 0.0
    %740 = vmatpush1.msra.mxu0 %v627
    %741 = vmatprep.subr.mxu0 0.0
    %742 = vmatpush1.msra.mxu0 %v630
    %743 = vmatprep.subr.mxu0 0.0
    %744 = vmatpush1.msra.mxu0 %v633
    %745 = vmatprep.subr.mxu0 0.0
    %746 = vmatpush1.msra.mxu0 %v636
    %747 = vmatprep.subr.mxu0 0.0
    %748 = vmatpush1.msra.mxu0 %v639
    %749 = vmatprep.subr.mxu0 0.0
    %750 = vmatpush1.msra.mxu0 %v642
    %751 = vmatprep.subr.mxu0 0.0
    %752 = vmatpush1.msra.mxu0 %v645
    %753 = vmatprep.subr.mxu0 0.0
    %754 = vmatpush1.msra.mxu0 %v648
    %755 = vmatprep.subr.mxu0 0.0
    %756 = vmatpush1.msra.mxu0 %v651
    %757 = vmatprep.subr.mxu0 0.0
    %758 = vmatpush1.msra.mxu0 %v654
    %759 = vmatprep.subr.mxu0 0.0
    %760 = vmatpush1.msra.mxu0 %v657
    %761 = vmatprep.subr.mxu0 0.0
    %762 = vmatpush1.msra.mxu0 0.0
    %763 = vmatprep.subr.mxu0 0.0
    %764 = vmatpush1.msra.mxu0 0.0
    %765 = vmatprep.subr.mxu0 0.0
    %766 = vmatpush1.msra.mxu0 0.0
    %767 = vmatprep.subr.mxu0 0.0
    %768 = vmatpush1.msra.mxu0 0.0
    %769 = vmatprep.subr.mxu0 0.0
    %770 = vmatpush1.msra.mxu0 0.0
    %771 = vmatprep.subr.mxu0 0.0
    %772 = vmatpush1.msra.mxu0 0.0
    %773 = vmatprep.subr.mxu0 0.0
    %774 = vmatpush1.msra.mxu0 0.0
    %775 = vmatprep.subr.mxu0 0.0
    %776 = vmatpush1.msra.mxu0 0.0
    %777 = vmatprep.subr.mxu0 0.0
    %778 = vmatpush1.msra.mxu0 0.0
    %779 = vmatprep.subr.mxu0 0.0
    %780 = vmatpush1.msra.mxu0 0.0
    %781 = vmatprep.subr.mxu0 0.0
    %782 = vmatpush1.msra.mxu0 0.0
    %783 = vmatprep.subr.mxu0 0.0
    %784 = vmatpush1.msra.mxu0 0.0
    %785 = vmatprep.subr.mxu0 0.0
    %786 = vmatpush1.msra.mxu0 0.0
    %787 = vmatprep.subr.mxu0 0.0
    %788 = vmatpush1.msra.mxu0 0.0
    %789 = vmatprep.subr.mxu0 0.0
    %790 = vmatpush1.msra.mxu0 0.0
    %791 = vmatprep.subr.mxu0 0.0
    %792 = vmatpush1.msra.mxu0 0.0
    %793 = vmatprep.mubr.f32.mxu0 0.0
    %794 = vmatmul.mubr.f32.gmra.mrb[0].mxu0 %v604
    %v795 = vpop.f32.mrb[0].mxu0
    %v796 = vadd.f32 0.0, %v795
    %v797 = vpop.f32.mrb[0].mxu0
    %798 = vdwg.mxu0
    %v799 = vadd.f32 %v607, %v725
    %v800 = vxor.u32 %v799, 2147483648
    %v801 = vmul.f32 %v800, 1.442695
    %v802 = vpow.pop %v801
    %v803 = vadd.f32 %v802, 1.0
    %v804 = vrcp.pop %v803
    %v805 = vmul.f32 1.0, %v804
    %v806 = vadd.f32 %v608, %v727
    %v807 = vxor.u32 %v806, 2147483648
    %v808 = vmul.f32 %v807, 1.442695
    %v809 = vpow.pop %v808
    %v810 = vadd.f32 %v809, 1.0
    %v811 = vrcp.pop %v810
    %v812 = vmul.f32 1.0, %v811
    %v813 = vadd.f32 %v796, %v596
    %v814 = vmul.f32 %v805, %v813
    %v815 = vadd.f32 %v609, %v814
    %v816 = vtanh.pop %v815
    %v817 = vsub.f32 %v604, %v816
    %v818 = vmul.f32 %v812, %v817
    %v819 = vadd.f32 %v816, %v818
    %s820 = scalar_lea.vmem [#allocation3], 8
    %821 = vst [vmem:[%s820] sm:$0xff] %v819
    %s822 = scalar_lea.vmem [#allocation2], 48
    %v823 = vld [vmem:[%s822] sm:$0xff]
    %v824 = vld [vmem:[%s822 + $0x8] sm:$0xff]
    %v825 = vld [vmem:[%s822 + $0x10] sm:$0xff]
    %v826 = vld [vmem:[#allocation6] sm:$0xff]
    %v827 = vld [vmem:[#allocation6 + $0x8] sm:$0xff]
    %v828 = vld [vmem:[#allocation6 + $0x10] sm:$0xff]
    %v829 = vld [vmem:[#allocation6 + $0x18] sm:$0xff]
    %v830 = vld [vmem:[#allocation6 + $0x20] sm:$0xff]
    %v831 = vld [vmem:[#allocation6 + $0x28] sm:$0xff]
    %v832 = vld [vmem:[#allocation6 + $0x30] sm:$0xff]
    %v833 = vld [vmem:[#allocation6 + $0x38] sm:$0xff]
    %v834 = vld [vmem:[#allocation6 + $0x40] sm:$0xff]
    %v835 = vld [vmem:[#allocation6 + $0x48] sm:$0xff]
    %v836 = vld [vmem:[#allocation6 + $0x50] sm:$0xff]
    %v837 = vld [vmem:[#allocation6 + $0x58] sm:$0xff]
    %v838 = vld [vmem:[#allocation6 + $0x60] sm:$0xff]
    %v839 = vld [vmem:[#allocation6 + $0x68] sm:$0xff]
    %v840 = vld [vmem:[#allocation6 + $0x70] sm:$0xff]
    %v841 = vld [vmem:[#allocation6 + $0x78] sm:$0xff]
    %v842 = vld [vmem:[#allocation6 + $0x80] sm:$0xff]
    %v843 = vld [vmem:[#allocation6 + $0x88] sm:$0xff]
    %v844 = vld [vmem:[#allocation6 + $0x90] sm:$0xff]
    %v845 = vld [vmem:[#allocation6 + $0x98] sm:$0xff]
    %v846 = vld [vmem:[#allocation6 + $0xa0] sm:$0xff]
    %v847 = vld [vmem:[#allocation6 + $0xa8] sm:$0xff]
    %v848 = vld [vmem:[#allocation6 + $0xb0] sm:$0xff]
    %v849 = vld [vmem:[#allocation6 + $0xb8] sm:$0xff]
    %v850 = vld [vmem:[#allocation6 + $0xc0] sm:$0xff]
    %v851 = vld [vmem:[#allocation6 + $0xc8] sm:$0xff]
    %v852 = vld [vmem:[#allocation6 + $0xd0] sm:$0xff]
    %v853 = vld [vmem:[#allocation6 + $0xd8] sm:$0xff]
    %v854 = vld [vmem:[#allocation6 + $0xe0] sm:$0xff]
    %v855 = vld [vmem:[#allocation6 + $0xe8] sm:$0xff]
    %v856 = vld [vmem:[#allocation6 + $0xf0] sm:$0xff]
    %v857 = vld [vmem:[#allocation6 + $0xf8] sm:$0xff]
    %v858 = vld [vmem:[#allocation6 + $0x100] sm:$0xff]
    %v859 = vld [vmem:[#allocation6 + $0x108] sm:$0xff]
    %v860 = vld [vmem:[#allocation6 + $0x110] sm:$0xff]
    %v861 = vld [vmem:[#allocation6 + $0x118] sm:$0xff]
    %v862 = vld [vmem:[#allocation6 + $0x120] sm:$0xff]
    %v863 = vld [vmem:[#allocation6 + $0x128] sm:$0xff]
    %v864 = vld [vmem:[#allocation6 + $0x130] sm:$0xff]
    %v865 = vld [vmem:[#allocation6 + $0x138] sm:$0xff]
    %v866 = vld [vmem:[#allocation6 + $0x140] sm:$0xff]
    %v867 = vld [vmem:[#allocation6 + $0x148] sm:$0xff]
    %v868 = vld [vmem:[#allocation6 + $0x150] sm:$0xff]
    %v869 = vld [vmem:[#allocation6 + $0x158] sm:$0xff]
    %v870 = vld [vmem:[#allocation6 + $0x160] sm:$0xff]
    %v871 = vld [vmem:[#allocation6 + $0x168] sm:$0xff]
    %v872 = vld [vmem:[#allocation6 + $0x170] sm:$0xff]
    %v873 = vld [vmem:[#allocation6 + $0x178] sm:$0xff]
    %874 = vmatprep.subr.mxu0 %v827
    %875 = vmatpush1.msra.mxu0 %v826
    %876 = vmatprep.subr.mxu0 %v830
    %877 = vmatpush1.msra.mxu0 %v829
    %878 = vmatprep.subr.mxu0 %v833
    %879 = vmatpush1.msra.mxu0 %v832
    %880 = vmatprep.subr.mxu0 %v836
    %881 = vmatpush1.msra.mxu0 %v835
    %882 = vmatprep.subr.mxu0 %v839
    %883 = vmatpush1.msra.mxu0 %v838
    %884 = vmatprep.subr.mxu0 %v842
    %885 = vmatpush1.msra.mxu0 %v841
    %886 = vmatprep.subr.mxu0 %v845
    %887 = vmatpush1.msra.mxu0 %v844
    %888 = vmatprep.subr.mxu0 %v848
    %889 = vmatpush1.msra.mxu0 %v847
    %890 = vmatprep.subr.mxu0 %v851
    %891 = vmatpush1.msra.mxu0 %v850
    %892 = vmatprep.subr.mxu0 %v854
    %893 = vmatpush1.msra.mxu0 %v853
    %894 = vmatprep.subr.mxu0 %v857
    %895 = vmatpush1.msra.mxu0 %v856
    %896 = vmatprep.subr.mxu0 %v860
    %897 = vmatpush1.msra.mxu0 %v859
    %898 = vmatprep.subr.mxu0 %v863
    %899 = vmatpush1.msra.mxu0 %v862
    %900 = vmatprep.subr.mxu0 %v866
    %901 = vmatpush1.msra.mxu0 %v865
    %902 = vmatprep.subr.mxu0 %v869
    %903 = vmatpush1.msra.mxu0 %v868
    %904 = vmatprep.subr.mxu0 %v872
    %905 = vmatpush1.msra.mxu0 %v871
    %906 = vmatprep.subr.mxu0 0.0
    %907 = vmatpush1.msra.mxu0 0.0
    %908 = vmatprep.subr.mxu0 0.0
    %909 = vmatpush1.msra.mxu0 0.0
    %910 = vmatprep.subr.mxu0 0.0
    %911 = vmatpush1.msra.mxu0 0.0
    %912 = vmatprep.subr.mxu0 0.0
    %913 = vmatpush1.msra.mxu0 0.0
    %914 = vmatprep.subr.mxu0 0.0
    %915 = vmatpush1.msra.mxu0 0.0
    %916 = vmatprep.subr.mxu0 0.0
    %917 = vmatpush1.msra.mxu0 0.0
    %918 = vmatprep.subr.mxu0 0.0
    %919 = vmatpush1.msra.mxu0 0.0
    %920 = vmatprep.subr.mxu0 0.0
    %921 = vmatpush1.msra.mxu0 0.0
    %922 = vmatprep.subr.mxu0 0.0
    %923 = vmatpush1.msra.mxu0 0.0
    %924 = vmatprep.subr.mxu0 0.0
    %925 = vmatpush1.msra.mxu0 0.0
    %926 = vmatprep.subr.mxu0 0.0
    %927 = vmatpush1.msra.mxu0 0.0
    %928 = vmatprep.subr.mxu0 0.0
    %929 = vmatpush1.msra.mxu0 0.0
    %930 = vmatprep.subr.mxu0 0.0
    %931 = vmatpush1.msra.mxu0 0.0
    %932 = vmatprep.subr.mxu0 0.0
    %933 = vmatpush1.msra.mxu0 0.0
    %934 = vmatprep.subr.mxu0 0.0
    %935 = vmatpush1.msra.mxu0 0.0
    %936 = vmatprep.subr.mxu0 0.0
    %937 = vmatpush1.msra.mxu0 0.0
    %938 = vmatprep.mubr.f32.mxu0 0.0
    %939 = vmatmul.mubr.f32.gmra.mrb[0].mxu0 %v819
    %v940 = vpop.f32.mrb[0].mxu0
    %v941 = vadd.f32 0.0, %v940
    %v942 = vpop.f32.mrb[0].mxu0
    %v943 = vadd.f32 0.0, %v942
    %944 = vdwg.mxu0
    %945 = vmatprep.subr.mxu0 0.0
    %946 = vmatpush1.msra.mxu0 %v828
    %947 = vmatprep.subr.mxu0 0.0
    %948 = vmatpush1.msra.mxu0 %v831
    %949 = vmatprep.subr.mxu0 0.0
    %950 = vmatpush1.msra.mxu0 %v834
    %951 = vmatprep.subr.mxu0 0.0
    %952 = vmatpush1.msra.mxu0 %v837
    %953 = vmatprep.subr.mxu0 0.0
    %954 = vmatpush1.msra.mxu0 %v840
    %955 = vmatprep.subr.mxu0 0.0
    %956 = vmatpush1.msra.mxu0 %v843
    %957 = vmatprep.subr.mxu0 0.0
    %958 = vmatpush1.msra.mxu0 %v846
    %959 = vmatprep.subr.mxu0 0.0
    %960 = vmatpush1.msra.mxu0 %v849
    %961 = vmatprep.subr.mxu0 0.0
    %962 = vmatpush1.msra.mxu0 %v852
    %963 = vmatprep.subr.mxu0 0.0
    %964 = vmatpush1.msra.mxu0 %v855
    %965 = vmatprep.subr.mxu0 0.0
    %966 = vmatpush1.msra.mxu0 %v858
    %967 = vmatprep.subr.mxu0 0.0
    %968 = vmatpush1.msra.mxu0 %v861
    %969 = vmatprep.subr.mxu0 0.0
    %970 = vmatpush1.msra.mxu0 %v864
    %971 = vmatprep.subr.mxu0 0.0
    %972 = vmatpush1.msra.mxu0 %v867
    %973 = vmatprep.subr.mxu0 0.0
    %974 = vmatpush1.msra.mxu0 %v870
    %975 = vmatprep.subr.mxu0 0.0
    %976 = vmatpush1.msra.mxu0 %v873
    %977 = vmatprep.subr.mxu0 0.0
    %978 = vmatpush1.msra.mxu0 0.0
    %979 = vmatprep.subr.mxu0 0.0
    %980 = vmatpush1.msra.mxu0 0.0
    %981 = vmatprep.subr.mxu0 0.0
    %982 = vmatpush1.msra.mxu0 0.0
    %983 = vmatprep.subr.mxu0 0.0
    %984 = vmatpush1.msra.mxu0 0.0
    %985 = vmatprep.subr.mxu0 0.0
    %986 = vmatpush1.msra.mxu0 0.0
    %987 = vmatprep.subr.mxu0 0.0
    %988 = vmatpush1.msra.mxu0 0.0
    %989 = vmatprep.subr.mxu0 0.0
    %990 = vmatpush1.msra.mxu0 0.0
    %991 = vmatprep.subr.mxu0 0.0
    %992 = vmatpush1.msra.mxu0 0.0
    %993 = vmatprep.subr.mxu0 0.0
    %994 = vmatpush1.msra.mxu0 0.0
    %995 = vmatprep.subr.mxu0 0.0
    %996 = vmatpush1.msra.mxu0 0.0
    %997 = vmatprep.subr.mxu0 0.0
    %998 = vmatpush1.msra.mxu0 0.0
    %999 = vmatprep.subr.mxu0 0.0
    %1000 = vmatpush1.msra.mxu0 0.0
    %1001 = vmatprep.subr.mxu0 0.0
    %1002 = vmatpush1.msra.mxu0 0.0
    %1003 = vmatprep.subr.mxu0 0.0
    %1004 = vmatpush1.msra.mxu0 0.0
    %1005 = vmatprep.subr.mxu0 0.0
    %1006 = vmatpush1.msra.mxu0 0.0
    %1007 = vmatprep.subr.mxu0 0.0
    %1008 = vmatpush1.msra.mxu0 0.0
    %1009 = vmatprep.mubr.f32.mxu0 0.0
    %1010 = vmatmul.mubr.f32.gmra.mrb[0].mxu0 %v819
    %v1011 = vpop.f32.mrb[0].mxu0
    %v1012 = vadd.f32 0.0, %v1011
    %v1013 = vpop.f32.mrb[0].mxu0
    %1014 = vdwg.mxu0
    %v1015 = vadd.f32 %v823, %v941
    %v1016 = vxor.u32 %v1015, 2147483648
    %v1017 = vmul.f32 %v1016, 1.442695
    %v1018 = vpow.pop %v1017
    %v1019 = vadd.f32 %v1018, 1.0
    %v1020 = vrcp.pop %v1019
    %v1021 = vmul.f32 1.0, %v1020
    %v1022 = vadd.f32 %v824, %v943
    %v1023 = vxor.u32 %v1022, 2147483648
    %v1024 = vmul.f32 %v1023, 1.442695
    %v1025 = vpow.pop %v1024
    %v1026 = vadd.f32 %v1025, 1.0
    %v1027 = vrcp.pop %v1026
    %v1028 = vmul.f32 1.0, %v1027
    %v1029 = vadd.f32 %v1012, %v596
    %v1030 = vmul.f32 %v1021, %v1029
    %v1031 = vadd.f32 %v825, %v1030
    %v1032 = vtanh.pop %v1031
    %v1033 = vsub.f32 %v819, %v1032
    %v1034 = vmul.f32 %v1028, %v1033
    %v1035 = vadd.f32 %v1032, %v1034
    %s1036 = scalar_lea.vmem [#allocation3], 16
    %1037 = vst [vmem:[%s1036] sm:$0xff] %v1035
    %s1038 = scalar_lea.vmem [#allocation2], 72
    %v1039 = vld [vmem:[%s1038] sm:$0xff]
    %v1040 = vld [vmem:[%s1038 + $0x8] sm:$0xff]
    %v1041 = vld [vmem:[%s1038 + $0x10] sm:$0xff]
    %v1042 = vld [vmem:[#allocation6] sm:$0xff]
    %v1043 = vld [vmem:[#allocation6 + $0x8] sm:$0xff]
    %v1044 = vld [vmem:[#allocation6 + $0x10] sm:$0xff]
    %v1045 = vld [vmem:[#allocation6 + $0x18] sm:$0xff]
    %v1046 = vld [vmem:[#allocation6 + $0x20] sm:$0xff]
    %v1047 = vld [vmem:[#allocation6 + $0x28] sm:$0xff]
    %v1048 = vld [vmem:[#allocation6 + $0x30] sm:$0xff]
    %v1049 = vld [vmem:[#allocation6 + $0x38] sm:$0xff]
    %v1050 = vld [vmem:[#allocation6 + $0x40] sm:$0xff]
    %v1051 = vld [vmem:[#allocation6 + $0x48] sm:$0xff]
    %v1052 = vld [vmem:[#allocation6 + $0x50] sm:$0xff]
    %v1053 = vld [vmem:[#allocation6 + $0x58] sm:$0xff]
    %v1054 = vld [vmem:[#allocation6 + $0x60] sm:$0xff]
    %v1055 = vld [vmem:[#allocation6 + $0x68] sm:$0xff]
    %v1056 = vld [vmem:[#allocation6 + $0x70] sm:$0xff]
    %v1057 = vld [vmem:[#allocation6 + $0x78] sm:$0xff]
    %v1058 = vld [vmem:[#allocation6 + $0x80] sm:$0xff]
    %v1059 = vld [vmem:[#allocation6 + $0x88] sm:$0xff]
    %v1060 = vld [vmem:[#allocation6 + $0x90] sm:$0xff]
    %v1061 = vld [vmem:[#allocation6 + $0x98] sm:$0xff]
    %v1062 = vld [vmem:[#allocation6 + $0xa0] sm:$0xff]
    %v1063 = vld [vmem:[#allocation6 + $0xa8] sm:$0xff]
    %v1064 = vld [vmem:[#allocation6 + $0xb0] sm:$0xff]
    %v1065 = vld [vmem:[#allocation6 + $0xb8] sm:$0xff]
    %v1066 = vld [vmem:[#allocation6 + $0xc0] sm:$0xff]
    %v1067 = vld [vmem:[#allocation6 + $0xc8] sm:$0xff]
    %v1068 = vld [vmem:[#allocation6 + $0xd0] sm:$0xff]
    %v1069 = vld [vmem:[#allocation6 + $0xd8] sm:$0xff]
    %v1070 = vld [vmem:[#allocation6 + $0xe0] sm:$0xff]
    %v1071 = vld [vmem:[#allocation6 + $0xe8] sm:$0xff]
    %v1072 = vld [vmem:[#allocation6 + $0xf0] sm:$0xff]
    %v1073 = vld [vmem:[#allocation6 + $0xf8] sm:$0xff]
    %v1074 = vld [vmem:[#allocation6 + $0x100] sm:$0xff]
    %v1075 = vld [vmem:[#allocation6 + $0x108] sm:$0xff]
    %v1076 = vld [vmem:[#allocation6 + $0x110] sm:$0xff]
    %v1077 = vld [vmem:[#allocation6 + $0x118] sm:$0xff]
    %v1078 = vld [vmem:[#allocation6 + $0x120] sm:$0xff]
    %v1079 = vld [vmem:[#allocation6 + $0x128] sm:$0xff]
    %v1080 = vld [vmem:[#allocation6 + $0x130] sm:$0xff]
    %v1081 = vld [vmem:[#allocation6 + $0x138] sm:$0xff]
    %v1082 = vld [vmem:[#allocation6 + $0x140] sm:$0xff]
    %v1083 = vld [vmem:[#allocation6 + $0x148] sm:$0xff]
    %v1084 = vld [vmem:[#allocation6 + $0x150] sm:$0xff]
    %v1085 = vld [vmem:[#allocation6 + $0x158] sm:$0xff]
    %v1086 = vld [vmem:[#allocation6 + $0x160] sm:$0xff]
    %v1087 = vld [vmem:[#allocation6 + $0x168] sm:$0xff]
    %v1088 = vld [vmem:[#allocation6 + $0x170] sm:$0xff]
    %v1089 = vld [vmem:[#allocation6 + $0x178] sm:$0xff]
    %1090 = vmatprep.subr.mxu0 %v1043
    %1091 = vmatpush1.msra.mxu0 %v1042
    %1092 = vmatprep.subr.mxu0 %v1046
    %1093 = vmatpush1.msra.mxu0 %v1045
    %1094 = vmatprep.subr.mxu0 %v1049
    %1095 = vmatpush1.msra.mxu0 %v1048
    %1096 = vmatprep.subr.mxu0 %v1052
    %1097 = vmatpush1.msra.mxu0 %v1051
    %1098 = vmatprep.subr.mxu0 %v1055
    %1099 = vmatpush1.msra.mxu0 %v1054
    %1100 = vmatprep.subr.mxu0 %v1058
    %1101 = vmatpush1.msra.mxu0 %v1057
    %1102 = vmatprep.subr.mxu0 %v1061
    %1103 = vmatpush1.msra.mxu0 %v1060
    %1104 = vmatprep.subr.mxu0 %v1064
    %1105 = vmatpush1.msra.mxu0 %v1063
    %1106 = vmatprep.subr.mxu0 %v1067
    %1107 = vmatpush1.msra.mxu0 %v1066
    %1108 = vmatprep.subr.mxu0 %v1070
    %1109 = vmatpush1.msra.mxu0 %v1069
    %1110 = vmatprep.subr.mxu0 %v1073
    %1111 = vmatpush1.msra.mxu0 %v1072
    %1112 = vmatprep.subr.mxu0 %v1076
    %1113 = vmatpush1.msra.mxu0 %v1075
    %1114 = vmatprep.subr.mxu0 %v1079
    %1115 = vmatpush1.msra.mxu0 %v1078
    %1116 = vmatprep.subr.mxu0 %v1082
    %1117 = vmatpush1.msra.mxu0 %v1081
    %1118 = vmatprep.subr.mxu0 %v1085
    %1119 = vmatpush1.msra.mxu0 %v1084
    %1120 = vmatprep.subr.mxu0 %v1088
    %1121 = vmatpush1.msra.mxu0 %v1087
    %1122 = vmatprep.subr.mxu0 0.0
    %1123 = vmatpush1.msra.mxu0 0.0
    %1124 = vmatprep.subr.mxu0 0.0
    %1125 = vmatpush1.msra.mxu0 0.0
    %1126 = vmatprep.subr.mxu0 0.0
    %1127 = vmatpush1.msra.mxu0 0.0
    %1128 = vmatprep.subr.mxu0 0.0
    %1129 = vmatpush1.msra.mxu0 0.0
    %1130 = vmatprep.subr.mxu0 0.0
    %1131 = vmatpush1.msra.mxu0 0.0
    %1132 = vmatprep.subr.mxu0 0.0
    %1133 = vmatpush1.msra.mxu0 0.0
    %1134 = vmatprep.subr.mxu0 0.0
    %1135 = vmatpush1.msra.mxu0 0.0
    %1136 = vmatprep.subr.mxu0 0.0
    %1137 = vmatpush1.msra.mxu0 0.0
    %1138 = vmatprep.subr.mxu0 0.0
    %1139 = vmatpush1.msra.mxu0 0.0
    %1140 = vmatprep.subr.mxu0 0.0
    %1141 = vmatpush1.msra.mxu0 0.0
    %1142 = vmatprep.subr.mxu0 0.0
    %1143 = vmatpush1.msra.mxu0 0.0
    %1144 = vmatprep.subr.mxu0 0.0
    %1145 = vmatpush1.msra.mxu0 0.0
    %1146 = vmatprep.subr.mxu0 0.0
    %1147 = vmatpush1.msra.mxu0 0.0
    %1148 = vmatprep.subr.mxu0 0.0
    %1149 = vmatpush1.msra.mxu0 0.0
    %1150 = vmatprep.subr.mxu0 0.0
    %1151 = vmatpush1.msra.mxu0 0.0
    %1152 = vmatprep.subr.mxu0 0.0
    %1153 = vmatpush1.msra.mxu0 0.0
    %1154 = vmatprep.mubr.f32.mxu0 0.0
    %1155 = vmatmul.mubr.f32.gmra.mrb[0].mxu0 %v1035
    %v1156 = vpop.f32.mrb[0].mxu0
    %v1157 = vadd.f32 0.0, %v1156
    %v1158 = vpop.f32.mrb[0].mxu0
    %v1159 = vadd.f32 0.0, %v1158
    %1160 = vdwg.mxu0
    %1161 = vmatprep.subr.mxu0 0.0
    %1162 = vmatpush1.msra.mxu0 %v1044
    %1163 = vmatprep.subr.mxu0 0.0
    %1164 = vmatpush1.msra.mxu0 %v1047
    %1165 = vmatprep.subr.mxu0 0.0
    %1166 = vmatpush1.msra.mxu0 %v1050
    %1167 = vmatprep.subr.mxu0 0.0
    %1168 = vmatpush1.msra.mxu0 %v1053
    %1169 = vmatprep.subr.mxu0 0.0
    %1170 = vmatpush1.msra.mxu0 %v1056
    %1171 = vmatprep.subr.mxu0 0.0
    %1172 = vmatpush1.msra.mxu0 %v1059
    %1173 = vmatprep.subr.mxu0 0.0
    %1174 = vmatpush1.msra.mxu0 %v1062
    %1175 = vmatprep.subr.mxu0 0.0
    %1176 = vmatpush1.msra.mxu0 %v1065
    %1177 = vmatprep.subr.mxu0 0.0
    %1178 = vmatpush1.msra.mxu0 %v1068
    %1179 = vmatprep.subr.mxu0 0.0
    %1180 = vmatpush1.msra.mxu0 %v1071
    %1181 = vmatprep.subr.mxu0 0.0
    %1182 = vmatpush1.msra.mxu0 %v1074
    %1183 = vmatprep.subr.mxu0 0.0
    %1184 = vmatpush1.msra.mxu0 %v1077
    %1185 = vmatprep.subr.mxu0 0.0
    %1186 = vmatpush1.msra.mxu0 %v1080
    %1187 = vmatprep.subr.mxu0 0.0
    %1188 = vmatpush1.msra.mxu0 %v1083
    %1189 = vmatprep.subr.mxu0 0.0
    %1190 = vmatpush1.msra.mxu0 %v1086
    %1191 = vmatprep.subr.mxu0 0.0
    %1192 = vmatpush1.msra.mxu0 %v1089
    %1193 = vmatprep.subr.mxu0 0.0
    %1194 = vmatpush1.msra.mxu0 0.0
    %1195 = vmatprep.subr.mxu0 0.0
    %1196 = vmatpush1.msra.mxu0 0.0
    %1197 = vmatprep.subr.mxu0 0.0
    %1198 = vmatpush1.msra.mxu0 0.0
    %1199 = vmatprep.subr.mxu0 0.0
    %1200 = vmatpush1.msra.mxu0 0.0
    %1201 = vmatprep.subr.mxu0 0.0
    %1202 = vmatpush1.msra.mxu0 0.0
    %1203 = vmatprep.subr.mxu0 0.0
    %1204 = vmatpush1.msra.mxu0 0.0
    %1205 = vmatprep.subr.mxu0 0.0
    %1206 = vmatpush1.msra.mxu0 0.0
    %1207 = vmatprep.subr.mxu0 0.0
    %1208 = vmatpush1.msra.mxu0 0.0
    %1209 = vmatprep.subr.mxu0 0.0
    %1210 = vmatpush1.msra.mxu0 0.0
    %1211 = vmatprep.subr.mxu0 0.0
    %1212 = vmatpush1.msra.mxu0 0.0
    %1213 = vmatprep.subr.mxu0 0.0
    %1214 = vmatpush1.msra.mxu0 0.0
    %1215 = vmatprep.subr.mxu0 0.0
    %1216 = vmatpush1.msra.mxu0 0.0
    %1217 = vmatprep.subr.mxu0 0.0
    %1218 = vmatpush1.msra.mxu0 0.0
    %1219 = vmatprep.subr.mxu0 0.0
    %1220 = vmatpush1.msra.mxu0 0.0
    %1221 = vmatprep.subr.mxu0 0.0
    %1222 = vmatpush1.msra.mxu0 0.0
    %1223 = vmatprep.subr.mxu0 0.0
    %1224 = vmatpush1.msra.mxu0 0.0
    %1225 = vmatprep.mubr.f32.mxu0 0.0
    %1226 = vmatmul.mubr.f32.gmra.mrb[0].mxu0 %v1035
    %v1227 = vpop.f32.mrb[0].mxu0
    %v1228 = vadd.f32 0.0, %v1227
    %v1229 = vpop.f32.mrb[0].mxu0
    %1230 = vdwg.mxu0
    %v1231 = vadd.f32 %v1039, %v1157
    %v1232 = vxor.u32 %v1231, 2147483648
    %v1233 = vmul.f32 %v1232, 1.442695
    %v1234 = vpow.pop %v1233
    %v1235 = vadd.f32 %v1234, 1.0
    %v1236 = vrcp.pop %v1235
    %v1237 = vmul.f32 1.0, %v1236
    %v1238 = vadd.f32 %v1040, %v1159
    %v1239 = vxor.u32 %v1238, 2147483648
    %v1240 = vmul.f32 %v1239, 1.442695
    %v1241 = vpow.pop %v1240
    %v1242 = vadd.f32 %v1241, 1.0
    %v1243 = vrcp.pop %v1242
    %v1244 = vmul.f32 1.0, %v1243
    %v1245 = vadd.f32 %v1228, %v596
    %v1246 = vmul.f32 %v1237, %v1245
    %v1247 = vadd.f32 %v1041, %v1246
    %v1248 = vtanh.pop %v1247
    %v1249 = vsub.f32 %v1035, %v1248
    %v1250 = vmul.f32 %v1244, %v1249
    %v1251 = vadd.f32 %v1248, %v1250
    %s1252 = scalar_lea.vmem [#allocation3], 24
    %1253 = vst [vmem:[%s1252] sm:$0xff] %v1251
    %s1254 = scalar_lea.vmem [#allocation2], 96
    %v1255 = vld [vmem:[%s1254] sm:$0xff]
    %v1256 = vld [vmem:[%s1254 + $0x8] sm:$0xff]
    %v1257 = vld [vmem:[%s1254 + $0x10] sm:$0xff]
    %v1258 = vld [vmem:[#allocation6] sm:$0xff]
    %v1259 = vld [vmem:[#allocation6 + $0x8] sm:$0xff]
    %v1260 = vld [vmem:[#allocation6 + $0x10] sm:$0xff]
    %v1261 = vld [vmem:[#allocation6 + $0x18] sm:$0xff]
    %v1262 = vld [vmem:[#allocation6 + $0x20] sm:$0xff]
    %v1263 = vld [vmem:[#allocation6 + $0x28] sm:$0xff]
    %v1264 = vld [vmem:[#allocation6 + $0x30] sm:$0xff]
    %v1265 = vld [vmem:[#allocation6 + $0x38] sm:$0xff]
    %v1266 = vld [vmem:[#allocation6 + $0x40] sm:$0xff]
    %v1267 = vld [vmem:[#allocation6 + $0x48] sm:$0xff]
    %v1268 = vld [vmem:[#allocation6 + $0x50] sm:$0xff]
    %v1269 = vld [vmem:[#allocation6 + $0x58] sm:$0xff]
    %v1270 = vld [vmem:[#allocation6 + $0x60] sm:$0xff]
    %v1271 = vld [vmem:[#allocation6 + $0x68] sm:$0xff]
    %v1272 = vld [vmem:[#allocation6 + $0x70] sm:$0xff]
    %v1273 = vld [vmem:[#allocation6 + $0x78] sm:$0xff]
    %v1274 = vld [vmem:[#allocation6 + $0x80] sm:$0xff]
    %v1275 = vld [vmem:[#allocation6 + $0x88] sm:$0xff]
    %v1276 = vld [vmem:[#allocation6 + $0x90] sm:$0xff]
    %v1277 = vld [vmem:[#allocation6 + $0x98] sm:$0xff]
    %v1278 = vld [vmem:[#allocation6 + $0xa0] sm:$0xff]
    %v1279 = vld [vmem:[#allocation6 + $0xa8] sm:$0xff]
    %v1280 = vld [vmem:[#allocation6 + $0xb0] sm:$0xff]
    %v1281 = vld [vmem:[#allocation6 + $0xb8] sm:$0xff]
    %v1282 = vld [vmem:[#allocation6 + $0xc0] sm:$0xff]
    %v1283 = vld [vmem:[#allocation6 + $0xc8] sm:$0xff]
    %v1284 = vld [vmem:[#allocation6 + $0xd0] sm:$0xff]
    %v1285 = vld [vmem:[#allocation6 + $0xd8] sm:$0xff]
    %v1286 = vld [vmem:[#allocation6 + $0xe0] sm:$0xff]
    %v1287 = vld [vmem:[#allocation6 + $0xe8] sm:$0xff]
    %v1288 = vld [vmem:[#allocation6 + $0xf0] sm:$0xff]
    %v1289 = vld [vmem:[#allocation6 + $0xf8] sm:$0xff]
    %v1290 = vld [vmem:[#allocation6 + $0x100] sm:$0xff]
    %v1291 = vld [vmem:[#allocation6 + $0x108] sm:$0xff]
    %v1292 = vld [vmem:[#allocation6 + $0x110] sm:$0xff]
    %v1293 = vld [vmem:[#allocation6 + $0x118] sm:$0xff]
    %v1294 = vld [vmem:[#allocation6 + $0x120] sm:$0xff]
    %v1295 = vld [vmem:[#allocation6 + $0x128] sm:$0xff]
    %v1296 = vld [vmem:[#allocation6 + $0x130] sm:$0xff]
    %v1297 = vld [vmem:[#allocation6 + $0x138] sm:$0xff]
    %v1298 = vld [vmem:[#allocation6 + $0x140] sm:$0xff]
    %v1299 = vld [vmem:[#allocation6 + $0x148] sm:$0xff]
    %v1300 = vld [vmem:[#allocation6 + $0x150] sm:$0xff]
    %v1301 = vld [vmem:[#allocation6 + $0x158] sm:$0xff]
    %v1302 = vld [vmem:[#allocation6 + $0x160] sm:$0xff]
    %v1303 = vld [vmem:[#allocation6 + $0x168] sm:$0xff]
    %v1304 = vld [vmem:[#allocation6 + $0x170] sm:$0xff]
    %v1305 = vld [vmem:[#allocation6 + $0x178] sm:$0xff]
    %1306 = vmatprep.subr.mxu0 %v1259
    %1307 = vmatpush1.msra.mxu0 %v1258
    %1308 = vmatprep.subr.mxu0 %v1262
    %1309 = vmatpush1.msra.mxu0 %v1261
    %1310 = vmatprep.subr.mxu0 %v1265
    %1311 = vmatpush1.msra.mxu0 %v1264
    %1312 = vmatprep.subr.mxu0 %v1268
    %1313 = vmatpush1.msra.mxu0 %v1267
    %1314 = vmatprep.subr.mxu0 %v1271
    %1315 = vmatpush1.msra.mxu0 %v1270
    %1316 = vmatprep.subr.mxu0 %v1274
    %1317 = vmatpush1.msra.mxu0 %v1273
    %1318 = vmatprep.subr.mxu0 %v1277
    %1319 = vmatpush1.msra.mxu0 %v1276
    %1320 = vmatprep.subr.mxu0 %v1280
    %1321 = vmatpush1.msra.mxu0 %v1279
    %1322 = vmatprep.subr.mxu0 %v1283
    %1323 = vmatpush1.msra.mxu0 %v1282
    %1324 = vmatprep.subr.mxu0 %v1286
    %1325 = vmatpush1.msra.mxu0 %v1285
    %1326 = vmatprep.subr.mxu0 %v1289
    %1327 = vmatpush1.msra.mxu0 %v1288
    %1328 = vmatprep.subr.mxu0 %v1292
    %1329 = vmatpush1.msra.mxu0 %v1291
    %1330 = vmatprep.subr.mxu0 %v1295
    %1331 = vmatpush1.msra.mxu0 %v1294
    %1332 = vmatprep.subr.mxu0 %v1298
    %1333 = vmatpush1.msra.mxu0 %v1297
    %1334 = vmatprep.subr.mxu0 %v1301
    %1335 = vmatpush1.msra.mxu0 %v1300
    %1336 = vmatprep.subr.mxu0 %v1304
    %1337 = vmatpush1.msra.mxu0 %v1303
    %1338 = vmatprep.subr.mxu0 0.0
    %1339 = vmatpush1.msra.mxu0 0.0
    %1340 = vmatprep.subr.mxu0 0.0
    %1341 = vmatpush1.msra.mxu0 0.0
    %1342 = vmatprep.subr.mxu0 0.0
    %1343 = vmatpush1.msra.mxu0 0.0
    %1344 = vmatprep.subr.mxu0 0.0
    %1345 = vmatpush1.msra.mxu0 0.0
    %1346 = vmatprep.subr.mxu0 0.0
    %1347 = vmatpush1.msra.mxu0 0.0
    %1348 = vmatprep.subr.mxu0 0.0
    %1349 = vmatpush1.msra.mxu0 0.0
    %1350 = vmatprep.subr.mxu0 0.0
    %1351 = vmatpush1.msra.mxu0 0.0
    %1352 = vmatprep.subr.mxu0 0.0
    %1353 = vmatpush1.msra.mxu0 0.0
    %1354 = vmatprep.subr.mxu0 0.0
    %1355 = vmatpush1.msra.mxu0 0.0
    %1356 = vmatprep.subr.mxu0 0.0
    %1357 = vmatpush1.msra.mxu0 0.0
    %1358 = vmatprep.subr.mxu0 0.0
    %1359 = vmatpush1.msra.mxu0 0.0
    %1360 = vmatprep.subr.mxu0 0.0
    %1361 = vmatpush1.msra.mxu0 0.0
    %1362 = vmatprep.subr.mxu0 0.0
    %1363 = vmatpush1.msra.mxu0 0.0
    %1364 = vmatprep.subr.mxu0 0.0
    %1365 = vmatpush1.msra.mxu0 0.0
    %1366 = vmatprep.subr.mxu0 0.0
    %1367 = vmatpush1.msra.mxu0 0.0
    %1368 = vmatprep.subr.mxu0 0.0
    %1369 = vmatpush1.msra.mxu0 0.0
    %1370 = vmatprep.mubr.f32.mxu0 0.0
    %1371 = vmatmul.mubr.f32.gmra.mrb[0].mxu0 %v1251
    %v1372 = vpop.f32.mrb[0].mxu0
    %v1373 = vadd.f32 0.0, %v1372
    %v1374 = vpop.f32.mrb[0].mxu0
    %v1375 = vadd.f32 0.0, %v1374
    %1376 = vdwg.mxu0
    %1377 = vmatprep.subr.mxu0 0.0
    %1378 = vmatpush1.msra.mxu0 %v1260
    %1379 = vmatprep.subr.mxu0 0.0
    %1380 = vmatpush1.msra.mxu0 %v1263
    %1381 = vmatprep.subr.mxu0 0.0
    %1382 = vmatpush1.msra.mxu0 %v1266
    %1383 = vmatprep.subr.mxu0 0.0
    %1384 = vmatpush1.msra.mxu0 %v1269
    %1385 = vmatprep.subr.mxu0 0.0
    %1386 = vmatpush1.msra.mxu0 %v1272
    %1387 = vmatprep.subr.mxu0 0.0
    %1388 = vmatpush1.msra.mxu0 %v1275
    %1389 = vmatprep.subr.mxu0 0.0
    %1390 = vmatpush1.msra.mxu0 %v1278
    %1391 = vmatprep.subr.mxu0 0.0
    %1392 = vmatpush1.msra.mxu0 %v1281
    %1393 = vmatprep.subr.mxu0 0.0
    %1394 = vmatpush1.msra.mxu0 %v1284
    %1395 = vmatprep.subr.mxu0 0.0
    %1396 = vmatpush1.msra.mxu0 %v1287
    %1397 = vmatprep.subr.mxu0 0.0
    %1398 = vmatpush1.msra.mxu0 %v1290
    %1399 = vmatprep.subr.mxu0 0.0
    %1400 = vmatpush1.msra.mxu0 %v1293
    %1401 = vmatprep.subr.mxu0 0.0
    %1402 = vmatpush1.msra.mxu0 %v1296
    %1403 = vmatprep.subr.mxu0 0.0
    %1404 = vmatpush1.msra.mxu0 %v1299
    %1405 = vmatprep.subr.mxu0 0.0
    %1406 = vmatpush1.msra.mxu0 %v1302
    %1407 = vmatprep.subr.mxu0 0.0
    %1408 = vmatpush1.msra.mxu0 %v1305
    %1409 = vmatprep.subr.mxu0 0.0
    %1410 = vmatpush1.msra.mxu0 0.0
    %1411 = vmatprep.subr.mxu0 0.0
    %1412 = vmatpush1.msra.mxu0 0.0
    %1413 = vmatprep.subr.mxu0 0.0
    %1414 = vmatpush1.msra.mxu0 0.0
    %1415 = vmatprep.subr.mxu0 0.0
    %1416 = vmatpush1.msra.mxu0 0.0
    %1417 = vmatprep.subr.mxu0 0.0
    %1418 = vmatpush1.msra.mxu0 0.0
    %1419 = vmatprep.subr.mxu0 0.0
    %1420 = vmatpush1.msra.mxu0 0.0
    %1421 = vmatprep.subr.mxu0 0.0
    %1422 = vmatpush1.msra.mxu0 0.0
    %1423 = vmatprep.subr.mxu0 0.0
    %1424 = vmatpush1.msra.mxu0 0.0
    %1425 = vmatprep.subr.mxu0 0.0
    %1426 = vmatpush1.msra.mxu0 0.0
    %1427 = vmatprep.subr.mxu0 0.0
    %1428 = vmatpush1.msra.mxu0 0.0
    %1429 = vmatprep.subr.mxu0 0.0
    %1430 = vmatpush1.msra.mxu0 0.0
    %1431 = vmatprep.subr.mxu0 0.0
    %1432 = vmatpush1.msra.mxu0 0.0
    %1433 = vmatprep.subr.mxu0 0.0
    %1434 = vmatpush1.msra.mxu0 0.0
    %1435 = vmatprep.subr.mxu0 0.0
    %1436 = vmatpush1.msra.mxu0 0.0
    %1437 = vmatprep.subr.mxu0 0.0
    %1438 = vmatpush1.msra.mxu0 0.0
    %1439 = vmatprep.subr.mxu0 0.0
    %1440 = vmatpush1.msra.mxu0 0.0
    %1441 = vmatprep.mubr.f32.mxu0 0.0
    %1442 = vmatmul.mubr.f32.gmra.mrb[0].mxu0 %v1251
    %v1443 = vpop.f32.mrb[0].mxu0
    %v1444 = vadd.f32 0.0, %v1443
    %v1445 = vpop.f32.mrb[0].mxu0
    %1446 = vdwg.mxu0
    %v1447 = vadd.f32 %v1255, %v1373
    %v1448 = vxor.u32 %v1447, 2147483648
    %v1449 = vmul.f32 %v1448, 1.442695
    %v1450 = vpow.pop %v1449
    %v1451 = vadd.f32 %v1450, 1.0
    %v1452 = vrcp.pop %v1451
    %v1453 = vmul.f32 1.0, %v1452
    %v1454 = vadd.f32 %v1256, %v1375
    %v1455 = vxor.u32 %v1454, 2147483648
    %v1456 = vmul.f32 %v1455, 1.442695
    %v1457 = vpow.pop %v1456
    %v1458 = vadd.f32 %v1457, 1.0
    %v1459 = vrcp.pop %v1458
    %v1460 = vmul.f32 1.0, %v1459
    %v1461 = vadd.f32 %v1444, %v596
    %v1462 = vmul.f32 %v1453, %v1461
    %v1463 = vadd.f32 %v1257, %v1462
    %v1464 = vtanh.pop %v1463
    %v1465 = vsub.f32 %v1251, %v1464
    %v1466 = vmul.f32 %v1460, %v1465
    %v1467 = vadd.f32 %v1464, %v1466
    %s1468 = scalar_lea.vmem [#allocation3], 32
    %1469 = vst [vmem:[%s1468] sm:$0xff] %v1467
    %s1470 = scalar_lea.vmem [#allocation2], 120
    %v1471 = vld [vmem:[%s1470] sm:$0xff]
    %v1472 = vld [vmem:[%s1470 + $0x8] sm:$0xff]
    %v1473 = vld [vmem:[%s1470 + $0x10] sm:$0xff]
    %v1474 = vld [vmem:[#allocation6] sm:$0xff]
    %v1475 = vld [vmem:[#allocation6 + $0x8] sm:$0xff]
    %v1476 = vld [vmem:[#allocation6 + $0x10] sm:$0xff]
    %v1477 = vld [vmem:[#allocation6 + $0x18] sm:$0xff]
    %v1478 = vld [vmem:[#allocation6 + $0x20] sm:$0xff]
    %v1479 = vld [vmem:[#allocation6 + $0x28] sm:$0xff]
    %v1480 = vld [vmem:[#allocation6 + $0x30] sm:$0xff]
    %v1481 = vld [vmem:[#allocation6 + $0x38] sm:$0xff]
    %v1482 = vld [vmem:[#allocation6 + $0x40] sm:$0xff]
    %v1483 = vld [vmem:[#allocation6 + $0x48] sm:$0xff]
    %v1484 = vld [vmem:[#allocation6 + $0x50] sm:$0xff]
    %v1485 = vld [vmem:[#allocation6 + $0x58] sm:$0xff]
    %v1486 = vld [vmem:[#allocation6 + $0x60] sm:$0xff]
    %v1487 = vld [vmem:[#allocation6 + $0x68] sm:$0xff]
    %v1488 = vld [vmem:[#allocation6 + $0x70] sm:$0xff]
    %v1489 = vld [vmem:[#allocation6 + $0x78] sm:$0xff]
    %v1490 = vld [vmem:[#allocation6 + $0x80] sm:$0xff]
    %v1491 = vld [vmem:[#allocation6 + $0x88] sm:$0xff]
    %v1492 = vld [vmem:[#allocation6 + $0x90] sm:$0xff]
    %v1493 = vld [vmem:[#allocation6 + $0x98] sm:$0xff]
    %v1494 = vld [vmem:[#allocation6 + $0xa0] sm:$0xff]
    %v1495 = vld [vmem:[#allocation6 + $0xa8] sm:$0xff]
    %v1496 = vld [vmem:[#allocation6 + $0xb0] sm:$0xff]
    %v1497 = vld [vmem:[#allocation6 + $0xb8] sm:$0xff]
    %v1498 = vld [vmem:[#allocation6 + $0xc0] sm:$0xff]
    %v1499 = vld [vmem:[#allocation6 + $0xc8] sm:$0xff]
    %v1500 = vld [vmem:[#allocation6 + $0xd0] sm:$0xff]
    %v1501 = vld [vmem:[#allocation6 + $0xd8] sm:$0xff]
    %v1502 = vld [vmem:[#allocation6 + $0xe0] sm:$0xff]
    %v1503 = vld [vmem:[#allocation6 + $0xe8] sm:$0xff]
    %v1504 = vld [vmem:[#allocation6 + $0xf0] sm:$0xff]
    %v1505 = vld [vmem:[#allocation6 + $0xf8] sm:$0xff]
    %v1506 = vld [vmem:[#allocation6 + $0x100] sm:$0xff]
    %v1507 = vld [vmem:[#allocation6 + $0x108] sm:$0xff]
    %v1508 = vld [vmem:[#allocation6 + $0x110] sm:$0xff]
    %v1509 = vld [vmem:[#allocation6 + $0x118] sm:$0xff]
    %v1510 = vld [vmem:[#allocation6 + $0x120] sm:$0xff]
    %v1511 = vld [vmem:[#allocation6 + $0x128] sm:$0xff]
    %v1512 = vld [vmem:[#allocation6 + $0x130] sm:$0xff]
    %v1513 = vld [vmem:[#allocation6 + $0x138] sm:$0xff]
    %v1514 = vld [vmem:[#allocation6 + $0x140] sm:$0xff]
    %v1515 = vld [vmem:[#allocation6 + $0x148] sm:$0xff]
    %v1516 = vld [vmem:[#allocation6 + $0x150] sm:$0xff]
    %v1517 = vld [vmem:[#allocation6 + $0x158] sm:$0xff]
    %v1518 = vld [vmem:[#allocation6 + $0x160] sm:$0xff]
    %v1519 = vld [vmem:[#allocation6 + $0x168] sm:$0xff]
    %v1520 = vld [vmem:[#allocation6 + $0x170] sm:$0xff]
    %v1521 = vld [vmem:[#allocation6 + $0x178] sm:$0xff]
    %1522 = vmatprep.subr.mxu0 %v1475
    %1523 = vmatpush1.msra.mxu0 %v1474
    %1524 = vmatprep.subr.mxu0 %v1478
    %1525 = vmatpush1.msra.mxu0 %v1477
    %1526 = vmatprep.subr.mxu0 %v1481
    %1527 = vmatpush1.msra.mxu0 %v1480
    %1528 = vmatprep.subr.mxu0 %v1484
    %1529 = vmatpush1.msra.mxu0 %v1483
    %1530 = vmatprep.subr.mxu0 %v1487
    %1531 = vmatpush1.msra.mxu0 %v1486
    %1532 = vmatprep.subr.mxu0 %v1490
    %1533 = vmatpush1.msra.mxu0 %v1489
    %1534 = vmatprep.subr.mxu0 %v1493
    %1535 = vmatpush1.msra.mxu0 %v1492
    %1536 = vmatprep.subr.mxu0 %v1496
    %1537 = vmatpush1.msra.mxu0 %v1495
    %1538 = vmatprep.subr.mxu0 %v1499
    %1539 = vmatpush1.msra.mxu0 %v1498
    %1540 = vmatprep.subr.mxu0 %v1502
    %1541 = vmatpush1.msra.mxu0 %v1501
    %1542 = vmatprep.subr.mxu0 %v1505
    %1543 = vmatpush1.msra.mxu0 %v1504
    %1544 = vmatprep.subr.mxu0 %v1508
    %1545 = vmatpush1.msra.mxu0 %v1507
    %1546 = vmatprep.subr.mxu0 %v1511
    %1547 = vmatpush1.msra.mxu0 %v1510
    %1548 = vmatprep.subr.mxu0 %v1514
    %1549 = vmatpush1.msra.mxu0 %v1513
    %1550 = vmatprep.subr.mxu0 %v1517
    %1551 = vmatpush1.msra.mxu0 %v1516
    %1552 = vmatprep.subr.mxu0 %v1520
    %1553 = vmatpush1.msra.mxu0 %v1519
    %1554 = vmatprep.subr.mxu0 0.0
    %1555 = vmatpush1.msra.mxu0 0.0
    %1556 = vmatprep.subr.mxu0 0.0
    %1557 = vmatpush1.msra.mxu0 0.0
    %1558 = vmatprep.subr.mxu0 0.0
    %1559 = vmatpush1.msra.mxu0 0.0
    %1560 = vmatprep.subr.mxu0 0.0
    %1561 = vmatpush1.msra.mxu0 0.0
    %1562 = vmatprep.subr.mxu0 0.0
    %1563 = vmatpush1.msra.mxu0 0.0
    %1564 = vmatprep.subr.mxu0 0.0
    %1565 = vmatpush1.msra.mxu0 0.0
    %1566 = vmatprep.subr.mxu0 0.0
    %1567 = vmatpush1.msra.mxu0 0.0
    %1568 = vmatprep.subr.mxu0 0.0
    %1569 = vmatpush1.msra.mxu0 0.0
    %1570 = vmatprep.subr.mxu0 0.0
    %1571 = vmatpush1.msra.mxu0 0.0
    %1572 = vmatprep.subr.mxu0 0.0
    %1573 = vmatpush1.msra.mxu0 0.0
    %1574 = vmatprep.subr.mxu0 0.0
    %1575 = vmatpush1.msra.mxu0 0.0
    %1576 = vmatprep.subr.mxu0 0.0
    %1577 = vmatpush1.msra.mxu0 0.0
    %1578 = vmatprep.subr.mxu0 0.0
    %1579 = vmatpush1.msra.mxu0 0.0
    %1580 = vmatprep.subr.mxu0 0.0
    %1581 = vmatpush1.msra.mxu0 0.0
    %1582 = vmatprep.subr.mxu0 0.0
    %1583 = vmatpush1.msra.mxu0 0.0
    %1584 = vmatprep.subr.mxu0 0.0
    %1585 = vmatpush1.msra.mxu0 0.0
    %1586 = vmatprep.mubr.f32.mxu0 0.0
    %1587 = vmatmul.mubr.f32.gmra.mrb[0].mxu0 %v1467
    %v1588 = vpop.f32.mrb[0].mxu0
    %v1589 = vadd.f32 0.0, %v1588
    %v1590 = vpop.f32.mrb[0].mxu0
    %v1591 = vadd.f32 0.0, %v1590
    %1592 = vdwg.mxu0
    %1593 = vmatprep.subr.mxu0 0.0
    %1594 = vmatpush1.msra.mxu0 %v1476
    %1595 = vmatprep.subr.mxu0 0.0
    %1596 = vmatpush1.msra.mxu0 %v1479
    %1597 = vmatprep.subr.mxu0 0.0
    %1598 = vmatpush1.msra.mxu0 %v1482
    %1599 = vmatprep.subr.mxu0 0.0
    %1600 = vmatpush1.msra.mxu0 %v1485
    %1601 = vmatprep.subr.mxu0 0.0
    %1602 = vmatpush1.msra.mxu0 %v1488
    %1603 = vmatprep.subr.mxu0 0.0
    %1604 = vmatpush1.msra.mxu0 %v1491
    %1605 = vmatprep.subr.mxu0 0.0
    %1606 = vmatpush1.msra.mxu0 %v1494
    %1607 = vmatprep.subr.mxu0 0.0
    %1608 = vmatpush1.msra.mxu0 %v1497
    %1609 = vmatprep.subr.mxu0 0.0
    %1610 = vmatpush1.msra.mxu0 %v1500
    %1611 = vmatprep.subr.mxu0 0.0
    %1612 = vmatpush1.msra.mxu0 %v1503
    %1613 = vmatprep.subr.mxu0 0.0
    %1614 = vmatpush1.msra.mxu0 %v1506
    %1615 = vmatprep.subr.mxu0 0.0
    %1616 = vmatpush1.msra.mxu0 %v1509
    %1617 = vmatprep.subr.mxu0 0.0
    %1618 = vmatpush1.msra.mxu0 %v1512
    %1619 = vmatprep.subr.mxu0 0.0
    %1620 = vmatpush1.msra.mxu0 %v1515
    %1621 = vmatprep.subr.mxu0 0.0
    %1622 = vmatpush1.msra.mxu0 %v1518
    %1623 = vmatprep.subr.mxu0 0.0
    %1624 = vmatpush1.msra.mxu0 %v1521
    %1625 = vmatprep.subr.mxu0 0.0
    %1626 = vmatpush1.msra.mxu0 0.0
    %1627 = vmatprep.subr.mxu0 0.0
    %1628 = vmatpush1.msra.mxu0 0.0
    %1629 = vmatprep.subr.mxu0 0.0
    %1630 = vmatpush1.msra.mxu0 0.0
    %1631 = vmatprep.subr.mxu0 0.0
    %1632 = vmatpush1.msra.mxu0 0.0
    %1633 = vmatprep.subr.mxu0 0.0
    %1634 = vmatpush1.msra.mxu0 0.0
    %1635 = vmatprep.subr.mxu0 0.0
    %1636 = vmatpush1.msra.mxu0 0.0
    %1637 = vmatprep.subr.mxu0 0.0
    %1638 = vmatpush1.msra.mxu0 0.0
    %1639 = vmatprep.subr.mxu0 0.0
    %1640 = vmatpush1.msra.mxu0 0.0
    %1641 = vmatprep.subr.mxu0 0.0
    %1642 = vmatpush1.msra.mxu0 0.0
    %1643 = vmatprep.subr.mxu0 0.0
    %1644 = vmatpush1.msra.mxu0 0.0
    %1645 = vmatprep.subr.mxu0 0.0
    %1646 = vmatpush1.msra.mxu0 0.0
    %1647 = vmatprep.subr.mxu0 0.0
    %1648 = vmatpush1.msra.mxu0 0.0
    %1649 = vmatprep.subr.mxu0 0.0
    %1650 = vmatpush1.msra.mxu0 0.0
    %1651 = vmatprep.subr.mxu0 0.0
    %1652 = vmatpush1.msra.mxu0 0.0
    %1653 = vmatprep.subr.mxu0 0.0
    %1654 = vmatpush1.msra.mxu0 0.0
    %1655 = vmatprep.subr.mxu0 0.0
    %1656 = vmatpush1.msra.mxu0 0.0
    %1657 = vmatprep.mubr.f32.mxu0 0.0
    %1658 = vmatmul.mubr.f32.gmra.mrb[0].mxu0 %v1467
    %v1659 = vpop.f32.mrb[0].mxu0
    %v1660 = vadd.f32 0.0, %v1659
    %v1661 = vpop.f32.mrb[0].mxu0
    %1662 = vdwg.mxu0
    %v1663 = vadd.f32 %v1471, %v1589
    %v1664 = vxor.u32 %v1663, 2147483648
    %v1665 = vmul.f32 %v1664, 1.442695
    %v1666 = vpow.pop %v1665
    %v1667 = vadd.f32 %v1666, 1.0
    %v1668 = vrcp.pop %v1667
    %v1669 = vmul.f32 1.0, %v1668
    %v1670 = vadd.f32 %v1472, %v1591
    %v1671 = vxor.u32 %v1670, 2147483648
    %v1672 = vmul.f32 %v1671, 1.442695
    %v1673 = vpow.pop %v1672
    %v1674 = vadd.f32 %v1673, 1.0
    %v1675 = vrcp.pop %v1674
    %v1676 = vmul.f32 1.0, %v1675
    %v1677 = vadd.f32 %v1660, %v596
    %v1678 = vmul.f32 %v1669, %v1677
    %v1679 = vadd.f32 %v1473, %v1678
    %v1680 = vtanh.pop %v1679
    %v1681 = vsub.f32 %v1467, %v1680
    %v1682 = vmul.f32 %v1676, %v1681
    %v1683 = vadd.f32 %v1680, %v1682
    %s1684 = scalar_lea.vmem [#allocation3], 40
    %1685 = vst [vmem:[%s1684] sm:$0xff] %v1683
    %s1686 = scalar_lea.vmem [#allocation2], 144
    %v1687 = vld [vmem:[%s1686] sm:$0xff]
    %v1688 = vld [vmem:[%s1686 + $0x8] sm:$0xff]
    %v1689 = vld [vmem:[%s1686 + $0x10] sm:$0xff]
    %v1690 = vld [vmem:[#allocation6] sm:$0xff]
    %v1691 = vld [vmem:[#allocation6 + $0x8] sm:$0xff]
    %v1692 = vld [vmem:[#allocation6 + $0x10] sm:$0xff]
    %v1693 = vld [vmem:[#allocation6 + $0x18] sm:$0xff]
    %v1694 = vld [vmem:[#allocation6 + $0x20] sm:$0xff]
    %v1695 = vld [vmem:[#allocation6 + $0x28] sm:$0xff]
    %v1696 = vld [vmem:[#allocation6 + $0x30] sm:$0xff]
    %v1697 = vld [vmem:[#allocation6 + $0x38] sm:$0xff]
    %v1698 = vld [vmem:[#allocation6 + $0x40] sm:$0xff]
    %v1699 = vld [vmem:[#allocation6 + $0x48] sm:$0xff]
    %v1700 = vld [vmem:[#allocation6 + $0x50] sm:$0xff]
    %v1701 = vld [vmem:[#allocation6 + $0x58] sm:$0xff]
    %v1702 = vld [vmem:[#allocation6 + $0x60] sm:$0xff]
    %v1703 = vld [vmem:[#allocation6 + $0x68] sm:$0xff]
    %v1704 = vld [vmem:[#allocation6 + $0x70] sm:$0xff]
    %v1705 = vld [vmem:[#allocation6 + $0x78] sm:$0xff]
    %v1706 = vld [vmem:[#allocation6 + $0x80] sm:$0xff]
    %v1707 = vld [vmem:[#allocation6 + $0x88] sm:$0xff]
    %v1708 = vld [vmem:[#allocation6 + $0x90] sm:$0xff]
    %v1709 = vld [vmem:[#allocation6 + $0x98] sm:$0xff]
    %v1710 = vld [vmem:[#allocation6 + $0xa0] sm:$0xff]
    %v1711 = vld [vmem:[#allocation6 + $0xa8] sm:$0xff]
    %v1712 = vld [vmem:[#allocation6 + $0xb0] sm:$0xff]
    %v1713 = vld [vmem:[#allocation6 + $0xb8] sm:$0xff]
    %v1714 = vld [vmem:[#allocation6 + $0xc0] sm:$0xff]
    %v1715 = vld [vmem:[#allocation6 + $0xc8] sm:$0xff]
    %v1716 = vld [vmem:[#allocation6 + $0xd0] sm:$0xff]
    %v1717 = vld [vmem:[#allocation6 + $0xd8] sm:$0xff]
    %v1718 = vld [vmem:[#allocation6 + $0xe0] sm:$0xff]
    %v1719 = vld [vmem:[#allocation6 + $0xe8] sm:$0xff]
    %v1720 = vld [vmem:[#allocation6 + $0xf0] sm:$0xff]
    %v1721 = vld [vmem:[#allocation6 + $0xf8] sm:$0xff]
    %v1722 = vld [vmem:[#allocation6 + $0x100] sm:$0xff]
    %v1723 = vld [vmem:[#allocation6 + $0x108] sm:$0xff]
    %v1724 = vld [vmem:[#allocation6 + $0x110] sm:$0xff]
    %v1725 = vld [vmem:[#allocation6 + $0x118] sm:$0xff]
    %v1726 = vld [vmem:[#allocation6 + $0x120] sm:$0xff]
    %v1727 = vld [vmem:[#allocation6 + $0x128] sm:$0xff]
    %v1728 = vld [vmem:[#allocation6 + $0x130] sm:$0xff]
    %v1729 = vld [vmem:[#allocation6 + $0x138] sm:$0xff]
    %v1730 = vld [vmem:[#allocation6 + $0x140] sm:$0xff]
    %v1731 = vld [vmem:[#allocation6 + $0x148] sm:$0xff]
    %v1732 = vld [vmem:[#allocation6 + $0x150] sm:$0xff]
    %v1733 = vld [vmem:[#allocation6 + $0x158] sm:$0xff]
    %v1734 = vld [vmem:[#allocation6 + $0x160] sm:$0xff]
    %v1735 = vld [vmem:[#allocation6 + $0x168] sm:$0xff]
    %v1736 = vld [vmem:[#allocation6 + $0x170] sm:$0xff]
    %v1737 = vld [vmem:[#allocation6 + $0x178] sm:$0xff]
    %1738 = vmatprep.subr.mxu0 %v1691
    %1739 = vmatpush1.msra.mxu0 %v1690
    %1740 = vmatprep.subr.mxu0 %v1694
    %1741 = vmatpush1.msra.mxu0 %v1693
    %1742 = vmatprep.subr.mxu0 %v1697
    %1743 = vmatpush1.msra.mxu0 %v1696
    %1744 = vmatprep.subr.mxu0 %v1700
    %1745 = vmatpush1.msra.mxu0 %v1699
    %1746 = vmatprep.subr.mxu0 %v1703
    %1747 = vmatpush1.msra.mxu0 %v1702
    %1748 = vmatprep.subr.mxu0 %v1706
    %1749 = vmatpush1.msra.mxu0 %v1705
    %1750 = vmatprep.subr.mxu0 %v1709
    %1751 = vmatpush1.msra.mxu0 %v1708
    %1752 = vmatprep.subr.mxu0 %v1712
    %1753 = vmatpush1.msra.mxu0 %v1711
    %1754 = vmatprep.subr.mxu0 %v1715
    %1755 = vmatpush1.msra.mxu0 %v1714
    %1756 = vmatprep.subr.mxu0 %v1718
    %1757 = vmatpush1.msra.mxu0 %v1717
    %1758 = vmatprep.subr.mxu0 %v1721
    %1759 = vmatpush1.msra.mxu0 %v1720
    %1760 = vmatprep.subr.mxu0 %v1724
    %1761 = vmatpush1.msra.mxu0 %v1723
    %1762 = vmatprep.subr.mxu0 %v1727
    %1763 = vmatpush1.msra.mxu0 %v1726
    %1764 = vmatprep.subr.mxu0 %v1730
    %1765 = vmatpush1.msra.mxu0 %v1729
    %1766 = vmatprep.subr.mxu0 %v1733
    %1767 = vmatpush1.msra.mxu0 %v1732
    %1768 = vmatprep.subr.mxu0 %v1736
    %1769 = vmatpush1.msra.mxu0 %v1735
    %1770 = vmatprep.subr.mxu0 0.0
    %1771 = vmatpush1.msra.mxu0 0.0
    %1772 = vmatprep.subr.mxu0 0.0
    %1773 = vmatpush1.msra.mxu0 0.0
    %1774 = vmatprep.subr.mxu0 0.0
    %1775 = vmatpush1.msra.mxu0 0.0
    %1776 = vmatprep.subr.mxu0 0.0
    %1777 = vmatpush1.msra.mxu0 0.0
    %1778 = vmatprep.subr.mxu0 0.0
    %1779 = vmatpush1.msra.mxu0 0.0
    %1780 = vmatprep.subr.mxu0 0.0
    %1781 = vmatpush1.msra.mxu0 0.0
    %1782 = vmatprep.subr.mxu0 0.0
    %1783 = vmatpush1.msra.mxu0 0.0
    %1784 = vmatprep.subr.mxu0 0.0
    %1785 = vmatpush1.msra.mxu0 0.0
    %1786 = vmatprep.subr.mxu0 0.0
    %1787 = vmatpush1.msra.mxu0 0.0
    %1788 = vmatprep.subr.mxu0 0.0
    %1789 = vmatpush1.msra.mxu0 0.0
    %1790 = vmatprep.subr.mxu0 0.0
    %1791 = vmatpush1.msra.mxu0 0.0
    %1792 = vmatprep.subr.mxu0 0.0
    %1793 = vmatpush1.msra.mxu0 0.0
    %1794 = vmatprep.subr.mxu0 0.0
    %1795 = vmatpush1.msra.mxu0 0.0
    %1796 = vmatprep.subr.mxu0 0.0
    %1797 = vmatpush1.msra.mxu0 0.0
    %1798 = vmatprep.subr.mxu0 0.0
    %1799 = vmatpush1.msra.mxu0 0.0
    %1800 = vmatprep.subr.mxu0 0.0
    %1801 = vmatpush1.msra.mxu0 0.0
    %1802 = vmatprep.mubr.f32.mxu0 0.0
    %1803 = vmatmul.mubr.f32.gmra.mrb[0].mxu0 %v1683
    %v1804 = vpop.f32.mrb[0].mxu0
    %v1805 = vadd.f32 0.0, %v1804
    %v1806 = vpop.f32.mrb[0].mxu0
    %v1807 = vadd.f32 0.0, %v1806
    %1808 = vdwg.mxu0
    %1809 = vmatprep.subr.mxu0 0.0
    %1810 = vmatpush1.msra.mxu0 %v1692
    %1811 = vmatprep.subr.mxu0 0.0
    %1812 = vmatpush1.msra.mxu0 %v1695
    %1813 = vmatprep.subr.mxu0 0.0
    %1814 = vmatpush1.msra.mxu0 %v1698
    %1815 = vmatprep.subr.mxu0 0.0
    %1816 = vmatpush1.msra.mxu0 %v1701
    %1817 = vmatprep.subr.mxu0 0.0
    %1818 = vmatpush1.msra.mxu0 %v1704
    %1819 = vmatprep.subr.mxu0 0.0
    %1820 = vmatpush1.msra.mxu0 %v1707
    %1821 = vmatprep.subr.mxu0 0.0
    %1822 = vmatpush1.msra.mxu0 %v1710
    %1823 = vmatprep.subr.mxu0 0.0
    %1824 = vmatpush1.msra.mxu0 %v1713
    %1825 = vmatprep.subr.mxu0 0.0
    %1826 = vmatpush1.msra.mxu0 %v1716
    %1827 = vmatprep.subr.mxu0 0.0
    %1828 = vmatpush1.msra.mxu0 %v1719
    %1829 = vmatprep.subr.mxu0 0.0
    %1830 = vmatpush1.msra.mxu0 %v1722
    %1831 = vmatprep.subr.mxu0 0.0
    %1832 = vmatpush1.msra.mxu0 %v1725
    %1833 = vmatprep.subr.mxu0 0.0
    %1834 = vmatpush1.msra.mxu0 %v1728
    %1835 = vmatprep.subr.mxu0 0.0
    %1836 = vmatpush1.msra.mxu0 %v1731
    %1837 = vmatprep.subr.mxu0 0.0
    %1838 = vmatpush1.msra.mxu0 %v1734
    %1839 = vmatprep.subr.mxu0 0.0
    %1840 = vmatpush1.msra.mxu0 %v1737
    %1841 = vmatprep.subr.mxu0 0.0
    %1842 = vmatpush1.msra.mxu0 0.0
    %1843 = vmatprep.subr.mxu0 0.0
    %1844 = vmatpush1.msra.mxu0 0.0
    %1845 = vmatprep.subr.mxu0 0.0
    %1846 = vmatpush1.msra.mxu0 0.0
    %1847 = vmatprep.subr.mxu0 0.0
    %1848 = vmatpush1.msra.mxu0 0.0
    %1849 = vmatprep.subr.mxu0 0.0
    %1850 = vmatpush1.msra.mxu0 0.0
    %1851 = vmatprep.subr.mxu0 0.0
    %1852 = vmatpush1.msra.mxu0 0.0
    %1853 = vmatprep.subr.mxu0 0.0
    %1854 = vmatpush1.msra.mxu0 0.0
    %1855 = vmatprep.subr.mxu0 0.0
    %1856 = vmatpush1.msra.mxu0 0.0
    %1857 = vmatprep.subr.mxu0 0.0
    %1858 = vmatpush1.msra.mxu0 0.0
    %1859 = vmatprep.subr.mxu0 0.0
    %1860 = vmatpush1.msra.mxu0 0.0
    %1861 = vmatprep.subr.mxu0 0.0
    %1862 = vmatpush1.msra.mxu0 0.0
    %1863 = vmatprep.subr.mxu0 0.0
    %1864 = vmatpush1.msra.mxu0 0.0
    %1865 = vmatprep.subr.mxu0 0.0
    %1866 = vmatpush1.msra.mxu0 0.0
    %1867 = vmatprep.subr.mxu0 0.0
    %1868 = vmatpush1.msra.mxu0 0.0
    %1869 = vmatprep.subr.mxu0 0.0
    %1870 = vmatpush1.msra.mxu0 0.0
    %1871 = vmatprep.subr.mxu0 0.0
    %1872 = vmatpush1.msra.mxu0 0.0
    %1873 = vmatprep.mubr.f32.mxu0 0.0
    %1874 = vmatmul.mubr.f32.gmra.mrb[0].mxu0 %v1683
    %v1875 = vpop.f32.mrb[0].mxu0
    %v1876 = vadd.f32 0.0, %v1875
    %v1877 = vpop.f32.mrb[0].mxu0
    %1878 = vdwg.mxu0
    %v1879 = vadd.f32 %v1687, %v1805
    %v1880 = vxor.u32 %v1879, 2147483648
    %v1881 = vmul.f32 %v1880, 1.442695
    %v1882 = vpow.pop %v1881
    %v1883 = vadd.f32 %v1882, 1.0
    %v1884 = vrcp.pop %v1883
    %v1885 = vmul.f32 1.0, %v1884
    %v1886 = vadd.f32 %v1688, %v1807
    %v1887 = vxor.u32 %v1886, 2147483648
    %v1888 = vmul.f32 %v1887, 1.442695
    %v1889 = vpow.pop %v1888
    %v1890 = vadd.f32 %v1889, 1.0
    %v1891 = vrcp.pop %v1890
    %v1892 = vmul.f32 1.0, %v1891
    %v1893 = vadd.f32 %v1876, %v596
    %v1894 = vmul.f32 %v1885, %v1893
    %v1895 = vadd.f32 %v1689, %v1894
    %v1896 = vtanh.pop %v1895
    %v1897 = vsub.f32 %v1683, %v1896
    %v1898 = vmul.f32 %v1892, %v1897
    %v1899 = vadd.f32 %v1896, %v1898
    %s1900 = scalar_lea.vmem [#allocation3], 48
    %1901 = vst [vmem:[%s1900] sm:$0xff] %v1899
    %s1902 = scalar_lea.vmem [#allocation2], 168
    %v1903 = vld [vmem:[%s1902] sm:$0xff]
    %v1904 = vld [vmem:[%s1902 + $0x8] sm:$0xff]
    %v1905 = vld [vmem:[%s1902 + $0x10] sm:$0xff]
    %v1906 = vld [vmem:[#allocation6] sm:$0xff]
    %v1907 = vld [vmem:[#allocation6 + $0x8] sm:$0xff]
    %v1908 = vld [vmem:[#allocation6 + $0x10] sm:$0xff]
    %v1909 = vld [vmem:[#allocation6 + $0x18] sm:$0xff]
    %v1910 = vld [vmem:[#allocation6 + $0x20] sm:$0xff]
    %v1911 = vld [vmem:[#allocation6 + $0x28] sm:$0xff]
    %v1912 = vld [vmem:[#allocation6 + $0x30] sm:$0xff]
    %v1913 = vld [vmem:[#allocation6 + $0x38] sm:$0xff]
    %v1914 = vld [vmem:[#allocation6 + $0x40] sm:$0xff]
    %v1915 = vld [vmem:[#allocation6 + $0x48] sm:$0xff]
    %v1916 = vld [vmem:[#allocation6 + $0x50] sm:$0xff]
    %v1917 = vld [vmem:[#allocation6 + $0x58] sm:$0xff]
    %v1918 = vld [vmem:[#allocation6 + $0x60] sm:$0xff]
    %v1919 = vld [vmem:[#allocation6 + $0x68] sm:$0xff]
    %v1920 = vld [vmem:[#allocation6 + $0x70] sm:$0xff]
    %v1921 = vld [vmem:[#allocation6 + $0x78] sm:$0xff]
    %v1922 = vld [vmem:[#allocation6 + $0x80] sm:$0xff]
    %v1923 = vld [vmem:[#allocation6 + $0x88] sm:$0xff]
    %v1924 = vld [vmem:[#allocation6 + $0x90] sm:$0xff]
    %v1925 = vld [vmem:[#allocation6 + $0x98] sm:$0xff]
    %v1926 = vld [vmem:[#allocation6 + $0xa0] sm:$0xff]
    %v1927 = vld [vmem:[#allocation6 + $0xa8] sm:$0xff]
    %v1928 = vld [vmem:[#allocation6 + $0xb0] sm:$0xff]
    %v1929 = vld [vmem:[#allocation6 + $0xb8] sm:$0xff]
    %v1930 = vld [vmem:[#allocation6 + $0xc0] sm:$0xff]
    %v1931 = vld [vmem:[#allocation6 + $0xc8] sm:$0xff]
    %v1932 = vld [vmem:[#allocation6 + $0xd0] sm:$0xff]
    %v1933 = vld [vmem:[#allocation6 + $0xd8] sm:$0xff]
    %v1934 = vld [vmem:[#allocation6 + $0xe0] sm:$0xff]
    %v1935 = vld [vmem:[#allocation6 + $0xe8] sm:$0xff]
    %v1936 = vld [vmem:[#allocation6 + $0xf0] sm:$0xff]
    %v1937 = vld [vmem:[#allocation6 + $0xf8] sm:$0xff]
    %v1938 = vld [vmem:[#allocation6 + $0x100] sm:$0xff]
    %v1939 = vld [vmem:[#allocation6 + $0x108] sm:$0xff]
    %v1940 = vld [vmem:[#allocation6 + $0x110] sm:$0xff]
    %v1941 = vld [vmem:[#allocation6 + $0x118] sm:$0xff]
    %v1942 = vld [vmem:[#allocation6 + $0x120] sm:$0xff]
    %v1943 = vld [vmem:[#allocation6 + $0x128] sm:$0xff]
    %v1944 = vld [vmem:[#allocation6 + $0x130] sm:$0xff]
    %v1945 = vld [vmem:[#allocation6 + $0x138] sm:$0xff]
    %v1946 = vld [vmem:[#allocation6 + $0x140] sm:$0xff]
    %v1947 = vld [vmem:[#allocation6 + $0x148] sm:$0xff]
    %v1948 = vld [vmem:[#allocation6 + $0x150] sm:$0xff]
    %v1949 = vld [vmem:[#allocation6 + $0x158] sm:$0xff]
    %v1950 = vld [vmem:[#allocation6 + $0x160] sm:$0xff]
    %v1951 = vld [vmem:[#allocation6 + $0x168] sm:$0xff]
    %v1952 = vld [vmem:[#allocation6 + $0x170] sm:$0xff]
    %v1953 = vld [vmem:[#allocation6 + $0x178] sm:$0xff]
    %1954 = vmatprep.subr.mxu0 %v1907
    %1955 = vmatpush1.msra.mxu0 %v1906
    %1956 = vmatprep.subr.mxu0 %v1910
    %1957 = vmatpush1.msra.mxu0 %v1909
    %1958 = vmatprep.subr.mxu0 %v1913
    %1959 = vmatpush1.msra.mxu0 %v1912
    %1960 = vmatprep.subr.mxu0 %v1916
    %1961 = vmatpush1.msra.mxu0 %v1915
    %1962 = vmatprep.subr.mxu0 %v1919
    %1963 = vmatpush1.msra.mxu0 %v1918
    %1964 = vmatprep.subr.mxu0 %v1922
    %1965 = vmatpush1.msra.mxu0 %v1921
    %1966 = vmatprep.subr.mxu0 %v1925
    %1967 = vmatpush1.msra.mxu0 %v1924
    %1968 = vmatprep.subr.mxu0 %v1928
    %1969 = vmatpush1.msra.mxu0 %v1927
    %1970 = vmatprep.subr.mxu0 %v1931
    %1971 = vmatpush1.msra.mxu0 %v1930
    %1972 = vmatprep.subr.mxu0 %v1934
    %1973 = vmatpush1.msra.mxu0 %v1933
    %1974 = vmatprep.subr.mxu0 %v1937
    %1975 = vmatpush1.msra.mxu0 %v1936
    %1976 = vmatprep.subr.mxu0 %v1940
    %1977 = vmatpush1.msra.mxu0 %v1939
    %1978 = vmatprep.subr.mxu0 %v1943
    %1979 = vmatpush1.msra.mxu0 %v1942
    %1980 = vmatprep.subr.mxu0 %v1946
    %1981 = vmatpush1.msra.mxu0 %v1945
    %1982 = vmatprep.subr.mxu0 %v1949
    %1983 = vmatpush1.msra.mxu0 %v1948
    %1984 = vmatprep.subr.mxu0 %v1952
    %1985 = vmatpush1.msra.mxu0 %v1951
    %1986 = vmatprep.subr.mxu0 0.0
    %1987 = vmatpush1.msra.mxu0 0.0
    %1988 = vmatprep.subr.mxu0 0.0
    %1989 = vmatpush1.msra.mxu0 0.0
    %1990 = vmatprep.subr.mxu0 0.0
    %1991 = vmatpush1.msra.mxu0 0.0
    %1992 = vmatprep.subr.mxu0 0.0
    %1993 = vmatpush1.msra.mxu0 0.0
    %1994 = vmatprep.subr.mxu0 0.0
    %1995 = vmatpush1.msra.mxu0 0.0
    %1996 = vmatprep.subr.mxu0 0.0
    %1997 = vmatpush1.msra.mxu0 0.0
    %1998 = vmatprep.subr.mxu0 0.0
    %1999 = vmatpush1.msra.mxu0 0.0
    %2000 = vmatprep.subr.mxu0 0.0
    %2001 = vmatpush1.msra.mxu0 0.0
    %2002 = vmatprep.subr.mxu0 0.0
    %2003 = vmatpush1.msra.mxu0 0.0
    %2004 = vmatprep.subr.mxu0 0.0
    %2005 = vmatpush1.msra.mxu0 0.0
    %2006 = vmatprep.subr.mxu0 0.0
    %2007 = vmatpush1.msra.mxu0 0.0
    %2008 = vmatprep.subr.mxu0 0.0
    %2009 = vmatpush1.msra.mxu0 0.0
    %2010 = vmatprep.subr.mxu0 0.0
    %2011 = vmatpush1.msra.mxu0 0.0
    %2012 = vmatprep.subr.mxu0 0.0
    %2013 = vmatpush1.msra.mxu0 0.0
    %2014 = vmatprep.subr.mxu0 0.0
    %2015 = vmatpush1.msra.mxu0 0.0
    %2016 = vmatprep.subr.mxu0 0.0
    %2017 = vmatpush1.msra.mxu0 0.0
    %2018 = vmatprep.mubr.f32.mxu0 0.0
    %2019 = vmatmul.mubr.f32.gmra.mrb[0].mxu0 %v1899
    %v2020 = vpop.f32.mrb[0].mxu0
    %v2021 = vadd.f32 0.0, %v2020
    %v2022 = vpop.f32.mrb[0].mxu0
    %v2023 = vadd.f32 0.0, %v2022
    %2024 = vdwg.mxu0
    %2025 = vmatprep.subr.mxu0 0.0
    %2026 = vmatpush1.msra.mxu0 %v1908
    %2027 = vmatprep.subr.mxu0 0.0
    %2028 = vmatpush1.msra.mxu0 %v1911
    %2029 = vmatprep.subr.mxu0 0.0
    %2030 = vmatpush1.msra.mxu0 %v1914
    %2031 = vmatprep.subr.mxu0 0.0
    %2032 = vmatpush1.msra.mxu0 %v1917
    %2033 = vmatprep.subr.mxu0 0.0
    %2034 = vmatpush1.msra.mxu0 %v1920
    %2035 = vmatprep.subr.mxu0 0.0
    %2036 = vmatpush1.msra.mxu0 %v1923
    %2037 = vmatprep.subr.mxu0 0.0
    %2038 = vmatpush1.msra.mxu0 %v1926
    %2039 = vmatprep.subr.mxu0 0.0
    %2040 = vmatpush1.msra.mxu0 %v1929
    %2041 = vmatprep.subr.mxu0 0.0
    %2042 = vmatpush1.msra.mxu0 %v1932
    %2043 = vmatprep.subr.mxu0 0.0
    %2044 = vmatpush1.msra.mxu0 %v1935
    %2045 = vmatprep.subr.mxu0 0.0
    %2046 = vmatpush1.msra.mxu0 %v1938
    %2047 = vmatprep.subr.mxu0 0.0
    %2048 = vmatpush1.msra.mxu0 %v1941
    %2049 = vmatprep.subr.mxu0 0.0
    %2050 = vmatpush1.msra.mxu0 %v1944
    %2051 = vmatprep.subr.mxu0 0.0
    %2052 = vmatpush1.msra.mxu0 %v1947
    %2053 = vmatprep.subr.mxu0 0.0
    %2054 = vmatpush1.msra.mxu0 %v1950
    %2055 = vmatprep.subr.mxu0 0.0
    %2056 = vmatpush1.msra.mxu0 %v1953
    %2057 = vmatprep.subr.mxu0 0.0
    %2058 = vmatpush1.msra.mxu0 0.0
    %2059 = vmatprep.subr.mxu0 0.0
    %2060 = vmatpush1.msra.mxu0 0.0
    %2061 = vmatprep.subr.mxu0 0.0
    %2062 = vmatpush1.msra.mxu0 0.0
    %2063 = vmatprep.subr.mxu0 0.0
    %2064 = vmatpush1.msra.mxu0 0.0
    %2065 = vmatprep.subr.mxu0 0.0
    %2066 = vmatpush1.msra.mxu0 0.0
    %2067 = vmatprep.subr.mxu0 0.0
    %2068 = vmatpush1.msra.mxu0 0.0
    %2069 = vmatprep.subr.mxu0 0.0
    %2070 = vmatpush1.msra.mxu0 0.0
    %2071 = vmatprep.subr.mxu0 0.0
    %2072 = vmatpush1.msra.mxu0 0.0
    %2073 = vmatprep.subr.mxu0 0.0
    %2074 = vmatpush1.msra.mxu0 0.0
    %2075 = vmatprep.subr.mxu0 0.0
    %2076 = vmatpush1.msra.mxu0 0.0
    %2077 = vmatprep.subr.mxu0 0.0
    %2078 = vmatpush1.msra.mxu0 0.0
    %2079 = vmatprep.subr.mxu0 0.0
    %2080 = vmatpush1.msra.mxu0 0.0
    %2081 = vmatprep.subr.mxu0 0.0
    %2082 = vmatpush1.msra.mxu0 0.0
    %2083 = vmatprep.subr.mxu0 0.0
    %2084 = vmatpush1.msra.mxu0 0.0
    %2085 = vmatprep.subr.mxu0 0.0
    %2086 = vmatpush1.msra.mxu0 0.0
    %2087 = vmatprep.subr.mxu0 0.0
    %2088 = vmatpush1.msra.mxu0 0.0
    %2089 = vmatprep.mubr.f32.mxu0 0.0
    %2090 = vmatmul.mubr.f32.gmra.mrb[0].mxu0 %v1899
    %v2091 = vpop.f32.mrb[0].mxu0
    %v2092 = vadd.f32 0.0, %v2091
    %v2093 = vpop.f32.mrb[0].mxu0
    %2094 = vdwg.mxu0
    %v2095 = vadd.f32 %v1903, %v2021
    %v2096 = vxor.u32 %v2095, 2147483648
    %v2097 = vmul.f32 %v2096, 1.442695
    %v2098 = vpow.pop %v2097
    %v2099 = vadd.f32 %v2098, 1.0
    %v2100 = vrcp.pop %v2099
    %v2101 = vmul.f32 1.0, %v2100
    %v2102 = vadd.f32 %v1904, %v2023
    %v2103 = vxor.u32 %v2102, 2147483648
    %v2104 = vmul.f32 %v2103, 1.442695
    %v2105 = vpow.pop %v2104
    %v2106 = vadd.f32 %v2105, 1.0
    %v2107 = vrcp.pop %v2106
    %v2108 = vmul.f32 1.0, %v2107
    %v2109 = vadd.f32 %v2092, %v596
    %v2110 = vmul.f32 %v2101, %v2109
    %v2111 = vadd.f32 %v1905, %v2110
    %v2112 = vtanh.pop %v2111
    %v2113 = vsub.f32 %v1899, %v2112
    %v2114 = vmul.f32 %v2108, %v2113
    %v2115 = vadd.f32 %v2112, %v2114
    %s2116 = scalar_lea.vmem [#allocation3], 56
    %2117 = vst [vmem:[%s2116] sm:$0xff] %v2115
    %v2118 = vld [vmem:[#allocation3] sm:$0xff]
    %v2119 = vld [vmem:[#allocation3 + $0x8] sm:$0xff]
    %v2120 = vld [vmem:[#allocation3 + $0x10] sm:$0xff]
    %v2121 = vld [vmem:[#allocation3 + $0x18] sm:$0xff]
    %v2122 = vld [vmem:[#allocation3 + $0x20] sm:$0xff]
    %v2123 = vld [vmem:[#allocation3 + $0x28] sm:$0xff]
    %v2124 = vld [vmem:[#allocation3 + $0x30] sm:$0xff]
    %v2125 = vld [vmem:[#allocation3 + $0x38] sm:$0xff]
    %v2126 = vld [vmem:[#allocation8] sm:$0xff]
    %v2127 = vld [vmem:[#allocation8 + $0x8] sm:$0xff]
    %v2128 = vld [vmem:[#allocation8 + $0x10] sm:$0xff]
    %v2129 = vld [vmem:[#allocation8 + $0x18] sm:$0xff]
    %v2130 = vld [vmem:[#allocation8 + $0x20] sm:$0xff]
    %v2131 = vld [vmem:[#allocation8 + $0x28] sm:$0xff]
    %v2132 = vld [vmem:[#allocation8 + $0x30] sm:$0xff]
    %v2133 = vld [vmem:[#allocation8 + $0x38] sm:$0xff]
    %v2134 = vld [vmem:[#allocation8 + $0x40] sm:$0xff]
    %v2135 = vld [vmem:[#allocation8 + $0x48] sm:$0xff]
    %v2136 = vld [vmem:[#allocation8 + $0x50] sm:$0xff]
    %v2137 = vld [vmem:[#allocation8 + $0x58] sm:$0xff]
    %v2138 = vld [vmem:[#allocation8 + $0x60] sm:$0xff]
    %v2139 = vld [vmem:[#allocation8 + $0x68] sm:$0xff]
    %v2140 = vld [vmem:[#allocation8 + $0x70] sm:$0xff]
    %v2141 = vld [vmem:[#allocation8 + $0x78] sm:$0xff]
    %v2142 = vld [vmem:[#allocation8 + $0x80] sm:$0xff]
    %v2143 = vld [vmem:[#allocation8 + $0x88] sm:$0xff]
    %v2144 = vld [vmem:[#allocation8 + $0x90] sm:$0xff]
    %v2145 = vld [vmem:[#allocation8 + $0x98] sm:$0xff]
    %v2146 = vld [vmem:[#allocation8 + $0xa0] sm:$0xff]
    %v2147 = vld [vmem:[#allocation8 + $0xa8] sm:$0xff]
    %v2148 = vld [vmem:[#allocation8 + $0xb0] sm:$0xff]
    %v2149 = vld [vmem:[#allocation8 + $0xb8] sm:$0xff]
    %v2150 = vld [vmem:[#allocation8 + $0xc0] sm:$0xff]
    %v2151 = vld [vmem:[#allocation8 + $0xc8] sm:$0xff]
    %v2152 = vld [vmem:[#allocation8 + $0xd0] sm:$0xff]
    %v2153 = vld [vmem:[#allocation8 + $0xd8] sm:$0xff]
    %v2154 = vld [vmem:[#allocation8 + $0xe0] sm:$0xff]
    %v2155 = vld [vmem:[#allocation8 + $0xe8] sm:$0xff]
    %v2156 = vld [vmem:[#allocation8 + $0xf0] sm:$0xff]
    %v2157 = vld [vmem:[#allocation8 + $0xf8] sm:$0xff]
    %v2158 = vld [vmem:[#allocation8 + $0x100] sm:$0xff]
    %v2159 = vld [vmem:[#allocation8 + $0x108] sm:$0xff]
    %v2160 = vld [vmem:[#allocation8 + $0x110] sm:$0xff]
    %v2161 = vld [vmem:[#allocation8 + $0x118] sm:$0xff]
    %v2162 = vld [vmem:[#allocation8 + $0x120] sm:$0xff]
    %v2163 = vld [vmem:[#allocation8 + $0x128] sm:$0xff]
    %v2164 = vld [vmem:[#allocation8 + $0x130] sm:$0xff]
    %v2165 = vld [vmem:[#allocation8 + $0x138] sm:$0xff]
    %v2166 = vld [vmem:[#allocation8 + $0x140] sm:$0xff]
    %v2167 = vld [vmem:[#allocation8 + $0x148] sm:$0xff]
    %v2168 = vld [vmem:[#allocation8 + $0x150] sm:$0xff]
    %v2169 = vld [vmem:[#allocation8 + $0x158] sm:$0xff]
    %v2170 = vld [vmem:[#allocation8 + $0x160] sm:$0xff]
    %v2171 = vld [vmem:[#allocation8 + $0x168] sm:$0xff]
    %v2172 = vld [vmem:[#allocation8 + $0x170] sm:$0xff]
    %v2173 = vld [vmem:[#allocation8 + $0x178] sm:$0xff]
    %v2174 = vld [vmem:[%s7] sm:$0x7]
    %v2176 = vlaneseq
    %v2177 = vshrl.u32 %v2176, 7
    %v2178 = vsub.s32 0, %v2177
    %v2179 = vrot.slane %v2174, %v2178
    %v2180 = vlaneseq
    %v2181 = vshrl.u32 %v2180, 7
    %v2182 = vsub.s32 1, %v2181
    %v2183 = vrot.slane %v2174, %v2182
    %v2184 = vlaneseq
    %v2185 = vshrl.u32 %v2184, 7
    %v2186 = vsub.s32 2, %v2185
    %v2187 = vrot.slane %v2174, %v2186
    %2191 = vmatprep.subr.mxu0 %v2127
    %2192 = vmatpush1.msra.mxu0 %v2126
    %2193 = vmatprep.subr.mxu0 %v2130
    %2194 = vmatpush1.msra.mxu0 %v2129
    %2195 = vmatprep.subr.mxu0 %v2133
    %2196 = vmatpush1.msra.mxu0 %v2132
    %2197 = vmatprep.subr.mxu0 %v2136
    %2198 = vmatpush1.msra.mxu0 %v2135
    %2199 = vmatprep.subr.mxu0 %v2139
    %2200 = vmatpush1.msra.mxu0 %v2138
    %2201 = vmatprep.subr.mxu0 %v2142
    %2202 = vmatpush1.msra.mxu0 %v2141
    %2203 = vmatprep.subr.mxu0 %v2145
    %2204 = vmatpush1.msra.mxu0 %v2144
    %2205 = vmatprep.subr.mxu0 %v2148
    %2206 = vmatpush1.msra.mxu0 %v2147
    %2207 = vmatprep.subr.mxu0 %v2151
    %2208 = vmatpush1.msra.mxu0 %v2150
    %2209 = vmatprep.subr.mxu0 %v2154
    %2210 = vmatpush1.msra.mxu0 %v2153
    %2211 = vmatprep.subr.mxu0 %v2157
    %2212 = vmatpush1.msra.mxu0 %v2156
    %2213 = vmatprep.subr.mxu0 %v2160
    %2214 = vmatpush1.msra.mxu0 %v2159
    %2215 = vmatprep.subr.mxu0 %v2163
    %2216 = vmatpush1.msra.mxu0 %v2162
    %2217 = vmatprep.subr.mxu0 %v2166
    %2218 = vmatpush1.msra.mxu0 %v2165
    %2219 = vmatprep.subr.mxu0 %v2169
    %2220 = vmatpush1.msra.mxu0 %v2168
    %2221 = vmatprep.subr.mxu0 %v2172
    %2222 = vmatpush1.msra.mxu0 %v2171
    %2223 = vmatprep.subr.mxu0 0.0
    %2224 = vmatpush1.msra.mxu0 0.0
    %2225 = vmatprep.subr.mxu0 0.0
    %2226 = vmatpush1.msra.mxu0 0.0
    %2227 = vmatprep.subr.mxu0 0.0
    %2228 = vmatpush1.msra.mxu0 0.0
    %2229 = vmatprep.subr.mxu0 0.0
    %2230 = vmatpush1.msra.mxu0 0.0
    %2231 = vmatprep.subr.mxu0 0.0
    %2232 = vmatpush1.msra.mxu0 0.0
    %2233 = vmatprep.subr.mxu0 0.0
    %2234 = vmatpush1.msra.mxu0 0.0
    %2235 = vmatprep.subr.mxu0 0.0
    %2236 = vmatpush1.msra.mxu0 0.0
    %2237 = vmatprep.subr.mxu0 0.0
    %2238 = vmatpush1.msra.mxu0 0.0
    %2239 = vmatprep.subr.mxu0 0.0
    %2240 = vmatpush1.msra.mxu0 0.0
    %2241 = vmatprep.subr.mxu0 0.0
    %2242 = vmatpush1.msra.mxu0 0.0
    %2243 = vmatprep.subr.mxu0 0.0
    %2244 = vmatpush1.msra.mxu0 0.0
    %2245 = vmatprep.subr.mxu0 0.0
    %2246 = vmatpush1.msra.mxu0 0.0
    %2247 = vmatprep.subr.mxu0 0.0
    %2248 = vmatpush1.msra.mxu0 0.0
    %2249 = vmatprep.subr.mxu0 0.0
    %2250 = vmatpush1.msra.mxu0 0.0
    %2251 = vmatprep.subr.mxu0 0.0
    %2252 = vmatpush1.msra.mxu0 0.0
    %2253 = vmatprep.subr.mxu0 0.0
    %2254 = vmatpush1.msra.mxu0 0.0
    %2255 = vmatprep.mubr.f32.mxu0 0.0
    %2256 = vmatmul.mubr.f32.gmra.mrb[0].mxu0 %v2118
    %v2257 = vpop.f32.mrb[0].mxu0
    %v2258 = vadd.f32 %v2179, %v2257
    %v2259 = vpop.f32.mrb[0].mxu0
    %v2260 = vadd.f32 %v2183, %v2259
    %2261 = vmatprep.mubr.f32.mxu0 0.0
    %2262 = vmatmul.mubr.f32.gmra.mrb[0].mxu0 %v2119
    %v2263 = vpop.f32.mrb[0].mxu0
    %v2264 = vadd.f32 %v2179, %v2263
    %v2265 = vpop.f32.mrb[0].mxu0
    %v2266 = vadd.f32 %v2183, %v2265
    %2267 = vmatprep.mubr.f32.mxu0 0.0
    %2268 = vmatmul.mubr.f32.gmra.mrb[0].mxu0 %v2120
    %v2269 = vpop.f32.mrb[0].mxu0
    %v2270 = vadd.f32 %v2179, %v2269
    %v2271 = vpop.f32.mrb[0].mxu0
    %v2272 = vadd.f32 %v2183, %v2271
    %2273 = vmatprep.mubr.f32.mxu0 0.0
    %2274 = vmatmul.mubr.f32.gmra.mrb[0].mxu0 %v2121
    %v2275 = vpop.f32.mrb[0].mxu0
    %v2276 = vadd.f32 %v2179, %v2275
    %v2277 = vpop.f32.mrb[0].mxu0
    %v2278 = vadd.f32 %v2183, %v2277
    %2279 = vmatprep.mubr.f32.mxu0 0.0
    %2280 = vmatmul.mubr.f32.gmra.mrb[0].mxu0 %v2122
    %v2281 = vpop.f32.mrb[0].mxu0
    %v2282 = vadd.f32 %v2179, %v2281
    %v2283 = vpop.f32.mrb[0].mxu0
    %v2284 = vadd.f32 %v2183, %v2283
    %2285 = vmatprep.mubr.f32.mxu0 0.0
    %2286 = vmatmul.mubr.f32.gmra.mrb[0].mxu0 %v2123
    %v2287 = vpop.f32.mrb[0].mxu0
    %v2288 = vadd.f32 %v2179, %v2287
    %v2289 = vpop.f32.mrb[0].mxu0
    %v2290 = vadd.f32 %v2183, %v2289
    %2291 = vmatprep.mubr.f32.mxu0 0.0
    %2292 = vmatmul.mubr.f32.gmra.mrb[0].mxu0 %v2124
    %v2293 = vpop.f32.mrb[0].mxu0
    %v2294 = vadd.f32 %v2179, %v2293
    %v2295 = vpop.f32.mrb[0].mxu0
    %v2296 = vadd.f32 %v2183, %v2295
    %2297 = vmatprep.mubr.f32.mxu0 0.0
    %2298 = vmatmul.mubr.f32.gmra.mrb[0].mxu0 %v2125
    %v2299 = vpop.f32.mrb[0].mxu0
    %v2300 = vadd.f32 %v2179, %v2299
    %v2301 = vpop.f32.mrb[0].mxu0
    %v2302 = vadd.f32 %v2183, %v2301
    %2303 = vdwg.mxu0
    %2304 = vmatprep.subr.mxu0 0.0
    %2305 = vmatpush1.msra.mxu0 %v2128
    %2306 = vmatprep.subr.mxu0 0.0
    %2307 = vmatpush1.msra.mxu0 %v2131
    %2308 = vmatprep.subr.mxu0 0.0
    %2309 = vmatpush1.msra.mxu0 %v2134
    %2310 = vmatprep.subr.mxu0 0.0
    %2311 = vmatpush1.msra.mxu0 %v2137
    %2312 = vmatprep.subr.mxu0 0.0
    %2313 = vmatpush1.msra.mxu0 %v2140
    %2314 = vmatprep.subr.mxu0 0.0
    %2315 = vmatpush1.msra.mxu0 %v2143
    %2316 = vmatprep.subr.mxu0 0.0
    %2317 = vmatpush1.msra.mxu0 %v2146
    %2318 = vmatprep.subr.mxu0 0.0
    %2319 = vmatpush1.msra.mxu0 %v2149
    %2320 = vmatprep.subr.mxu0 0.0
    %2321 = vmatpush1.msra.mxu0 %v2152
    %2322 = vmatprep.subr.mxu0 0.0
    %2323 = vmatpush1.msra.mxu0 %v2155
    %2324 = vmatprep.subr.mxu0 0.0
    %2325 = vmatpush1.msra.mxu0 %v2158
    %2326 = vmatprep.subr.mxu0 0.0
    %2327 = vmatpush1.msra.mxu0 %v2161
    %2328 = vmatprep.subr.mxu0 0.0
    %2329 = vmatpush1.msra.mxu0 %v2164
    %2330 = vmatprep.subr.mxu0 0.0
    %2331 = vmatpush1.msra.mxu0 %v2167
    %2332 = vmatprep.subr.mxu0 0.0
    %2333 = vmatpush1.msra.mxu0 %v2170
    %2334 = vmatprep.subr.mxu0 0.0
    %2335 = vmatpush1.msra.mxu0 %v2173
    %2336 = vmatprep.subr.mxu0 0.0
    %2337 = vmatpush1.msra.mxu0 0.0
    %2338 = vmatprep.subr.mxu0 0.0
    %2339 = vmatpush1.msra.mxu0 0.0
    %2340 = vmatprep.subr.mxu0 0.0
    %2341 = vmatpush1.msra.mxu0 0.0
    %2342 = vmatprep.subr.mxu0 0.0
    %2343 = vmatpush1.msra.mxu0 0.0
    %2344 = vmatprep.subr.mxu0 0.0
    %2345 = vmatpush1.msra.mxu0 0.0
    %2346 = vmatprep.subr.mxu0 0.0
    %2347 = vmatpush1.msra.mxu0 0.0
    %2348 = vmatprep.subr.mxu0 0.0
    %2349 = vmatpush1.msra.mxu0 0.0
    %2350 = vmatprep.subr.mxu0 0.0
    %2351 = vmatpush1.msra.mxu0 0.0
    %2352 = vmatprep.subr.mxu0 0.0
    %2353 = vmatpush1.msra.mxu0 0.0
    %2354 = vmatprep.subr.mxu0 0.0
    %2355 = vmatpush1.msra.mxu0 0.0
    %2356 = vmatprep.subr.mxu0 0.0
    %2357 = vmatpush1.msra.mxu0 0.0
    %2358 = vmatprep.subr.mxu0 0.0
    %2359 = vmatpush1.msra.mxu0 0.0
    %2360 = vmatprep.subr.mxu0 0.0
    %2361 = vmatpush1.msra.mxu0 0.0
    %2362 = vmatprep.subr.mxu0 0.0
    %2363 = vmatpush1.msra.mxu0 0.0
    %2364 = vmatprep.subr.mxu0 0.0
    %2365 = vmatpush1.msra.mxu0 0.0
    %2366 = vmatprep.subr.mxu0 0.0
    %2367 = vmatpush1.msra.mxu0 0.0
    %2368 = vmatprep.mubr.f32.mxu0 0.0
    %2369 = vmatmul.mubr.f32.gmra.mrb[0].mxu0 %v2118
    %v2370 = vpop.f32.mrb[0].mxu0
    %v2371 = vadd.f32 %v2187, %v2370
    %v2372 = vpop.f32.mrb[0].mxu0
    %2373 = vmatprep.mubr.f32.mxu0 0.0
    %2374 = vmatmul.mubr.f32.gmra.mrb[0].mxu0 %v2119
    %v2375 = vpop.f32.mrb[0].mxu0
    %v2376 = vadd.f32 %v2187, %v2375
    %v2377 = vpop.f32.mrb[0].mxu0
    %2378 = vmatprep.mubr.f32.mxu0 0.0
    %2379 = vmatmul.mubr.f32.gmra.mrb[0].mxu0 %v2120
    %v2380 = vpop.f32.mrb[0].mxu0
    %v2381 = vadd.f32 %v2187, %v2380
    %v2382 = vpop.f32.mrb[0].mxu0
    %2383 = vmatprep.mubr.f32.mxu0 0.0
    %2384 = vmatmul.mubr.f32.gmra.mrb[0].mxu0 %v2121
    %v2385 = vpop.f32.mrb[0].mxu0
    %v2386 = vadd.f32 %v2187, %v2385
    %v2387 = vpop.f32.mrb[0].mxu0
    %2388 = vmatprep.mubr.f32.mxu0 0.0
    %2389 = vmatmul.mubr.f32.gmra.mrb[0].mxu0 %v2122
    %v2390 = vpop.f32.mrb[0].mxu0
    %v2391 = vadd.f32 %v2187, %v2390
    %v2392 = vpop.f32.mrb[0].mxu0
    %2393 = vmatprep.mubr.f32.mxu0 0.0
    %2394 = vmatmul.mubr.f32.gmra.mrb[0].mxu0 %v2123
    %v2395 = vpop.f32.mrb[0].mxu0
    %v2396 = vadd.f32 %v2187, %v2395
    %v2397 = vpop.f32.mrb[0].mxu0
    %2398 = vmatprep.mubr.f32.mxu0 0.0
    %2399 = vmatmul.mubr.f32.gmra.mrb[0].mxu0 %v2124
    %v2400 = vpop.f32.mrb[0].mxu0
    %v2401 = vadd.f32 %v2187, %v2400
    %v2402 = vpop.f32.mrb[0].mxu0
    %2403 = vmatprep.mubr.f32.mxu0 0.0
    %2404 = vmatmul.mubr.f32.gmra.mrb[0].mxu0 %v2125
    %v2405 = vpop.f32.mrb[0].mxu0
    %v2406 = vadd.f32 %v2187, %v2405
    %v2407 = vpop.f32.mrb[0].mxu0
    %2408 = vdwg.mxu0
    %2409 = vst [vmem:[#allocation2] sm:$0xff] %v2258
    %2410 = vst [vmem:[#allocation2 + $0x8] sm:$0xff] %v2260
    %2411 = vst [vmem:[#allocation2 + $0x10] sm:$0xff] %v2371
    %2412 = vst [vmem:[#allocation2 + $0x18] sm:$0xff] %v2264
    %2413 = vst [vmem:[#allocation2 + $0x20] sm:$0xff] %v2266
    %2414 = vst [vmem:[#allocation2 + $0x28] sm:$0xff] %v2376
    %2415 = vst [vmem:[#allocation2 + $0x30] sm:$0xff] %v2270
    %2416 = vst [vmem:[#allocation2 + $0x38] sm:$0xff] %v2272
    %2417 = vst [vmem:[#allocation2 + $0x40] sm:$0xff] %v2381
    %2418 = vst [vmem:[#allocation2 + $0x48] sm:$0xff] %v2276
    %2419 = vst [vmem:[#allocation2 + $0x50] sm:$0xff] %v2278
    %2420 = vst [vmem:[#allocation2 + $0x58] sm:$0xff] %v2386
    %2421 = vst [vmem:[#allocation2 + $0x60] sm:$0xff] %v2282
    %2422 = vst [vmem:[#allocation2 + $0x68] sm:$0xff] %v2284
    %2423 = vst [vmem:[#allocation2 + $0x70] sm:$0xff] %v2391
    %2424 = vst [vmem:[#allocation2 + $0x78] sm:$0xff] %v2288
    %2425 = vst [vmem:[#allocation2 + $0x80] sm:$0xff] %v2290
    %2426 = vst [vmem:[#allocation2 + $0x88] sm:$0xff] %v2396
    %2427 = vst [vmem:[#allocation2 + $0x90] sm:$0xff] %v2294
    %2428 = vst [vmem:[#allocation2 + $0x98] sm:$0xff] %v2296
    %2429 = vst [vmem:[#allocation2 + $0xa0] sm:$0xff] %v2401
    %2430 = vst [vmem:[#allocation2 + $0xa8] sm:$0xff] %v2300
    %2431 = vst [vmem:[#allocation2 + $0xb0] sm:$0xff] %v2302
    %2432 = vst [vmem:[#allocation2 + $0xb8] sm:$0xff] %v2406
    %v2433 = vld [vmem:[%s8] sm:$0x1]
    %v2434 = vld [vmem:[#allocation2] sm:$0xff]
    %v2435 = vld [vmem:[#allocation2 + $0x8] sm:$0xff]
    %v2436 = vld [vmem:[#allocation2 + $0x10] sm:$0xff]
    %v2437 = vld [vmem:[#allocation10] sm:$0xff]
    %v2438 = vld [vmem:[#allocation10 + $0x8] sm:$0xff]
    %v2439 = vld [vmem:[#allocation10 + $0x10] sm:$0xff]
    %v2440 = vld [vmem:[#allocation10 + $0x18] sm:$0xff]
    %v2441 = vld [vmem:[#allocation10 + $0x20] sm:$0xff]
    %v2442 = vld [vmem:[#allocation10 + $0x28] sm:$0xff]
    %v2443 = vld [vmem:[#allocation10 + $0x30] sm:$0xff]
    %v2444 = vld [vmem:[#allocation10 + $0x38] sm:$0xff]
    %v2445 = vld [vmem:[#allocation10 + $0x40] sm:$0xff]
    %v2446 = vld [vmem:[#allocation10 + $0x48] sm:$0xff]
    %v2447 = vld [vmem:[#allocation10 + $0x50] sm:$0xff]
    %v2448 = vld [vmem:[#allocation10 + $0x58] sm:$0xff]
    %v2449 = vld [vmem:[#allocation10 + $0x60] sm:$0xff]
    %v2450 = vld [vmem:[#allocation10 + $0x68] sm:$0xff]
    %v2451 = vld [vmem:[#allocation10 + $0x70] sm:$0xff]
    %v2452 = vld [vmem:[#allocation10 + $0x78] sm:$0xff]
    %v2453 = vld [vmem:[#allocation10 + $0x80] sm:$0xff]
    %v2454 = vld [vmem:[#allocation10 + $0x88] sm:$0xff]
    %v2455 = vld [vmem:[#allocation10 + $0x90] sm:$0xff]
    %v2456 = vld [vmem:[#allocation10 + $0x98] sm:$0xff]
    %v2457 = vld [vmem:[#allocation10 + $0xa0] sm:$0xff]
    %v2458 = vld [vmem:[#allocation10 + $0xa8] sm:$0xff]
    %v2459 = vld [vmem:[#allocation10 + $0xb0] sm:$0xff]
    %v2460 = vld [vmem:[#allocation10 + $0xb8] sm:$0xff]
    %v2461 = vld [vmem:[#allocation10 + $0xc0] sm:$0xff]
    %v2462 = vld [vmem:[#allocation10 + $0xc8] sm:$0xff]
    %v2463 = vld [vmem:[#allocation10 + $0xd0] sm:$0xff]
    %v2464 = vld [vmem:[#allocation10 + $0xd8] sm:$0xff]
    %v2465 = vld [vmem:[#allocation10 + $0xe0] sm:$0xff]
    %v2466 = vld [vmem:[#allocation10 + $0xe8] sm:$0xff]
    %v2467 = vld [vmem:[#allocation10 + $0xf0] sm:$0xff]
    %v2468 = vld [vmem:[#allocation10 + $0xf8] sm:$0xff]
    %v2469 = vld [vmem:[#allocation10 + $0x100] sm:$0xff]
    %v2470 = vld [vmem:[#allocation10 + $0x108] sm:$0xff]
    %v2471 = vld [vmem:[#allocation10 + $0x110] sm:$0xff]
    %v2472 = vld [vmem:[#allocation10 + $0x118] sm:$0xff]
    %v2473 = vld [vmem:[#allocation10 + $0x120] sm:$0xff]
    %v2474 = vld [vmem:[#allocation10 + $0x128] sm:$0xff]
    %v2475 = vld [vmem:[#allocation10 + $0x130] sm:$0xff]
    %v2476 = vld [vmem:[#allocation10 + $0x138] sm:$0xff]
    %v2477 = vld [vmem:[#allocation10 + $0x140] sm:$0xff]
    %v2478 = vld [vmem:[#allocation10 + $0x148] sm:$0xff]
    %v2479 = vld [vmem:[#allocation10 + $0x150] sm:$0xff]
    %v2480 = vld [vmem:[#allocation10 + $0x158] sm:$0xff]
    %v2481 = vld [vmem:[#allocation10 + $0x160] sm:$0xff]
    %v2482 = vld [vmem:[#allocation10 + $0x168] sm:$0xff]
    %v2483 = vld [vmem:[#allocation10 + $0x170] sm:$0xff]
    %v2484 = vld [vmem:[#allocation10 + $0x178] sm:$0xff]
    %2485 = vmatprep.subr.mxu0 %v2438
    %2486 = vmatpush1.msra.mxu0 %v2437
    %2487 = vmatprep.subr.mxu0 %v2441
    %2488 = vmatpush1.msra.mxu0 %v2440
    %2489 = vmatprep.subr.mxu0 %v2444
    %2490 = vmatpush1.msra.mxu0 %v2443
    %2491 = vmatprep.subr.mxu0 %v2447
    %2492 = vmatpush1.msra.mxu0 %v2446
    %2493 = vmatprep.subr.mxu0 %v2450
    %2494 = vmatpush1.msra.mxu0 %v2449
    %2495 = vmatprep.subr.mxu0 %v2453
    %2496 = vmatpush1.msra.mxu0 %v2452
    %2497 = vmatprep.subr.mxu0 %v2456
    %2498 = vmatpush1.msra.mxu0 %v2455
    %2499 = vmatprep.subr.mxu0 %v2459
    %2500 = vmatpush1.msra.mxu0 %v2458
    %2501 = vmatprep.subr.mxu0 %v2462
    %2502 = vmatpush1.msra.mxu0 %v2461
    %2503 = vmatprep.subr.mxu0 %v2465
    %2504 = vmatpush1.msra.mxu0 %v2464
    %2505 = vmatprep.subr.mxu0 %v2468
    %2506 = vmatpush1.msra.mxu0 %v2467
    %2507 = vmatprep.subr.mxu0 %v2471
    %2508 = vmatpush1.msra.mxu0 %v2470
    %2509 = vmatprep.subr.mxu0 %v2474
    %2510 = vmatpush1.msra.mxu0 %v2473
    %2511 = vmatprep.subr.mxu0 %v2477
    %2512 = vmatpush1.msra.mxu0 %v2476
    %2513 = vmatprep.subr.mxu0 %v2480
    %2514 = vmatpush1.msra.mxu0 %v2479
    %2515 = vmatprep.subr.mxu0 %v2483
    %2516 = vmatpush1.msra.mxu0 %v2482
    %2517 = vmatprep.subr.mxu0 0.0
    %2518 = vmatpush1.msra.mxu0 0.0
    %2519 = vmatprep.subr.mxu0 0.0
    %2520 = vmatpush1.msra.mxu0 0.0
    %2521 = vmatprep.subr.mxu0 0.0
    %2522 = vmatpush1.msra.mxu0 0.0
    %2523 = vmatprep.subr.mxu0 0.0
    %2524 = vmatpush1.msra.mxu0 0.0
    %2525 = vmatprep.subr.mxu0 0.0
    %2526 = vmatpush1.msra.mxu0 0.0
    %2527 = vmatprep.subr.mxu0 0.0
    %2528 = vmatpush1.msra.mxu0 0.0
    %2529 = vmatprep.subr.mxu0 0.0
    %2530 = vmatpush1.msra.mxu0 0.0
    %2531 = vmatprep.subr.mxu0 0.0
    %2532 = vmatpush1.msra.mxu0 0.0
    %2533 = vmatprep.subr.mxu0 0.0
    %2534 = vmatpush1.msra.mxu0 0.0
    %2535 = vmatprep.subr.mxu0 0.0
    %2536 = vmatpush1.msra.mxu0 0.0
    %2537 = vmatprep.subr.mxu0 0.0
    %2538 = vmatpush1.msra.mxu0 0.0
    %2539 = vmatprep.subr.mxu0 0.0
    %2540 = vmatpush1.msra.mxu0 0.0
    %2541 = vmatprep.subr.mxu0 0.0
    %2542 = vmatpush1.msra.mxu0 0.0
    %2543 = vmatprep.subr.mxu0 0.0
    %2544 = vmatpush1.msra.mxu0 0.0
    %2545 = vmatprep.subr.mxu0 0.0
    %2546 = vmatpush1.msra.mxu0 0.0
    %2547 = vmatprep.subr.mxu0 0.0
    %2548 = vmatpush1.msra.mxu0 0.0
    %2549 = vmatprep.mubr.f32.mxu0 0.0
    %2550 = vmatmul.mubr.f32.gmra.mrb[0].mxu0 0.0
    %v2551 = vpop.f32.mrb[0].mxu0
    %v2552 = vadd.f32 0.0, %v2551
    %v2553 = vpop.f32.mrb[0].mxu0
    %v2554 = vadd.f32 0.0, %v2553
    %2555 = vdwg.mxu0
    %2556 = vmatprep.subr.mxu0 0.0
    %2557 = vmatpush1.msra.mxu0 %v2439
    %2558 = vmatprep.subr.mxu0 0.0
    %2559 = vmatpush1.msra.mxu0 %v2442
    %2560 = vmatprep.subr.mxu0 0.0
    %2561 = vmatpush1.msra.mxu0 %v2445
    %2562 = vmatprep.subr.mxu0 0.0
    %2563 = vmatpush1.msra.mxu0 %v2448
    %2564 = vmatprep.subr.mxu0 0.0
    %2565 = vmatpush1.msra.mxu0 %v2451
    %2566 = vmatprep.subr.mxu0 0.0
    %2567 = vmatpush1.msra.mxu0 %v2454
    %2568 = vmatprep.subr.mxu0 0.0
    %2569 = vmatpush1.msra.mxu0 %v2457
    %2570 = vmatprep.subr.mxu0 0.0
    %2571 = vmatpush1.msra.mxu0 %v2460
    %2572 = vmatprep.subr.mxu0 0.0
    %2573 = vmatpush1.msra.mxu0 %v2463
    %2574 = vmatprep.subr.mxu0 0.0
    %2575 = vmatpush1.msra.mxu0 %v2466
    %2576 = vmatprep.subr.mxu0 0.0
    %2577 = vmatpush1.msra.mxu0 %v2469
    %2578 = vmatprep.subr.mxu0 0.0
    %2579 = vmatpush1.msra.mxu0 %v2472
    %2580 = vmatprep.subr.mxu0 0.0
    %2581 = vmatpush1.msra.mxu0 %v2475
    %2582 = vmatprep.subr.mxu0 0.0
    %2583 = vmatpush1.msra.mxu0 %v2478
    %2584 = vmatprep.subr.mxu0 0.0
    %2585 = vmatpush1.msra.mxu0 %v2481
    %2586 = vmatprep.subr.mxu0 0.0
    %2587 = vmatpush1.msra.mxu0 %v2484
    %2588 = vmatprep.subr.mxu0 0.0
    %2589 = vmatpush1.msra.mxu0 0.0
    %2590 = vmatprep.subr.mxu0 0.0
    %2591 = vmatpush1.msra.mxu0 0.0
    %2592 = vmatprep.subr.mxu0 0.0
    %2593 = vmatpush1.msra.mxu0 0.0
    %2594 = vmatprep.subr.mxu0 0.0
    %2595 = vmatpush1.msra.mxu0 0.0
    %2596 = vmatprep.subr.mxu0 0.0
    %2597 = vmatpush1.msra.mxu0 0.0
    %2598 = vmatprep.subr.mxu0 0.0
    %2599 = vmatpush1.msra.mxu0 0.0
    %2600 = vmatprep.subr.mxu0 0.0
    %2601 = vmatpush1.msra.mxu0 0.0
    %2602 = vmatprep.subr.mxu0 0.0
    %2603 = vmatpush1.msra.mxu0 0.0
    %2604 = vmatprep.subr.mxu0 0.0
    %2605 = vmatpush1.msra.mxu0 0.0
    %2606 = vmatprep.subr.mxu0 0.0
    %2607 = vmatpush1.msra.mxu0 0.0
    %2608 = vmatprep.subr.mxu0 0.0
    %2609 = vmatpush1.msra.mxu0 0.0
    %2610 = vmatprep.subr.mxu0 0.0
    %2611 = vmatpush1.msra.mxu0 0.0
    %2612 = vmatprep.subr.mxu0 0.0
    %2613 = vmatpush1.msra.mxu0 0.0
    %2614 = vmatprep.subr.mxu0 0.0
    %2615 = vmatpush1.msra.mxu0 0.0
    %2616 = vmatprep.subr.mxu0 0.0
    %2617 = vmatpush1.msra.mxu0 0.0
    %2618 = vmatprep.subr.mxu0 0.0
    %2619 = vmatpush1.msra.mxu0 0.0
    %2620 = vmatprep.mubr.f32.mxu0 0.0
    %2621 = vmatmul.mubr.f32.gmra.mrb[0].mxu0 0.0
    %v2622 = vpop.f32.mrb[0].mxu0
    %v2623 = vadd.f32 0.0, %v2622
    %v2624 = vpop.f32.mrb[0].mxu0
    %2625 = vdwg.mxu0
    %v2626 = vadd.f32 %v2434, %v2552
    %v2627 = vxor.u32 %v2626, 2147483648
    %v2628 = vmul.f32 %v2627, 1.442695
    %v2629 = vpow.pop %v2628
    %v2630 = vadd.f32 %v2629, 1.0
    %v2631 = vrcp.pop %v2630
    %v2632 = vmul.f32 1.0, %v2631
    %v2633 = vadd.f32 %v2435, %v2554
    %v2634 = vxor.u32 %v2633, 2147483648
    %v2635 = vmul.f32 %v2634, 1.442695
    %v2636 = vpow.pop %v2635
    %v2637 = vadd.f32 %v2636, 1.0
    %v2638 = vrcp.pop %v2637
    %v2639 = vmul.f32 1.0, %v2638
    %v2641 = vlaneseq
    %v2642 = vshrl.u32 %v2641, 7
    %v2643 = vsub.s32 0, %v2642
    %v2644 = vrot.slane %v2433, %v2643
    %v2646 = vadd.f32 %v2623, %v2644
    %v2647 = vmul.f32 %v2632, %v2646
    %v2648 = vadd.f32 %v2436, %v2647
    %v2649 = vtanh.pop %v2648
    %v2650 = vsub.f32 0.0, %v2649
    %v2651 = vmul.f32 %v2639, %v2650
    %v2652 = vadd.f32 %v2649, %v2651
    %v2653 = vld [vmem:[%s606] sm:$0xff]
    %v2654 = vld [vmem:[%s606 + $0x8] sm:$0xff]
    %v2655 = vld [vmem:[%s606 + $0x10] sm:$0xff]
    %2656 = vmatprep.subr.mxu0 %v2438
    %2657 = vmatpush1.msra.mxu0 %v2437
    %2658 = vmatprep.subr.mxu0 %v2441
    %2659 = vmatpush1.msra.mxu0 %v2440
    %2660 = vmatprep.subr.mxu0 %v2444
    %2661 = vmatpush1.msra.mxu0 %v2443
    %2662 = vmatprep.subr.mxu0 %v2447
    %2663 = vmatpush1.msra.mxu0 %v2446
    %2664 = vmatprep.subr.mxu0 %v2450
    %2665 = vmatpush1.msra.mxu0 %v2449
    %2666 = vmatprep.subr.mxu0 %v2453
    %2667 = vmatpush1.msra.mxu0 %v2452
    %2668 = vmatprep.subr.mxu0 %v2456
    %2669 = vmatpush1.msra.mxu0 %v2455
    %2670 = vmatprep.subr.mxu0 %v2459
    %2671 = vmatpush1.msra.mxu0 %v2458
    %2672 = vmatprep.subr.mxu0 %v2462
    %2673 = vmatpush1.msra.mxu0 %v2461
    %2674 = vmatprep.subr.mxu0 %v2465
    %2675 = vmatpush1.msra.mxu0 %v2464
    %2676 = vmatprep.subr.mxu0 %v2468
    %2677 = vmatpush1.msra.mxu0 %v2467
    %2678 = vmatprep.subr.mxu0 %v2471
    %2679 = vmatpush1.msra.mxu0 %v2470
    %2680 = vmatprep.subr.mxu0 %v2474
    %2681 = vmatpush1.msra.mxu0 %v2473
    %2682 = vmatprep.subr.mxu0 %v2477
    %2683 = vmatpush1.msra.mxu0 %v2476
    %2684 = vmatprep.subr.mxu0 %v2480
    %2685 = vmatpush1.msra.mxu0 %v2479
    %2686 = vmatprep.subr.mxu0 %v2483
    %2687 = vmatpush1.msra.mxu0 %v2482
    %2688 = vmatprep.subr.mxu0 0.0
    %2689 = vmatpush1.msra.mxu0 0.0
    %2690 = vmatprep.subr.mxu0 0.0
    %2691 = vmatpush1.msra.mxu0 0.0
    %2692 = vmatprep.subr.mxu0 0.0
    %2693 = vmatpush1.msra.mxu0 0.0
    %2694 = vmatprep.subr.mxu0 0.0
    %2695 = vmatpush1.msra.mxu0 0.0
    %2696 = vmatprep.subr.mxu0 0.0
    %2697 = vmatpush1.msra.mxu0 0.0
    %2698 = vmatprep.subr.mxu0 0.0
    %2699 = vmatpush1.msra.mxu0 0.0
    %2700 = vmatprep.subr.mxu0 0.0
    %2701 = vmatpush1.msra.mxu0 0.0
    %2702 = vmatprep.subr.mxu0 0.0
    %2703 = vmatpush1.msra.mxu0 0.0
    %2704 = vmatprep.subr.mxu0 0.0
    %2705 = vmatpush1.msra.mxu0 0.0
    %2706 = vmatprep.subr.mxu0 0.0
    %2707 = vmatpush1.msra.mxu0 0.0
    %2708 = vmatprep.subr.mxu0 0.0
    %2709 = vmatpush1.msra.mxu0 0.0
    %2710 = vmatprep.subr.mxu0 0.0
    %2711 = vmatpush1.msra.mxu0 0.0
    %2712 = vmatprep.subr.mxu0 0.0
    %2713 = vmatpush1.msra.mxu0 0.0
    %2714 = vmatprep.subr.mxu0 0.0
    %2715 = vmatpush1.msra.mxu0 0.0
    %2716 = vmatprep.subr.mxu0 0.0
    %2717 = vmatpush1.msra.mxu0 0.0
    %2718 = vmatprep.subr.mxu0 0.0
    %2719 = vmatpush1.msra.mxu0 0.0
    %2720 = vmatprep.mubr.f32.mxu0 0.0
    %2721 = vmatmul.mubr.f32.gmra.mrb[0].mxu0 %v2652
    %v2722 = vpop.f32.mrb[0].mxu0
    %v2723 = vadd.f32 0.0, %v2722
    %v2724 = vpop.f32.mrb[0].mxu0
    %v2725 = vadd.f32 0.0, %v2724
    %2726 = vdwg.mxu0
    %2727 = vmatprep.subr.mxu0 0.0
    %2728 = vmatpush1.msra.mxu0 %v2439
    %2729 = vmatprep.subr.mxu0 0.0
    %2730 = vmatpush1.msra.mxu0 %v2442
    %2731 = vmatprep.subr.mxu0 0.0
    %2732 = vmatpush1.msra.mxu0 %v2445
    %2733 = vmatprep.subr.mxu0 0.0
    %2734 = vmatpush1.msra.mxu0 %v2448
    %2735 = vmatprep.subr.mxu0 0.0
    %2736 = vmatpush1.msra.mxu0 %v2451
    %2737 = vmatprep.subr.mxu0 0.0
    %2738 = vmatpush1.msra.mxu0 %v2454
    %2739 = vmatprep.subr.mxu0 0.0
    %2740 = vmatpush1.msra.mxu0 %v2457
    %2741 = vmatprep.subr.mxu0 0.0
    %2742 = vmatpush1.msra.mxu0 %v2460
    %2743 = vmatprep.subr.mxu0 0.0
    %2744 = vmatpush1.msra.mxu0 %v2463
    %2745 = vmatprep.subr.mxu0 0.0
    %2746 = vmatpush1.msra.mxu0 %v2466
    %2747 = vmatprep.subr.mxu0 0.0
    %2748 = vmatpush1.msra.mxu0 %v2469
    %2749 = vmatprep.subr.mxu0 0.0
    %2750 = vmatpush1.msra.mxu0 %v2472
    %2751 = vmatprep.subr.mxu0 0.0
    %2752 = vmatpush1.msra.mxu0 %v2475
    %2753 = vmatprep.subr.mxu0 0.0
    %2754 = vmatpush1.msra.mxu0 %v2478
    %2755 = vmatprep.subr.mxu0 0.0
    %2756 = vmatpush1.msra.mxu0 %v2481
    %2757 = vmatprep.subr.mxu0 0.0
    %2758 = vmatpush1.msra.mxu0 %v2484
    %2759 = vmatprep.subr.mxu0 0.0
    %2760 = vmatpush1.msra.mxu0 0.0
    %2761 = vmatprep.subr.mxu0 0.0
    %2762 = vmatpush1.msra.mxu0 0.0
    %2763 = vmatprep.subr.mxu0 0.0
    %2764 = vmatpush1.msra.mxu0 0.0
    %2765 = vmatprep.subr.mxu0 0.0
    %2766 = vmatpush1.msra.mxu0 0.0
    %2767 = vmatprep.subr.mxu0 0.0
    %2768 = vmatpush1.msra.mxu0 0.0
    %2769 = vmatprep.subr.mxu0 0.0
    %2770 = vmatpush1.msra.mxu0 0.0
    %2771 = vmatprep.subr.mxu0 0.0
    %2772 = vmatpush1.msra.mxu0 0.0
    %2773 = vmatprep.subr.mxu0 0.0
    %2774 = vmatpush1.msra.mxu0 0.0
    %2775 = vmatprep.subr.mxu0 0.0
    %2776 = vmatpush1.msra.mxu0 0.0
    %2777 = vmatprep.subr.mxu0 0.0
    %2778 = vmatpush1.msra.mxu0 0.0
    %2779 = vmatprep.subr.mxu0 0.0
    %2780 = vmatpush1.msra.mxu0 0.0
    %2781 = vmatprep.subr.mxu0 0.0
    %2782 = vmatpush1.msra.mxu0 0.0
    %2783 = vmatprep.subr.mxu0 0.0
    %2784 = vmatpush1.msra.mxu0 0.0
    %2785 = vmatprep.subr.mxu0 0.0
    %2786 = vmatpush1.msra.mxu0 0.0
    %2787 = vmatprep.subr.mxu0 0.0
    %2788 = vmatpush1.msra.mxu0 0.0
    %2789 = vmatprep.subr.mxu0 0.0
    %2790 = vmatpush1.msra.mxu0 0.0
    %2791 = vmatprep.mubr.f32.mxu0 0.0
    %2792 = vmatmul.mubr.f32.gmra.mrb[0].mxu0 %v2652
    %v2793 = vpop.f32.mrb[0].mxu0
    %v2794 = vadd.f32 0.0, %v2793
    %v2795 = vpop.f32.mrb[0].mxu0
    %2796 = vdwg.mxu0
    %v2797 = vadd.f32 %v2653, %v2723
    %v2798 = vxor.u32 %v2797, 2147483648
    %v2799 = vmul.f32 %v2798, 1.442695
    %v2800 = vpow.pop %v2799
    %v2801 = vadd.f32 %v2800, 1.0
    %v2802 = vrcp.pop %v2801
    %v2803 = vmul.f32 1.0, %v2802
    %v2804 = vadd.f32 %v2654, %v2725
    %v2805 = vxor.u32 %v2804, 2147483648
    %v2806 = vmul.f32 %v2805, 1.442695
    %v2807 = vpow.pop %v2806
    %v2808 = vadd.f32 %v2807, 1.0
    %v2809 = vrcp.pop %v2808
    %v2810 = vmul.f32 1.0, %v2809
    %v2811 = vadd.f32 %v2794, %v2644
    %v2812 = vmul.f32 %v2803, %v2811
    %v2813 = vadd.f32 %v2655, %v2812
    %v2814 = vtanh.pop %v2813
    %v2815 = vsub.f32 %v2652, %v2814
    %v2816 = vmul.f32 %v2810, %v2815
    %v2817 = vadd.f32 %v2814, %v2816
    %v2818 = vld [vmem:[%s822] sm:$0xff]
    %v2819 = vld [vmem:[%s822 + $0x8] sm:$0xff]
    %v2820 = vld [vmem:[%s822 + $0x10] sm:$0xff]
    %2821 = vmatprep.subr.mxu0 %v2438
    %2822 = vmatpush1.msra.mxu0 %v2437
    %2823 = vmatprep.subr.mxu0 %v2441
    %2824 = vmatpush1.msra.mxu0 %v2440
    %2825 = vmatprep.subr.mxu0 %v2444
    %2826 = vmatpush1.msra.mxu0 %v2443
    %2827 = vmatprep.subr.mxu0 %v2447
    %2828 = vmatpush1.msra.mxu0 %v2446
    %2829 = vmatprep.subr.mxu0 %v2450
    %2830 = vmatpush1.msra.mxu0 %v2449
    %2831 = vmatprep.subr.mxu0 %v2453
    %2832 = vmatpush1.msra.mxu0 %v2452
    %2833 = vmatprep.subr.mxu0 %v2456
    %2834 = vmatpush1.msra.mxu0 %v2455
    %2835 = vmatprep.subr.mxu0 %v2459
    %2836 = vmatpush1.msra.mxu0 %v2458
    %2837 = vmatprep.subr.mxu0 %v2462
    %2838 = vmatpush1.msra.mxu0 %v2461
    %2839 = vmatprep.subr.mxu0 %v2465
    %2840 = vmatpush1.msra.mxu0 %v2464
    %2841 = vmatprep.subr.mxu0 %v2468
    %2842 = vmatpush1.msra.mxu0 %v2467
    %2843 = vmatprep.subr.mxu0 %v2471
    %2844 = vmatpush1.msra.mxu0 %v2470
    %2845 = vmatprep.subr.mxu0 %v2474
    %2846 = vmatpush1.msra.mxu0 %v2473
    %2847 = vmatprep.subr.mxu0 %v2477
    %2848 = vmatpush1.msra.mxu0 %v2476
    %2849 = vmatprep.subr.mxu0 %v2480
    %2850 = vmatpush1.msra.mxu0 %v2479
    %2851 = vmatprep.subr.mxu0 %v2483
    %2852 = vmatpush1.msra.mxu0 %v2482
    %2853 = vmatprep.subr.mxu0 0.0
    %2854 = vmatpush1.msra.mxu0 0.0
    %2855 = vmatprep.subr.mxu0 0.0
    %2856 = vmatpush1.msra.mxu0 0.0
    %2857 = vmatprep.subr.mxu0 0.0
    %2858 = vmatpush1.msra.mxu0 0.0
    %2859 = vmatprep.subr.mxu0 0.0
    %2860 = vmatpush1.msra.mxu0 0.0
    %2861 = vmatprep.subr.mxu0 0.0
    %2862 = vmatpush1.msra.mxu0 0.0
    %2863 = vmatprep.subr.mxu0 0.0
    %2864 = vmatpush1.msra.mxu0 0.0
    %2865 = vmatprep.subr.mxu0 0.0
    %2866 = vmatpush1.msra.mxu0 0.0
    %2867 = vmatprep.subr.mxu0 0.0
    %2868 = vmatpush1.msra.mxu0 0.0
    %2869 = vmatprep.subr.mxu0 0.0
    %2870 = vmatpush1.msra.mxu0 0.0
    %2871 = vmatprep.subr.mxu0 0.0
    %2872 = vmatpush1.msra.mxu0 0.0
    %2873 = vmatprep.subr.mxu0 0.0
    %2874 = vmatpush1.msra.mxu0 0.0
    %2875 = vmatprep.subr.mxu0 0.0
    %2876 = vmatpush1.msra.mxu0 0.0
    %2877 = vmatprep.subr.mxu0 0.0
    %2878 = vmatpush1.msra.mxu0 0.0
    %2879 = vmatprep.subr.mxu0 0.0
    %2880 = vmatpush1.msra.mxu0 0.0
    %2881 = vmatprep.subr.mxu0 0.0
    %2882 = vmatpush1.msra.mxu0 0.0
    %2883 = vmatprep.subr.mxu0 0.0
    %2884 = vmatpush1.msra.mxu0 0.0
    %2885 = vmatprep.mubr.f32.mxu0 0.0
    %2886 = vmatmul.mubr.f32.gmra.mrb[0].mxu0 %v2817
    %v2887 = vpop.f32.mrb[0].mxu0
    %v2888 = vadd.f32 0.0, %v2887
    %v2889 = vpop.f32.mrb[0].mxu0
    %v2890 = vadd.f32 0.0, %v2889
    %2891 = vdwg.mxu0
    %2892 = vmatprep.subr.mxu0 0.0
    %2893 = vmatpush1.msra.mxu0 %v2439
    %2894 = vmatprep.subr.mxu0 0.0
    %2895 = vmatpush1.msra.mxu0 %v2442
    %2896 = vmatprep.subr.mxu0 0.0
    %2897 = vmatpush1.msra.mxu0 %v2445
    %2898 = vmatprep.subr.mxu0 0.0
    %2899 = vmatpush1.msra.mxu0 %v2448
    %2900 = vmatprep.subr.mxu0 0.0
    %2901 = vmatpush1.msra.mxu0 %v2451
    %2902 = vmatprep.subr.mxu0 0.0
    %2903 = vmatpush1.msra.mxu0 %v2454
    %2904 = vmatprep.subr.mxu0 0.0
    %2905 = vmatpush1.msra.mxu0 %v2457
    %2906 = vmatprep.subr.mxu0 0.0
    %2907 = vmatpush1.msra.mxu0 %v2460
    %2908 = vmatprep.subr.mxu0 0.0
    %2909 = vmatpush1.msra.mxu0 %v2463
    %2910 = vmatprep.subr.mxu0 0.0
    %2911 = vmatpush1.msra.mxu0 %v2466
    %2912 = vmatprep.subr.mxu0 0.0
    %2913 = vmatpush1.msra.mxu0 %v2469
    %2914 = vmatprep.subr.mxu0 0.0
    %2915 = vmatpush1.msra.mxu0 %v2472
    %2916 = vmatprep.subr.mxu0 0.0
    %2917 = vmatpush1.msra.mxu0 %v2475
    %2918 = vmatprep.subr.mxu0 0.0
    %2919 = vmatpush1.msra.mxu0 %v2478
    %2920 = vmatprep.subr.mxu0 0.0
    %2921 = vmatpush1.msra.mxu0 %v2481
    %2922 = vmatprep.subr.mxu0 0.0
    %2923 = vmatpush1.msra.mxu0 %v2484
    %2924 = vmatprep.subr.mxu0 0.0
    %2925 = vmatpush1.msra.mxu0 0.0
    %2926 = vmatprep.subr.mxu0 0.0
    %2927 = vmatpush1.msra.mxu0 0.0
    %2928 = vmatprep.subr.mxu0 0.0
    %2929 = vmatpush1.msra.mxu0 0.0
    %2930 = vmatprep.subr.mxu0 0.0
    %2931 = vmatpush1.msra.mxu0 0.0
    %2932 = vmatprep.subr.mxu0 0.0
    %2933 = vmatpush1.msra.mxu0 0.0
    %2934 = vmatprep.subr.mxu0 0.0
    %2935 = vmatpush1.msra.mxu0 0.0
    %2936 = vmatprep.subr.mxu0 0.0
    %2937 = vmatpush1.msra.mxu0 0.0
    %2938 = vmatprep.subr.mxu0 0.0
    %2939 = vmatpush1.msra.mxu0 0.0
    %2940 = vmatprep.subr.mxu0 0.0
    %2941 = vmatpush1.msra.mxu0 0.0
    %2942 = vmatprep.subr.mxu0 0.0
    %2943 = vmatpush1.msra.mxu0 0.0
    %2944 = vmatprep.subr.mxu0 0.0
    %2945 = vmatpush1.msra.mxu0 0.0
    %2946 = vmatprep.subr.mxu0 0.0
    %2947 = vmatpush1.msra.mxu0 0.0
    %2948 = vmatprep.subr.mxu0 0.0
    %2949 = vmatpush1.msra.mxu0 0.0
    %2950 = vmatprep.subr.mxu0 0.0
    %2951 = vmatpush1.msra.mxu0 0.0
    %2952 = vmatprep.subr.mxu0 0.0
    %2953 = vmatpush1.msra.mxu0 0.0
    %2954 = vmatprep.subr.mxu0 0.0
    %2955 = vmatpush1.msra.mxu0 0.0
    %2956 = vmatprep.mubr.f32.mxu0 0.0
    %2957 = vmatmul.mubr.f32.gmra.mrb[0].mxu0 %v2817
    %v2958 = vpop.f32.mrb[0].mxu0
    %v2959 = vadd.f32 0.0, %v2958
    %v2960 = vpop.f32.mrb[0].mxu0
    %2961 = vdwg.mxu0
    %v2962 = vadd.f32 %v2818, %v2888
    %v2963 = vxor.u32 %v2962, 2147483648
    %v2964 = vmul.f32 %v2963, 1.442695
    %v2965 = vpow.pop %v2964
    %v2966 = vadd.f32 %v2965, 1.0
    %v2967 = vrcp.pop %v2966
    %v2968 = vmul.f32 1.0, %v2967
    %v2969 = vadd.f32 %v2819, %v2890
    %v2970 = vxor.u32 %v2969, 2147483648
    %v2971 = vmul.f32 %v2970, 1.442695
    %v2972 = vpow.pop %v2971
    %v2973 = vadd.f32 %v2972, 1.0
    %v2974 = vrcp.pop %v2973
    %v2975 = vmul.f32 1.0, %v2974
    %v2976 = vadd.f32 %v2959, %v2644
    %v2977 = vmul.f32 %v2968, %v2976
    %v2978 = vadd.f32 %v2820, %v2977
    %v2979 = vtanh.pop %v2978
    %v2980 = vsub.f32 %v2817, %v2979
    %v2981 = vmul.f32 %v2975, %v2980
    %v2982 = vadd.f32 %v2979, %v2981
    %v2983 = vld [vmem:[%s1038] sm:$0xff]
    %v2984 = vld [vmem:[%s1038 + $0x8] sm:$0xff]
    %v2985 = vld [vmem:[%s1038 + $0x10] sm:$0xff]
    %2986 = vmatprep.subr.mxu0 %v2438
    %2987 = vmatpush1.msra.mxu0 %v2437
    %2988 = vmatprep.subr.mxu0 %v2441
    %2989 = vmatpush1.msra.mxu0 %v2440
    %2990 = vmatprep.subr.mxu0 %v2444
    %2991 = vmatpush1.msra.mxu0 %v2443
    %2992 = vmatprep.subr.mxu0 %v2447
    %2993 = vmatpush1.msra.mxu0 %v2446
    %2994 = vmatprep.subr.mxu0 %v2450
    %2995 = vmatpush1.msra.mxu0 %v2449
    %2996 = vmatprep.subr.mxu0 %v2453
    %2997 = vmatpush1.msra.mxu0 %v2452
    %2998 = vmatprep.subr.mxu0 %v2456
    %2999 = vmatpush1.msra.mxu0 %v2455
    %3000 = vmatprep.subr.mxu0 %v2459
    %3001 = vmatpush1.msra.mxu0 %v2458
    %3002 = vmatprep.subr.mxu0 %v2462
    %3003 = vmatpush1.msra.mxu0 %v2461
    %3004 = vmatprep.subr.mxu0 %v2465
    %3005 = vmatpush1.msra.mxu0 %v2464
    %3006 = vmatprep.subr.mxu0 %v2468
    %3007 = vmatpush1.msra.mxu0 %v2467
    %3008 = vmatprep.subr.mxu0 %v2471
    %3009 = vmatpush1.msra.mxu0 %v2470
    %3010 = vmatprep.subr.mxu0 %v2474
    %3011 = vmatpush1.msra.mxu0 %v2473
    %3012 = vmatprep.subr.mxu0 %v2477
    %3013 = vmatpush1.msra.mxu0 %v2476
    %3014 = vmatprep.subr.mxu0 %v2480
    %3015 = vmatpush1.msra.mxu0 %v2479
    %3016 = vmatprep.subr.mxu0 %v2483
    %3017 = vmatpush1.msra.mxu0 %v2482
    %3018 = vmatprep.subr.mxu0 0.0
    %3019 = vmatpush1.msra.mxu0 0.0
    %3020 = vmatprep.subr.mxu0 0.0
    %3021 = vmatpush1.msra.mxu0 0.0
    %3022 = vmatprep.subr.mxu0 0.0
    %3023 = vmatpush1.msra.mxu0 0.0
    %3024 = vmatprep.subr.mxu0 0.0
    %3025 = vmatpush1.msra.mxu0 0.0
    %3026 = vmatprep.subr.mxu0 0.0
    %3027 = vmatpush1.msra.mxu0 0.0
    %3028 = vmatprep.subr.mxu0 0.0
    %3029 = vmatpush1.msra.mxu0 0.0
    %3030 = vmatprep.subr.mxu0 0.0
    %3031 = vmatpush1.msra.mxu0 0.0
    %3032 = vmatprep.subr.mxu0 0.0
    %3033 = vmatpush1.msra.mxu0 0.0
    %3034 = vmatprep.subr.mxu0 0.0
    %3035 = vmatpush1.msra.mxu0 0.0
    %3036 = vmatprep.subr.mxu0 0.0
    %3037 = vmatpush1.msra.mxu0 0.0
    %3038 = vmatprep.subr.mxu0 0.0
    %3039 = vmatpush1.msra.mxu0 0.0
    %3040 = vmatprep.subr.mxu0 0.0
    %3041 = vmatpush1.msra.mxu0 0.0
    %3042 = vmatprep.subr.mxu0 0.0
    %3043 = vmatpush1.msra.mxu0 0.0
    %3044 = vmatprep.subr.mxu0 0.0
    %3045 = vmatpush1.msra.mxu0 0.0
    %3046 = vmatprep.subr.mxu0 0.0
    %3047 = vmatpush1.msra.mxu0 0.0
    %3048 = vmatprep.subr.mxu0 0.0
    %3049 = vmatpush1.msra.mxu0 0.0
    %3050 = vmatprep.mubr.f32.mxu0 0.0
    %3051 = vmatmul.mubr.f32.gmra.mrb[0].mxu0 %v2982
    %v3052 = vpop.f32.mrb[0].mxu0
    %v3053 = vadd.f32 0.0, %v3052
    %v3054 = vpop.f32.mrb[0].mxu0
    %v3055 = vadd.f32 0.0, %v3054
    %3056 = vdwg.mxu0
    %3057 = vmatprep.subr.mxu0 0.0
    %3058 = vmatpush1.msra.mxu0 %v2439
    %3059 = vmatprep.subr.mxu0 0.0
    %3060 = vmatpush1.msra.mxu0 %v2442
    %3061 = vmatprep.subr.mxu0 0.0
    %3062 = vmatpush1.msra.mxu0 %v2445
    %3063 = vmatprep.subr.mxu0 0.0
    %3064 = vmatpush1.msra.mxu0 %v2448
    %3065 = vmatprep.subr.mxu0 0.0
    %3066 = vmatpush1.msra.mxu0 %v2451
    %3067 = vmatprep.subr.mxu0 0.0
    %3068 = vmatpush1.msra.mxu0 %v2454
    %3069 = vmatprep.subr.mxu0 0.0
    %3070 = vmatpush1.msra.mxu0 %v2457
    %3071 = vmatprep.subr.mxu0 0.0
    %3072 = vmatpush1.msra.mxu0 %v2460
    %3073 = vmatprep.subr.mxu0 0.0
    %3074 = vmatpush1.msra.mxu0 %v2463
    %3075 = vmatprep.subr.mxu0 0.0
    %3076 = vmatpush1.msra.mxu0 %v2466
    %3077 = vmatprep.subr.mxu0 0.0
    %3078 = vmatpush1.msra.mxu0 %v2469
    %3079 = vmatprep.subr.mxu0 0.0
    %3080 = vmatpush1.msra.mxu0 %v2472
    %3081 = vmatprep.subr.mxu0 0.0
    %3082 = vmatpush1.msra.mxu0 %v2475
    %3083 = vmatprep.subr.mxu0 0.0
    %3084 = vmatpush1.msra.mxu0 %v2478
    %3085 = vmatprep.subr.mxu0 0.0
    %3086 = vmatpush1.msra.mxu0 %v2481
    %3087 = vmatprep.subr.mxu0 0.0
    %3088 = vmatpush1.msra.mxu0 %v2484
    %3089 = vmatprep.subr.mxu0 0.0
    %3090 = vmatpush1.msra.mxu0 0.0
    %3091 = vmatprep.subr.mxu0 0.0
    %3092 = vmatpush1.msra.mxu0 0.0
    %3093 = vmatprep.subr.mxu0 0.0
    %3094 = vmatpush1.msra.mxu0 0.0
    %3095 = vmatprep.subr.mxu0 0.0
    %3096 = vmatpush1.msra.mxu0 0.0
    %3097 = vmatprep.subr.mxu0 0.0
    %3098 = vmatpush1.msra.mxu0 0.0
    %3099 = vmatprep.subr.mxu0 0.0
    %3100 = vmatpush1.msra.mxu0 0.0
    %3101 = vmatprep.subr.mxu0 0.0
    %3102 = vmatpush1.msra.mxu0 0.0
    %3103 = vmatprep.subr.mxu0 0.0
    %3104 = vmatpush1.msra.mxu0 0.0
    %3105 = vmatprep.subr.mxu0 0.0
    %3106 = vmatpush1.msra.mxu0 0.0
    %3107 = vmatprep.subr.mxu0 0.0
    %3108 = vmatpush1.msra.mxu0 0.0
    %3109 = vmatprep.subr.mxu0 0.0
    %3110 = vmatpush1.msra.mxu0 0.0
    %3111 = vmatprep.subr.mxu0 0.0
    %3112 = vmatpush1.msra.mxu0 0.0
    %3113 = vmatprep.subr.mxu0 0.0
    %3114 = vmatpush1.msra.mxu0 0.0
    %3115 = vmatprep.subr.mxu0 0.0
    %3116 = vmatpush1.msra.mxu0 0.0
    %3117 = vmatprep.subr.mxu0 0.0
    %3118 = vmatpush1.msra.mxu0 0.0
    %3119 = vmatprep.subr.mxu0 0.0
    %3120 = vmatpush1.msra.mxu0 0.0
    %3121 = vmatprep.mubr.f32.mxu0 0.0
    %3122 = vmatmul.mubr.f32.gmra.mrb[0].mxu0 %v2982
    %v3123 = vpop.f32.mrb[0].mxu0
    %v3124 = vadd.f32 0.0, %v3123
    %v3125 = vpop.f32.mrb[0].mxu0
    %3126 = vdwg.mxu0
    %v3127 = vadd.f32 %v2983, %v3053
    %v3128 = vxor.u32 %v3127, 2147483648
    %v3129 = vmul.f32 %v3128, 1.442695
    %v3130 = vpow.pop %v3129
    %v3131 = vadd.f32 %v3130, 1.0
    %v3132 = vrcp.pop %v3131
    %v3133 = vmul.f32 1.0, %v3132
    %v3134 = vadd.f32 %v2984, %v3055
    %v3135 = vxor.u32 %v3134, 2147483648
    %v3136 = vmul.f32 %v3135, 1.442695
    %v3137 = vpow.pop %v3136
    %v3138 = vadd.f32 %v3137, 1.0
    %v3139 = vrcp.pop %v3138
    %v3140 = vmul.f32 1.0, %v3139
    %v3141 = vadd.f32 %v3124, %v2644
    %v3142 = vmul.f32 %v3133, %v3141
    %v3143 = vadd.f32 %v2985, %v3142
    %v3144 = vtanh.pop %v3143
    %v3145 = vsub.f32 %v2982, %v3144
    %v3146 = vmul.f32 %v3140, %v3145
    %v3147 = vadd.f32 %v3144, %v3146
    %v3148 = vld [vmem:[%s1254] sm:$0xff]
    %v3149 = vld [vmem:[%s1254 + $0x8] sm:$0xff]
    %v3150 = vld [vmem:[%s1254 + $0x10] sm:$0xff]
    %3151 = vmatprep.subr.mxu0 %v2438
    %3152 = vmatpush1.msra.mxu0 %v2437
    %3153 = vmatprep.subr.mxu0 %v2441
    %3154 = vmatpush1.msra.mxu0 %v2440
    %3155 = vmatprep.subr.mxu0 %v2444
    %3156 = vmatpush1.msra.mxu0 %v2443
    %3157 = vmatprep.subr.mxu0 %v2447
    %3158 = vmatpush1.msra.mxu0 %v2446
    %3159 = vmatprep.subr.mxu0 %v2450
    %3160 = vmatpush1.msra.mxu0 %v2449
    %3161 = vmatprep.subr.mxu0 %v2453
    %3162 = vmatpush1.msra.mxu0 %v2452
    %3163 = vmatprep.subr.mxu0 %v2456
    %3164 = vmatpush1.msra.mxu0 %v2455
    %3165 = vmatprep.subr.mxu0 %v2459
    %3166 = vmatpush1.msra.mxu0 %v2458
    %3167 = vmatprep.subr.mxu0 %v2462
    %3168 = vmatpush1.msra.mxu0 %v2461
    %3169 = vmatprep.subr.mxu0 %v2465
    %3170 = vmatpush1.msra.mxu0 %v2464
    %3171 = vmatprep.subr.mxu0 %v2468
    %3172 = vmatpush1.msra.mxu0 %v2467
    %3173 = vmatprep.subr.mxu0 %v2471
    %3174 = vmatpush1.msra.mxu0 %v2470
    %3175 = vmatprep.subr.mxu0 %v2474
    %3176 = vmatpush1.msra.mxu0 %v2473
    %3177 = vmatprep.subr.mxu0 %v2477
    %3178 = vmatpush1.msra.mxu0 %v2476
    %3179 = vmatprep.subr.mxu0 %v2480
    %3180 = vmatpush1.msra.mxu0 %v2479
    %3181 = vmatprep.subr.mxu0 %v2483
    %3182 = vmatpush1.msra.mxu0 %v2482
    %3183 = vmatprep.subr.mxu0 0.0
    %3184 = vmatpush1.msra.mxu0 0.0
    %3185 = vmatprep.subr.mxu0 0.0
    %3186 = vmatpush1.msra.mxu0 0.0
    %3187 = vmatprep.subr.mxu0 0.0
    %3188 = vmatpush1.msra.mxu0 0.0
    %3189 = vmatprep.subr.mxu0 0.0
    %3190 = vmatpush1.msra.mxu0 0.0
    %3191 = vmatprep.subr.mxu0 0.0
    %3192 = vmatpush1.msra.mxu0 0.0
    %3193 = vmatprep.subr.mxu0 0.0
    %3194 = vmatpush1.msra.mxu0 0.0
    %3195 = vmatprep.subr.mxu0 0.0
    %3196 = vmatpush1.msra.mxu0 0.0
    %3197 = vmatprep.subr.mxu0 0.0
    %3198 = vmatpush1.msra.mxu0 0.0
    %3199 = vmatprep.subr.mxu0 0.0
    %3200 = vmatpush1.msra.mxu0 0.0
    %3201 = vmatprep.subr.mxu0 0.0
    %3202 = vmatpush1.msra.mxu0 0.0
    %3203 = vmatprep.subr.mxu0 0.0
    %3204 = vmatpush1.msra.mxu0 0.0
    %3205 = vmatprep.subr.mxu0 0.0
    %3206 = vmatpush1.msra.mxu0 0.0
    %3207 = vmatprep.subr.mxu0 0.0
    %3208 = vmatpush1.msra.mxu0 0.0
    %3209 = vmatprep.subr.mxu0 0.0
    %3210 = vmatpush1.msra.mxu0 0.0
    %3211 = vmatprep.subr.mxu0 0.0
    %3212 = vmatpush1.msra.mxu0 0.0
    %3213 = vmatprep.subr.mxu0 0.0
    %3214 = vmatpush1.msra.mxu0 0.0
    %3215 = vmatprep.mubr.f32.mxu0 0.0
    %3216 = vmatmul.mubr.f32.gmra.mrb[0].mxu0 %v3147
    %v3217 = vpop.f32.mrb[0].mxu0
    %v3218 = vadd.f32 0.0, %v3217
    %v3219 = vpop.f32.mrb[0].mxu0
    %v3220 = vadd.f32 0.0, %v3219
    %3221 = vdwg.mxu0
    %3222 = vmatprep.subr.mxu0 0.0
    %3223 = vmatpush1.msra.mxu0 %v2439
    %3224 = vmatprep.subr.mxu0 0.0
    %3225 = vmatpush1.msra.mxu0 %v2442
    %3226 = vmatprep.subr.mxu0 0.0
    %3227 = vmatpush1.msra.mxu0 %v2445
    %3228 = vmatprep.subr.mxu0 0.0
    %3229 = vmatpush1.msra.mxu0 %v2448
    %3230 = vmatprep.subr.mxu0 0.0
    %3231 = vmatpush1.msra.mxu0 %v2451
    %3232 = vmatprep.subr.mxu0 0.0
    %3233 = vmatpush1.msra.mxu0 %v2454
    %3234 = vmatprep.subr.mxu0 0.0
    %3235 = vmatpush1.msra.mxu0 %v2457
    %3236 = vmatprep.subr.mxu0 0.0
    %3237 = vmatpush1.msra.mxu0 %v2460
    %3238 = vmatprep.subr.mxu0 0.0
    %3239 = vmatpush1.msra.mxu0 %v2463
    %3240 = vmatprep.subr.mxu0 0.0
    %3241 = vmatpush1.msra.mxu0 %v2466
    %3242 = vmatprep.subr.mxu0 0.0
    %3243 = vmatpush1.msra.mxu0 %v2469
    %3244 = vmatprep.subr.mxu0 0.0
    %3245 = vmatpush1.msra.mxu0 %v2472
    %3246 = vmatprep.subr.mxu0 0.0
    %3247 = vmatpush1.msra.mxu0 %v2475
    %3248 = vmatprep.subr.mxu0 0.0
    %3249 = vmatpush1.msra.mxu0 %v2478
    %3250 = vmatprep.subr.mxu0 0.0
    %3251 = vmatpush1.msra.mxu0 %v2481
    %3252 = vmatprep.subr.mxu0 0.0
    %3253 = vmatpush1.msra.mxu0 %v2484
    %3254 = vmatprep.subr.mxu0 0.0
    %3255 = vmatpush1.msra.mxu0 0.0
    %3256 = vmatprep.subr.mxu0 0.0
    %3257 = vmatpush1.msra.mxu0 0.0
    %3258 = vmatprep.subr.mxu0 0.0
    %3259 = vmatpush1.msra.mxu0 0.0
    %3260 = vmatprep.subr.mxu0 0.0
    %3261 = vmatpush1.msra.mxu0 0.0
    %3262 = vmatprep.subr.mxu0 0.0
    %3263 = vmatpush1.msra.mxu0 0.0
    %3264 = vmatprep.subr.mxu0 0.0
    %3265 = vmatpush1.msra.mxu0 0.0
    %3266 = vmatprep.subr.mxu0 0.0
    %3267 = vmatpush1.msra.mxu0 0.0
    %3268 = vmatprep.subr.mxu0 0.0
    %3269 = vmatpush1.msra.mxu0 0.0
    %3270 = vmatprep.subr.mxu0 0.0
    %3271 = vmatpush1.msra.mxu0 0.0
    %3272 = vmatprep.subr.mxu0 0.0
    %3273 = vmatpush1.msra.mxu0 0.0
    %3274 = vmatprep.subr.mxu0 0.0
    %3275 = vmatpush1.msra.mxu0 0.0
    %3276 = vmatprep.subr.mxu0 0.0
    %3277 = vmatpush1.msra.mxu0 0.0
    %3278 = vmatprep.subr.mxu0 0.0
    %3279 = vmatpush1.msra.mxu0 0.0
    %3280 = vmatprep.subr.mxu0 0.0
    %3281 = vmatpush1.msra.mxu0 0.0
    %3282 = vmatprep.subr.mxu0 0.0
    %3283 = vmatpush1.msra.mxu0 0.0
    %3284 = vmatprep.subr.mxu0 0.0
    %3285 = vmatpush1.msra.mxu0 0.0
    %3286 = vmatprep.mubr.f32.mxu0 0.0
    %3287 = vmatmul.mubr.f32.gmra.mrb[0].mxu0 %v3147
    %v3288 = vpop.f32.mrb[0].mxu0
    %v3289 = vadd.f32 0.0, %v3288
    %v3290 = vpop.f32.mrb[0].mxu0
    %3291 = vdwg.mxu0
    %v3292 = vadd.f32 %v3148, %v3218
    %v3293 = vxor.u32 %v3292, 2147483648
    %v3294 = vmul.f32 %v3293, 1.442695
    %v3295 = vpow.pop %v3294
    %v3296 = vadd.f32 %v3295, 1.0
    %v3297 = vrcp.pop %v3296
    %v3298 = vmul.f32 1.0, %v3297
    %v3299 = vadd.f32 %v3149, %v3220
    %v3300 = vxor.u32 %v3299, 2147483648
    %v3301 = vmul.f32 %v3300, 1.442695
    %v3302 = vpow.pop %v3301
    %v3303 = vadd.f32 %v3302, 1.0
    %v3304 = vrcp.pop %v3303
    %v3305 = vmul.f32 1.0, %v3304
    %v3306 = vadd.f32 %v3289, %v2644
    %v3307 = vmul.f32 %v3298, %v3306
    %v3308 = vadd.f32 %v3150, %v3307
    %v3309 = vtanh.pop %v3308
    %v3310 = vsub.f32 %v3147, %v3309
    %v3311 = vmul.f32 %v3305, %v3310
    %v3312 = vadd.f32 %v3309, %v3311
    %v3313 = vld [vmem:[%s1470] sm:$0xff]
    %v3314 = vld [vmem:[%s1470 + $0x8] sm:$0xff]
    %v3315 = vld [vmem:[%s1470 + $0x10] sm:$0xff]
    %3316 = vmatprep.subr.mxu0 %v2438
    %3317 = vmatpush1.msra.mxu0 %v2437
    %3318 = vmatprep.subr.mxu0 %v2441
    %3319 = vmatpush1.msra.mxu0 %v2440
    %3320 = vmatprep.subr.mxu0 %v2444
    %3321 = vmatpush1.msra.mxu0 %v2443
    %3322 = vmatprep.subr.mxu0 %v2447
    %3323 = vmatpush1.msra.mxu0 %v2446
    %3324 = vmatprep.subr.mxu0 %v2450
    %3325 = vmatpush1.msra.mxu0 %v2449
    %3326 = vmatprep.subr.mxu0 %v2453
    %3327 = vmatpush1.msra.mxu0 %v2452
    %3328 = vmatprep.subr.mxu0 %v2456
    %3329 = vmatpush1.msra.mxu0 %v2455
    %3330 = vmatprep.subr.mxu0 %v2459
    %3331 = vmatpush1.msra.mxu0 %v2458
    %3332 = vmatprep.subr.mxu0 %v2462
    %3333 = vmatpush1.msra.mxu0 %v2461
    %3334 = vmatprep.subr.mxu0 %v2465
    %3335 = vmatpush1.msra.mxu0 %v2464
    %3336 = vmatprep.subr.mxu0 %v2468
    %3337 = vmatpush1.msra.mxu0 %v2467
    %3338 = vmatprep.subr.mxu0 %v2471
    %3339 = vmatpush1.msra.mxu0 %v2470
    %3340 = vmatprep.subr.mxu0 %v2474
    %3341 = vmatpush1.msra.mxu0 %v2473
    %3342 = vmatprep.subr.mxu0 %v2477
    %3343 = vmatpush1.msra.mxu0 %v2476
    %3344 = vmatprep.subr.mxu0 %v2480
    %3345 = vmatpush1.msra.mxu0 %v2479
    %3346 = vmatprep.subr.mxu0 %v2483
    %3347 = vmatpush1.msra.mxu0 %v2482
    %3348 = vmatprep.subr.mxu0 0.0
    %3349 = vmatpush1.msra.mxu0 0.0
    %3350 = vmatprep.subr.mxu0 0.0
    %3351 = vmatpush1.msra.mxu0 0.0
    %3352 = vmatprep.subr.mxu0 0.0
    %3353 = vmatpush1.msra.mxu0 0.0
    %3354 = vmatprep.subr.mxu0 0.0
    %3355 = vmatpush1.msra.mxu0 0.0
    %3356 = vmatprep.subr.mxu0 0.0
    %3357 = vmatpush1.msra.mxu0 0.0
    %3358 = vmatprep.subr.mxu0 0.0
    %3359 = vmatpush1.msra.mxu0 0.0
    %3360 = vmatprep.subr.mxu0 0.0
    %3361 = vmatpush1.msra.mxu0 0.0
    %3362 = vmatprep.subr.mxu0 0.0
    %3363 = vmatpush1.msra.mxu0 0.0
    %3364 = vmatprep.subr.mxu0 0.0
    %3365 = vmatpush1.msra.mxu0 0.0
    %3366 = vmatprep.subr.mxu0 0.0
    %3367 = vmatpush1.msra.mxu0 0.0
    %3368 = vmatprep.subr.mxu0 0.0
    %3369 = vmatpush1.msra.mxu0 0.0
    %3370 = vmatprep.subr.mxu0 0.0
    %3371 = vmatpush1.msra.mxu0 0.0
    %3372 = vmatprep.subr.mxu0 0.0
    %3373 = vmatpush1.msra.mxu0 0.0
    %3374 = vmatprep.subr.mxu0 0.0
    %3375 = vmatpush1.msra.mxu0 0.0
    %3376 = vmatprep.subr.mxu0 0.0
    %3377 = vmatpush1.msra.mxu0 0.0
    %3378 = vmatprep.subr.mxu0 0.0
    %3379 = vmatpush1.msra.mxu0 0.0
    %3380 = vmatprep.mubr.f32.mxu0 0.0
    %3381 = vmatmul.mubr.f32.gmra.mrb[0].mxu0 %v3312
    %v3382 = vpop.f32.mrb[0].mxu0
    %v3383 = vadd.f32 0.0, %v3382
    %v3384 = vpop.f32.mrb[0].mxu0
    %v3385 = vadd.f32 0.0, %v3384
    %3386 = vdwg.mxu0
    %3387 = vmatprep.subr.mxu0 0.0
    %3388 = vmatpush1.msra.mxu0 %v2439
    %3389 = vmatprep.subr.mxu0 0.0
    %3390 = vmatpush1.msra.mxu0 %v2442
    %3391 = vmatprep.subr.mxu0 0.0
    %3392 = vmatpush1.msra.mxu0 %v2445
    %3393 = vmatprep.subr.mxu0 0.0
    %3394 = vmatpush1.msra.mxu0 %v2448
    %3395 = vmatprep.subr.mxu0 0.0
    %3396 = vmatpush1.msra.mxu0 %v2451
    %3397 = vmatprep.subr.mxu0 0.0
    %3398 = vmatpush1.msra.mxu0 %v2454
    %3399 = vmatprep.subr.mxu0 0.0
    %3400 = vmatpush1.msra.mxu0 %v2457
    %3401 = vmatprep.subr.mxu0 0.0
    %3402 = vmatpush1.msra.mxu0 %v2460
    %3403 = vmatprep.subr.mxu0 0.0
    %3404 = vmatpush1.msra.mxu0 %v2463
    %3405 = vmatprep.subr.mxu0 0.0
    %3406 = vmatpush1.msra.mxu0 %v2466
    %3407 = vmatprep.subr.mxu0 0.0
    %3408 = vmatpush1.msra.mxu0 %v2469
    %3409 = vmatprep.subr.mxu0 0.0
    %3410 = vmatpush1.msra.mxu0 %v2472
    %3411 = vmatprep.subr.mxu0 0.0
    %3412 = vmatpush1.msra.mxu0 %v2475
    %3413 = vmatprep.subr.mxu0 0.0
    %3414 = vmatpush1.msra.mxu0 %v2478
    %3415 = vmatprep.subr.mxu0 0.0
    %3416 = vmatpush1.msra.mxu0 %v2481
    %3417 = vmatprep.subr.mxu0 0.0
    %3418 = vmatpush1.msra.mxu0 %v2484
    %3419 = vmatprep.subr.mxu0 0.0
    %3420 = vmatpush1.msra.mxu0 0.0
    %3421 = vmatprep.subr.mxu0 0.0
    %3422 = vmatpush1.msra.mxu0 0.0
    %3423 = vmatprep.subr.mxu0 0.0
    %3424 = vmatpush1.msra.mxu0 0.0
    %3425 = vmatprep.subr.mxu0 0.0
    %3426 = vmatpush1.msra.mxu0 0.0
    %3427 = vmatprep.subr.mxu0 0.0
    %3428 = vmatpush1.msra.mxu0 0.0
    %3429 = vmatprep.subr.mxu0 0.0
    %3430 = vmatpush1.msra.mxu0 0.0
    %3431 = vmatprep.subr.mxu0 0.0
    %3432 = vmatpush1.msra.mxu0 0.0
    %3433 = vmatprep.subr.mxu0 0.0
    %3434 = vmatpush1.msra.mxu0 0.0
    %3435 = vmatprep.subr.mxu0 0.0
    %3436 = vmatpush1.msra.mxu0 0.0
    %3437 = vmatprep.subr.mxu0 0.0
    %3438 = vmatpush1.msra.mxu0 0.0
    %3439 = vmatprep.subr.mxu0 0.0
    %3440 = vmatpush1.msra.mxu0 0.0
    %3441 = vmatprep.subr.mxu0 0.0
    %3442 = vmatpush1.msra.mxu0 0.0
    %3443 = vmatprep.subr.mxu0 0.0
    %3444 = vmatpush1.msra.mxu0 0.0
    %3445 = vmatprep.subr.mxu0 0.0
    %3446 = vmatpush1.msra.mxu0 0.0
    %3447 = vmatprep.subr.mxu0 0.0
    %3448 = vmatpush1.msra.mxu0 0.0
    %3449 = vmatprep.subr.mxu0 0.0
    %3450 = vmatpush1.msra.mxu0 0.0
    %3451 = vmatprep.mubr.f32.mxu0 0.0
    %3452 = vmatmul.mubr.f32.gmra.mrb[0].mxu0 %v3312
    %v3453 = vpop.f32.mrb[0].mxu0
    %v3454 = vadd.f32 0.0, %v3453
    %v3455 = vpop.f32.mrb[0].mxu0
    %3456 = vdwg.mxu0
    %v3457 = vadd.f32 %v3313, %v3383
    %v3458 = vxor.u32 %v3457, 2147483648
    %v3459 = vmul.f32 %v3458, 1.442695
    %v3460 = vpow.pop %v3459
    %v3461 = vadd.f32 %v3460, 1.0
    %v3462 = vrcp.pop %v3461
    %v3463 = vmul.f32 1.0, %v3462
    %v3464 = vadd.f32 %v3314, %v3385
    %v3465 = vxor.u32 %v3464, 2147483648
    %v3466 = vmul.f32 %v3465, 1.442695
    %v3467 = vpow.pop %v3466
    %v3468 = vadd.f32 %v3467, 1.0
    %v3469 = vrcp.pop %v3468
    %v3470 = vmul.f32 1.0, %v3469
    %v3471 = vadd.f32 %v3454, %v2644
    %v3472 = vmul.f32 %v3463, %v3471
    %v3473 = vadd.f32 %v3315, %v3472
    %v3474 = vtanh.pop %v3473
    %v3475 = vsub.f32 %v3312, %v3474
    %v3476 = vmul.f32 %v3470, %v3475
    %v3477 = vadd.f32 %v3474, %v3476
    %v3478 = vld [vmem:[%s1686] sm:$0xff]
    %v3479 = vld [vmem:[%s1686 + $0x8] sm:$0xff]
    %v3480 = vld [vmem:[%s1686 + $0x10] sm:$0xff]
    %3481 = vmatprep.subr.mxu0 %v2438
    %3482 = vmatpush1.msra.mxu0 %v2437
    %3483 = vmatprep.subr.mxu0 %v2441
    %3484 = vmatpush1.msra.mxu0 %v2440
    %3485 = vmatprep.subr.mxu0 %v2444
    %3486 = vmatpush1.msra.mxu0 %v2443
    %3487 = vmatprep.subr.mxu0 %v2447
    %3488 = vmatpush1.msra.mxu0 %v2446
    %3489 = vmatprep.subr.mxu0 %v2450
    %3490 = vmatpush1.msra.mxu0 %v2449
    %3491 = vmatprep.subr.mxu0 %v2453
    %3492 = vmatpush1.msra.mxu0 %v2452
    %3493 = vmatprep.subr.mxu0 %v2456
    %3494 = vmatpush1.msra.mxu0 %v2455
    %3495 = vmatprep.subr.mxu0 %v2459
    %3496 = vmatpush1.msra.mxu0 %v2458
    %3497 = vmatprep.subr.mxu0 %v2462
    %3498 = vmatpush1.msra.mxu0 %v2461
    %3499 = vmatprep.subr.mxu0 %v2465
    %3500 = vmatpush1.msra.mxu0 %v2464
    %3501 = vmatprep.subr.mxu0 %v2468
    %3502 = vmatpush1.msra.mxu0 %v2467
    %3503 = vmatprep.subr.mxu0 %v2471
    %3504 = vmatpush1.msra.mxu0 %v2470
    %3505 = vmatprep.subr.mxu0 %v2474
    %3506 = vmatpush1.msra.mxu0 %v2473
    %3507 = vmatprep.subr.mxu0 %v2477
    %3508 = vmatpush1.msra.mxu0 %v2476
    %3509 = vmatprep.subr.mxu0 %v2480
    %3510 = vmatpush1.msra.mxu0 %v2479
    %3511 = vmatprep.subr.mxu0 %v2483
    %3512 = vmatpush1.msra.mxu0 %v2482
    %3513 = vmatprep.subr.mxu0 0.0
    %3514 = vmatpush1.msra.mxu0 0.0
    %3515 = vmatprep.subr.mxu0 0.0
    %3516 = vmatpush1.msra.mxu0 0.0
    %3517 = vmatprep.subr.mxu0 0.0
    %3518 = vmatpush1.msra.mxu0 0.0
    %3519 = vmatprep.subr.mxu0 0.0
    %3520 = vmatpush1.msra.mxu0 0.0
    %3521 = vmatprep.subr.mxu0 0.0
    %3522 = vmatpush1.msra.mxu0 0.0
    %3523 = vmatprep.subr.mxu0 0.0
    %3524 = vmatpush1.msra.mxu0 0.0
    %3525 = vmatprep.subr.mxu0 0.0
    %3526 = vmatpush1.msra.mxu0 0.0
    %3527 = vmatprep.subr.mxu0 0.0
    %3528 = vmatpush1.msra.mxu0 0.0
    %3529 = vmatprep.subr.mxu0 0.0
    %3530 = vmatpush1.msra.mxu0 0.0
    %3531 = vmatprep.subr.mxu0 0.0
    %3532 = vmatpush1.msra.mxu0 0.0
    %3533 = vmatprep.subr.mxu0 0.0
    %3534 = vmatpush1.msra.mxu0 0.0
    %3535 = vmatprep.subr.mxu0 0.0
    %3536 = vmatpush1.msra.mxu0 0.0
    %3537 = vmatprep.subr.mxu0 0.0
    %3538 = vmatpush1.msra.mxu0 0.0
    %3539 = vmatprep.subr.mxu0 0.0
    %3540 = vmatpush1.msra.mxu0 0.0
    %3541 = vmatprep.subr.mxu0 0.0
    %3542 = vmatpush1.msra.mxu0 0.0
    %3543 = vmatprep.subr.mxu0 0.0
    %3544 = vmatpush1.msra.mxu0 0.0
    %3545 = vmatprep.mubr.f32.mxu0 0.0
    %3546 = vmatmul.mubr.f32.gmra.mrb[0].mxu0 %v3477
    %v3547 = vpop.f32.mrb[0].mxu0
    %v3548 = vadd.f32 0.0, %v3547
    %v3549 = vpop.f32.mrb[0].mxu0
    %v3550 = vadd.f32 0.0, %v3549
    %3551 = vdwg.mxu0
    %3552 = vmatprep.subr.mxu0 0.0
    %3553 = vmatpush1.msra.mxu0 %v2439
    %3554 = vmatprep.subr.mxu0 0.0
    %3555 = vmatpush1.msra.mxu0 %v2442
    %3556 = vmatprep.subr.mxu0 0.0
    %3557 = vmatpush1.msra.mxu0 %v2445
    %3558 = vmatprep.subr.mxu0 0.0
    %3559 = vmatpush1.msra.mxu0 %v2448
    %3560 = vmatprep.subr.mxu0 0.0
    %3561 = vmatpush1.msra.mxu0 %v2451
    %3562 = vmatprep.subr.mxu0 0.0
    %3563 = vmatpush1.msra.mxu0 %v2454
    %3564 = vmatprep.subr.mxu0 0.0
    %3565 = vmatpush1.msra.mxu0 %v2457
    %3566 = vmatprep.subr.mxu0 0.0
    %3567 = vmatpush1.msra.mxu0 %v2460
    %3568 = vmatprep.subr.mxu0 0.0
    %3569 = vmatpush1.msra.mxu0 %v2463
    %3570 = vmatprep.subr.mxu0 0.0
    %3571 = vmatpush1.msra.mxu0 %v2466
    %3572 = vmatprep.subr.mxu0 0.0
    %3573 = vmatpush1.msra.mxu0 %v2469
    %3574 = vmatprep.subr.mxu0 0.0
    %3575 = vmatpush1.msra.mxu0 %v2472
    %3576 = vmatprep.subr.mxu0 0.0
    %3577 = vmatpush1.msra.mxu0 %v2475
    %3578 = vmatprep.subr.mxu0 0.0
    %3579 = vmatpush1.msra.mxu0 %v2478
    %3580 = vmatprep.subr.mxu0 0.0
    %3581 = vmatpush1.msra.mxu0 %v2481
    %3582 = vmatprep.subr.mxu0 0.0
    %3583 = vmatpush1.msra.mxu0 %v2484
    %3584 = vmatprep.subr.mxu0 0.0
    %3585 = vmatpush1.msra.mxu0 0.0
    %3586 = vmatprep.subr.mxu0 0.0
    %3587 = vmatpush1.msra.mxu0 0.0
    %3588 = vmatprep.subr.mxu0 0.0
    %3589 = vmatpush1.msra.mxu0 0.0
    %3590 = vmatprep.subr.mxu0 0.0
    %3591 = vmatpush1.msra.mxu0 0.0
    %3592 = vmatprep.subr.mxu0 0.0
    %3593 = vmatpush1.msra.mxu0 0.0
    %3594 = vmatprep.subr.mxu0 0.0
    %3595 = vmatpush1.msra.mxu0 0.0
    %3596 = vmatprep.subr.mxu0 0.0
    %3597 = vmatpush1.msra.mxu0 0.0
    %3598 = vmatprep.subr.mxu0 0.0
    %3599 = vmatpush1.msra.mxu0 0.0
    %3600 = vmatprep.subr.mxu0 0.0
    %3601 = vmatpush1.msra.mxu0 0.0
    %3602 = vmatprep.subr.mxu0 0.0
    %3603 = vmatpush1.msra.mxu0 0.0
    %3604 = vmatprep.subr.mxu0 0.0
    %3605 = vmatpush1.msra.mxu0 0.0
    %3606 = vmatprep.subr.mxu0 0.0
    %3607 = vmatpush1.msra.mxu0 0.0
    %3608 = vmatprep.subr.mxu0 0.0
    %3609 = vmatpush1.msra.mxu0 0.0
    %3610 = vmatprep.subr.mxu0 0.0
    %3611 = vmatpush1.msra.mxu0 0.0
    %3612 = vmatprep.subr.mxu0 0.0
    %3613 = vmatpush1.msra.mxu0 0.0
    %3614 = vmatprep.subr.mxu0 0.0
    %3615 = vmatpush1.msra.mxu0 0.0
    %3616 = vmatprep.mubr.f32.mxu0 0.0
    %3617 = vmatmul.mubr.f32.gmra.mrb[0].mxu0 %v3477
    %v3618 = vpop.f32.mrb[0].mxu0
    %v3619 = vadd.f32 0.0, %v3618
    %v3620 = vpop.f32.mrb[0].mxu0
    %3621 = vdwg.mxu0
    %v3622 = vadd.f32 %v3478, %v3548
    %v3623 = vxor.u32 %v3622, 2147483648
    %v3624 = vmul.f32 %v3623, 1.442695
    %v3625 = vpow.pop %v3624
    %v3626 = vadd.f32 %v3625, 1.0
    %v3627 = vrcp.pop %v3626
    %v3628 = vmul.f32 1.0, %v3627
    %v3629 = vadd.f32 %v3479, %v3550
    %v3630 = vxor.u32 %v3629, 2147483648
    %v3631 = vmul.f32 %v3630, 1.442695
    %v3632 = vpow.pop %v3631
    %v3633 = vadd.f32 %v3632, 1.0
    %v3634 = vrcp.pop %v3633
    %v3635 = vmul.f32 1.0, %v3634
    %v3636 = vadd.f32 %v3619, %v2644
    %v3637 = vmul.f32 %v3628, %v3636
    %v3638 = vadd.f32 %v3480, %v3637
    %v3639 = vtanh.pop %v3638
    %v3640 = vsub.f32 %v3477, %v3639
    %v3641 = vmul.f32 %v3635, %v3640
    %v3642 = vadd.f32 %v3639, %v3641
    %v3643 = vld [vmem:[%s1902] sm:$0xff]
    %v3644 = vld [vmem:[%s1902 + $0x8] sm:$0xff]
    %v3645 = vld [vmem:[%s1902 + $0x10] sm:$0xff]
    %3646 = vmatprep.subr.mxu0 %v2438
    %3647 = vmatpush1.msra.mxu0 %v2437
    %3648 = vmatprep.subr.mxu0 %v2441
    %3649 = vmatpush1.msra.mxu0 %v2440
    %3650 = vmatprep.subr.mxu0 %v2444
    %3651 = vmatpush1.msra.mxu0 %v2443
    %3652 = vmatprep.subr.mxu0 %v2447
    %3653 = vmatpush1.msra.mxu0 %v2446
    %3654 = vmatprep.subr.mxu0 %v2450
    %3655 = vmatpush1.msra.mxu0 %v2449
    %3656 = vmatprep.subr.mxu0 %v2453
    %3657 = vmatpush1.msra.mxu0 %v2452
    %3658 = vmatprep.subr.mxu0 %v2456
    %3659 = vmatpush1.msra.mxu0 %v2455
    %3660 = vmatprep.subr.mxu0 %v2459
    %3661 = vmatpush1.msra.mxu0 %v2458
    %3662 = vmatprep.subr.mxu0 %v2462
    %3663 = vmatpush1.msra.mxu0 %v2461
    %3664 = vmatprep.subr.mxu0 %v2465
    %3665 = vmatpush1.msra.mxu0 %v2464
    %3666 = vmatprep.subr.mxu0 %v2468
    %3667 = vmatpush1.msra.mxu0 %v2467
    %3668 = vmatprep.subr.mxu0 %v2471
    %3669 = vmatpush1.msra.mxu0 %v2470
    %3670 = vmatprep.subr.mxu0 %v2474
    %3671 = vmatpush1.msra.mxu0 %v2473
    %3672 = vmatprep.subr.mxu0 %v2477
    %3673 = vmatpush1.msra.mxu0 %v2476
    %3674 = vmatprep.subr.mxu0 %v2480
    %3675 = vmatpush1.msra.mxu0 %v2479
    %3676 = vmatprep.subr.mxu0 %v2483
    %3677 = vmatpush1.msra.mxu0 %v2482
    %3678 = vmatprep.subr.mxu0 0.0
    %3679 = vmatpush1.msra.mxu0 0.0
    %3680 = vmatprep.subr.mxu0 0.0
    %3681 = vmatpush1.msra.mxu0 0.0
    %3682 = vmatprep.subr.mxu0 0.0
    %3683 = vmatpush1.msra.mxu0 0.0
    %3684 = vmatprep.subr.mxu0 0.0
    %3685 = vmatpush1.msra.mxu0 0.0
    %3686 = vmatprep.subr.mxu0 0.0
    %3687 = vmatpush1.msra.mxu0 0.0
    %3688 = vmatprep.subr.mxu0 0.0
    %3689 = vmatpush1.msra.mxu0 0.0
    %3690 = vmatprep.subr.mxu0 0.0
    %3691 = vmatpush1.msra.mxu0 0.0
    %3692 = vmatprep.subr.mxu0 0.0
    %3693 = vmatpush1.msra.mxu0 0.0
    %3694 = vmatprep.subr.mxu0 0.0
    %3695 = vmatpush1.msra.mxu0 0.0
    %3696 = vmatprep.subr.mxu0 0.0
    %3697 = vmatpush1.msra.mxu0 0.0
    %3698 = vmatprep.subr.mxu0 0.0
    %3699 = vmatpush1.msra.mxu0 0.0
    %3700 = vmatprep.subr.mxu0 0.0
    %3701 = vmatpush1.msra.mxu0 0.0
    %3702 = vmatprep.subr.mxu0 0.0
    %3703 = vmatpush1.msra.mxu0 0.0
    %3704 = vmatprep.subr.mxu0 0.0
    %3705 = vmatpush1.msra.mxu0 0.0
    %3706 = vmatprep.subr.mxu0 0.0
    %3707 = vmatpush1.msra.mxu0 0.0
    %3708 = vmatprep.subr.mxu0 0.0
    %3709 = vmatpush1.msra.mxu0 0.0
    %3710 = vmatprep.mubr.f32.mxu0 0.0
    %3711 = vmatmul.mubr.f32.gmra.mrb[0].mxu0 %v3642
    %v3712 = vpop.f32.mrb[0].mxu0
    %v3713 = vadd.f32 0.0, %v3712
    %v3714 = vpop.f32.mrb[0].mxu0
    %v3715 = vadd.f32 0.0, %v3714
    %3716 = vdwg.mxu0
    %3717 = vmatprep.subr.mxu0 0.0
    %3718 = vmatpush1.msra.mxu0 %v2439
    %3719 = vmatprep.subr.mxu0 0.0
    %3720 = vmatpush1.msra.mxu0 %v2442
    %3721 = vmatprep.subr.mxu0 0.0
    %3722 = vmatpush1.msra.mxu0 %v2445
    %3723 = vmatprep.subr.mxu0 0.0
    %3724 = vmatpush1.msra.mxu0 %v2448
    %3725 = vmatprep.subr.mxu0 0.0
    %3726 = vmatpush1.msra.mxu0 %v2451
    %3727 = vmatprep.subr.mxu0 0.0
    %3728 = vmatpush1.msra.mxu0 %v2454
    %3729 = vmatprep.subr.mxu0 0.0
    %3730 = vmatpush1.msra.mxu0 %v2457
    %3731 = vmatprep.subr.mxu0 0.0
    %3732 = vmatpush1.msra.mxu0 %v2460
    %3733 = vmatprep.subr.mxu0 0.0
    %3734 = vmatpush1.msra.mxu0 %v2463
    %3735 = vmatprep.subr.mxu0 0.0
    %3736 = vmatpush1.msra.mxu0 %v2466
    %3737 = vmatprep.subr.mxu0 0.0
    %3738 = vmatpush1.msra.mxu0 %v2469
    %3739 = vmatprep.subr.mxu0 0.0
    %3740 = vmatpush1.msra.mxu0 %v2472
    %3741 = vmatprep.subr.mxu0 0.0
    %3742 = vmatpush1.msra.mxu0 %v2475
    %3743 = vmatprep.subr.mxu0 0.0
    %3744 = vmatpush1.msra.mxu0 %v2478
    %3745 = vmatprep.subr.mxu0 0.0
    %3746 = vmatpush1.msra.mxu0 %v2481
    %3747 = vmatprep.subr.mxu0 0.0
    %3748 = vmatpush1.msra.mxu0 %v2484
    %3749 = vmatprep.subr.mxu0 0.0
    %3750 = vmatpush1.msra.mxu0 0.0
    %3751 = vmatprep.subr.mxu0 0.0
    %3752 = vmatpush1.msra.mxu0 0.0
    %3753 = vmatprep.subr.mxu0 0.0
    %3754 = vmatpush1.msra.mxu0 0.0
    %3755 = vmatprep.subr.mxu0 0.0
    %3756 = vmatpush1.msra.mxu0 0.0
    %3757 = vmatprep.subr.mxu0 0.0
    %3758 = vmatpush1.msra.mxu0 0.0
    %3759 = vmatprep.subr.mxu0 0.0
    %3760 = vmatpush1.msra.mxu0 0.0
    %3761 = vmatprep.subr.mxu0 0.0
    %3762 = vmatpush1.msra.mxu0 0.0
    %3763 = vmatprep.subr.mxu0 0.0
    %3764 = vmatpush1.msra.mxu0 0.0
    %3765 = vmatprep.subr.mxu0 0.0
    %3766 = vmatpush1.msra.mxu0 0.0
    %3767 = vmatprep.subr.mxu0 0.0
    %3768 = vmatpush1.msra.mxu0 0.0
    %3769 = vmatprep.subr.mxu0 0.0
    %3770 = vmatpush1.msra.mxu0 0.0
    %3771 = vmatprep.subr.mxu0 0.0
    %3772 = vmatpush1.msra.mxu0 0.0
    %3773 = vmatprep.subr.mxu0 0.0
    %3774 = vmatpush1.msra.mxu0 0.0
    %3775 = vmatprep.subr.mxu0 0.0
    %3776 = vmatpush1.msra.mxu0 0.0
    %3777 = vmatprep.subr.mxu0 0.0
    %3778 = vmatpush1.msra.mxu0 0.0
    %3779 = vmatprep.subr.mxu0 0.0
    %3780 = vmatpush1.msra.mxu0 0.0
    %3781 = vmatprep.mubr.f32.mxu0 0.0
    %3782 = vmatmul.mubr.f32.gmra.mrb[0].mxu0 %v3642
    %v3783 = vpop.f32.mrb[0].mxu0
    %v3784 = vadd.f32 0.0, %v3783
    %v3785 = vpop.f32.mrb[0].mxu0
    %3786 = vdwg.mxu0
    %v3787 = vadd.f32 %v3643, %v3713
    %v3788 = vxor.u32 %v3787, 2147483648
    %v3789 = vmul.f32 %v3788, 1.442695
    %v3790 = vpow.pop %v3789
    %v3791 = vadd.f32 %v3790, 1.0
    %v3792 = vrcp.pop %v3791
    %v3793 = vmul.f32 1.0, %v3792
    %v3794 = vadd.f32 %v3644, %v3715
    %v3795 = vxor.u32 %v3794, 2147483648
    %v3796 = vmul.f32 %v3795, 1.442695
    %v3797 = vpow.pop %v3796
    %v3798 = vadd.f32 %v3797, 1.0
    %v3799 = vrcp.pop %v3798
    %v3800 = vmul.f32 1.0, %v3799
    %v3801 = vadd.f32 %v3784, %v2644
    %v3802 = vmul.f32 %v3793, %v3801
    %v3803 = vadd.f32 %v3645, %v3802
    %v3804 = vtanh.pop %v3803
    %v3805 = vsub.f32 %v3642, %v3804
    %v3806 = vmul.f32 %v3800, %v3805
    %v3807 = vadd.f32 %v3804, %v3806
    %3808 = vst [vmem:[#allocation4] sm:$0xff] %v3807
    %v3809 = vld [vmem:[#allocation4] sm:$0xff]
    %v3810 = vld [vmem:[%s9] sm:$0xff]
    %v3811 = vld [vmem:[%s9 + $0x8] sm:$0xff]
    %v3812 = vld [vmem:[%s9 + $0x10] sm:$0xff]
    %v3813 = vld [vmem:[%s9 + $0x18] sm:$0xff]
    %v3814 = vld [vmem:[%s9 + $0x20] sm:$0xff]
    %v3815 = vld [vmem:[%s9 + $0x28] sm:$0xff]
    %v3816 = vld [vmem:[%s9 + $0x30] sm:$0xff]
    %v3817 = vld [vmem:[%s9 + $0x38] sm:$0xff]
    %v3818 = vld [vmem:[%s9 + $0x40] sm:$0xff]
    %v3819 = vld [vmem:[%s9 + $0x48] sm:$0xff]
    %v3820 = vld [vmem:[%s9 + $0x50] sm:$0xff]
    %v3821 = vld [vmem:[%s9 + $0x58] sm:$0xff]
    %v3822 = vld [vmem:[%s9 + $0x60] sm:$0xff]
    %v3823 = vld [vmem:[%s9 + $0x68] sm:$0xff]
    %v3824 = vld [vmem:[%s9 + $0x70] sm:$0xff]
    %v3825 = vld [vmem:[%s9 + $0x78] sm:$0xff]
    %v3826 = vld [vmem:[#allocation5] sm:$0x1]
    %v3828 = vlaneseq
    %v3829 = vshrl.u32 %v3828, 7
    %v3830 = vsub.s32 0, %v3829
    %v3831 = vrot.slane %v3826, %v3830
    %3833 = vmatprep.subr.mxu0 0.0
    %3834 = vmatpush1.msra.mxu0 %v3810
    %3835 = vmatprep.subr.mxu0 0.0
    %3836 = vmatpush1.msra.mxu0 %v3811
    %3837 = vmatprep.subr.mxu0 0.0
    %3838 = vmatpush1.msra.mxu0 %v3812
    %3839 = vmatprep.subr.mxu0 0.0
    %3840 = vmatpush1.msra.mxu0 %v3813
    %3841 = vmatprep.subr.mxu0 0.0
    %3842 = vmatpush1.msra.mxu0 %v3814
    %3843 = vmatprep.subr.mxu0 0.0
    %3844 = vmatpush1.msra.mxu0 %v3815
    %3845 = vmatprep.subr.mxu0 0.0
    %3846 = vmatpush1.msra.mxu0 %v3816
    %3847 = vmatprep.subr.mxu0 0.0
    %3848 = vmatpush1.msra.mxu0 %v3817
    %3849 = vmatprep.subr.mxu0 0.0
    %3850 = vmatpush1.msra.mxu0 %v3818
    %3851 = vmatprep.subr.mxu0 0.0
    %3852 = vmatpush1.msra.mxu0 %v3819
    %3853 = vmatprep.subr.mxu0 0.0
    %3854 = vmatpush1.msra.mxu0 %v3820
    %3855 = vmatprep.subr.mxu0 0.0
    %3856 = vmatpush1.msra.mxu0 %v3821
    %3857 = vmatprep.subr.mxu0 0.0
    %3858 = vmatpush1.msra.mxu0 %v3822
    %3859 = vmatprep.subr.mxu0 0.0
    %3860 = vmatpush1.msra.mxu0 %v3823
    %3861 = vmatprep.subr.mxu0 0.0
    %3862 = vmatpush1.msra.mxu0 %v3824
    %3863 = vmatprep.subr.mxu0 0.0
    %3864 = vmatpush1.msra.mxu0 %v3825
    %3865 = vmatprep.subr.mxu0 0.0
    %3866 = vmatpush1.msra.mxu0 0.0
    %3867 = vmatprep.subr.mxu0 0.0
    %3868 = vmatpush1.msra.mxu0 0.0
    %3869 = vmatprep.subr.mxu0 0.0
    %3870 = vmatpush1.msra.mxu0 0.0
    %3871 = vmatprep.subr.mxu0 0.0
    %3872 = vmatpush1.msra.mxu0 0.0
    %3873 = vmatprep.subr.mxu0 0.0
    %3874 = vmatpush1.msra.mxu0 0.0
    %3875 = vmatprep.subr.mxu0 0.0
    %3876 = vmatpush1.msra.mxu0 0.0
    %3877 = vmatprep.subr.mxu0 0.0
    %3878 = vmatpush1.msra.mxu0 0.0
    %3879 = vmatprep.subr.mxu0 0.0
    %3880 = vmatpush1.msra.mxu0 0.0
    %3881 = vmatprep.subr.mxu0 0.0
    %3882 = vmatpush1.msra.mxu0 0.0
    %3883 = vmatprep.subr.mxu0 0.0
    %3884 = vmatpush1.msra.mxu0 0.0
    %3885 = vmatprep.subr.mxu0 0.0
    %3886 = vmatpush1.msra.mxu0 0.0
    %3887 = vmatprep.subr.mxu0 0.0
    %3888 = vmatpush1.msra.mxu0 0.0
    %3889 = vmatprep.subr.mxu0 0.0
    %3890 = vmatpush1.msra.mxu0 0.0
    %3891 = vmatprep.subr.mxu0 0.0
    %3892 = vmatpush1.msra.mxu0 0.0
    %3893 = vmatprep.subr.mxu0 0.0
    %3894 = vmatpush1.msra.mxu0 0.0
    %3895 = vmatprep.subr.mxu0 0.0
    %3896 = vmatpush1.msra.mxu0 0.0
    %3897 = vmatprep.mubr.f32.mxu0 0.0
    %3898 = vmatmul.mubr.f32.gmra.mrb[0].mxu0 %v3809
    %v3899 = vpop.f32.mrb[0].mxu0
    %v3900 = vadd.f32 %v3831, %v3899
    %v3901 = vpop.f32.mrb[0].mxu0
    %3902 = vdwg.mxu0
    %vm3903 = vcmask 7168
    %3904 = vst.msk [vmem:[%s11] sm:$0xff] %vm3903, %v3900
    // Predicated region
    $region58: #{tpu_custom_call.1} parent=1 // pred_check
      _
    $region59: #{tpu_custom_call.1} parent=1 // pred_check_branch
      %3906 = sbr.rel (0) target = $region61
    $region60: #{tpu_custom_call.1} parent=1 // pred_region
      _
    $region61: #{tpu_custom_call.1} parent=1 // pred_fallthru
      _
    // Predicated region
    $region62: #{tpu_custom_call.1} parent=1 // pred_check
      _
    $region63: #{tpu_custom_call.1} parent=1 // pred_check_branch
      %3908 = sbr.rel (0) target = $region65
    $region64: #{tpu_custom_call.1} parent=1 // pred_region
      _
    $region65: #{tpu_custom_call.1} parent=1 // pred_fallthru
      _
    %3909 = vsyncpa [#allocation7], 1
    %3910 = vsyncpa [#allocation9], 1

</llo_original>
